<compile_context>
chip_gen: v6e
topology: v6e:2x2x1
jax: 0.10.0
libtpu: 0.0.40
codegen_flags: <defaults>
</compile_context>

<pallas_src>
import functools

import numpy as np
import jax
import jax.numpy as jnp
from jax.experimental import pallas as pl
from jax.experimental.pallas import tpu as pltpu


# --------------------------- generation-aware settings --------------------------- #
@functools.lru_cache(maxsize=1)
def _hw():
    kind = ""
    try:
        kind = jax.devices()[0].device_kind.lower()
    except Exception:
        pass
    is_v7 = "v7" in kind
    single_core = any(t in kind for t in ("v5e", "v5 lite", "v6"))
    if is_v7:
        # 2 TensorCores / 64 MiB VMEM: bounded tiles, prefer >=2 grid steps.
        return dict(prefer_multi_step=True, vmem_limit=48 * 1024 * 1024,
                    attn_target_rows=512, mlp_target_rows=512)
    if single_core:
        # v5e / v6e: 1 TensorCore / 128 MiB VMEM: big tiles, no forced split.
        return dict(prefer_multi_step=False, vmem_limit=96 * 1024 * 1024,
                    attn_target_rows=512, mlp_target_rows=1024)
    # unknown / older megacore parts: conservative, known-good defaults.
    return dict(prefer_multi_step=True, vmem_limit=48 * 1024 * 1024,
                attn_target_rows=512, mlp_target_rows=512)


# ----------------------------- glue (plain JAX) ----------------------------- #
def window_partition(x, ws):
    B, H, W, C = x.shape
    x = x.reshape(B, H // ws, ws, W // ws, ws, C)
    return x.transpose(0, 1, 3, 2, 4, 5).reshape(-1, ws, ws, C)


def window_reverse(windows, ws, H, W):
    B = windows.shape[0] // (H * W // ws // ws)
    x = windows.reshape(B, H // ws, W // ws, ws, ws, -1)
    return x.transpose(0, 1, 3, 2, 4, 5).reshape(B, H, W, -1)


def relative_position_index(ws):
    coords = np.stack(np.meshgrid(np.arange(ws), np.arange(ws), indexing="ij"))
    cf = coords.reshape(2, -1)
    rel = cf[:, :, None] - cf[:, None, :]
    rel = rel.transpose(1, 2, 0).copy()
    rel[:, :, 0] += ws - 1
    rel[:, :, 1] += ws - 1
    rel[:, :, 0] *= 2 * ws - 1
    return rel.sum(-1)  # (N, N) int


def make_attn_mask(H, W, ws, shift):
    img = np.zeros((1, H, W, 1), np.float32)
    cnt = 0
    for hs in (slice(0, -ws), slice(-ws, -shift), slice(-shift, None)):
        for wsl in (slice(0, -ws), slice(-ws, -shift), slice(-shift, None)):
            img[:, hs, wsl, :] = cnt
            cnt += 1
    mw = np.asarray(window_partition(jnp.asarray(img), ws)).reshape(-1, ws * ws)
    am = mw[:, None, :] - mw[:, :, None]
    am = np.where(am != 0, -100.0, 0.0).astype(np.float32)
    return jnp.asarray(am)  # (nW, N, N)


# ------------------------------- tiling choices ------------------------------- #
def _choose_window_tiling(B, nW, Np, target_rows, prefer_multi_step):
    """Return (wb_images, windows_per_image) processed per attention grid step.

    Whole-image batching (wpi == nW) keeps the combined bias addressable with a
    constant index_map; when one image's windows exceed the row budget (large nW),
    fall back to sub-image window tiling (wpi | nW) with a modular bias index_map
    so VMEM stays bounded on v7x.
    """
    if nW * Np <= target_rows:
        divs = [d for d in range(1, B + 1) if B % d == 0 and d * nW * Np <= target_rows]
        wb = max(divs) if divs else 1
        if prefer_multi_step:
            pref = [d for d in divs if (B // d) >= 2]
            if pref:
                wb = max(pref)
        return wb, nW
    divs = [d for d in range(1, nW + 1) if nW % d == 0 and d * Np <= target_rows]
    return 1, (max(divs) if divs else 1)


def _choose_row_tile(rows, target, prefer_multi_step):
    """MLP row tile: a divisor of `rows` (no padding), multiple of 8, <= target."""
    divs = [d for d in range(8, min(rows, target) + 1, 8) if rows % d == 0]
    if divs:
        tile = max(divs)
        if prefer_multi_step:
            multi = [d for d in divs if rows // d >= 2]
            if multi:
                tile = max(multi)
        return tile, False
    # ragged fallback (not hit at typical Swin shapes)
    return max(8, (min(target, rows) // 8) * 8), True


# ------------------------------ Pallas kernels ------------------------------ #
def _attn_kernel(num_heads, head_dim, wb_images, wpi, Np,
                 x_ref, g_ref, be_ref, wq_ref, wk_ref, wv_ref,
                 bq_ref, bk_ref, bv_ref, wp_ref, bp_ref, bias_ref, o_ref):
    """LN1 + Q/K/V + windowed MHSA (+combined bias) + out-proj for WB windows/step."""
    C = num_heads * head_dim
    WB = wb_images * wpi
    T = WB * Np

    # ---- fused LayerNorm (token-wise, f32) ----
    x = x_ref[...]                                           # (T, C)
    mean = jnp.mean(x, axis=-1, keepdims=True)
    var = jnp.mean(jnp.square(x - mean), axis=-1, keepdims=True)
    xn = (x - mean) * jax.lax.rsqrt(var + 1e-5) * g_ref[...] + be_ref[...]
    xn_bf = xn.astype(jnp.bfloat16)

    # ---- Q/K/V: three full-K matmuls, bf16 in / f32 acc, one bf16 cast each.
    # The attention scale is pre-folded into wq/bq at param-prep time.
    q = (jnp.dot(xn_bf, wq_ref[...], preferred_element_type=jnp.float32)
         + bq_ref[...]).astype(jnp.bfloat16).reshape(WB, Np, C)
    k = (jnp.dot(xn_bf, wk_ref[...], preferred_element_type=jnp.float32)
         + bk_ref[...]).astype(jnp.bfloat16).reshape(WB, Np, C)
    v = (jnp.dot(xn_bf, wv_ref[...], preferred_element_type=jnp.float32)
         + bv_ref[...]).astype(jnp.bfloat16).reshape(WB, Np, C)

    bias = bias_ref[...]                   # (bias_nw, nH, Np, Np), bias_nw in {1, wpi}
    bias_nw = bias.shape[0]

    # ---- per-head, window-batched attention (combined bias added once per head) ----
    heads = []
    for h in range(num_heads):
        lo = h * head_dim
        qh = q[:, :, lo:lo + head_dim]
        kh = k[:, :, lo:lo + head_dim]
        vh = v[:, :, lo:lo + head_dim]
        s = jnp.einsum("wnd,wmd->wnm", qh, kh,
                       preferred_element_type=jnp.float32)   # (WB, Np, Np) f32
        bh = bias[:, h]                                       # (bias_nw, Np, Np)
        if bias_nw == 1 or wb_images == 1:
            s = s + bh
        else:  # whole-image batching with a per-window shift mask
            s = (s.reshape(wb_images, wpi, Np, Np) + bh[None]).reshape(WB, Np, Np)
        s = s - jnp.max(s, axis=-1, keepdims=True)
        e = jnp.exp(s)
        p_attn = e * pl.reciprocal(jnp.sum(e, axis=-1, keepdims=True), approx=True)
        oh = jnp.einsum("wnm,wmd->wnd", p_attn.astype(jnp.bfloat16), vh,
                        preferred_element_type=jnp.float32)   # (WB, Np, hd)
        heads.append(oh.astype(jnp.bfloat16))

    # ---- assemble heads, then ONE full-K output projection ----
    attn = jnp.concatenate(heads, axis=-1).reshape(T, C)      # (T, C) bf16
    o_ref[...] = jnp.dot(attn, wp_ref[...],
                         preferred_element_type=jnp.float32) + bp_ref[...]


def window_attention_pallas(xw, bias_all, p, num_heads, wb_images, wpi, nW):
    """xw: (B_, Np, C) windowed tokens -> (B_, Np, C) attention output."""
    B_, Np, C = xw.shape
    head_dim = C // num_heads
    WB = wb_images * wpi
    rows = WB * Np
    n_steps = B_ // WB
    nH = num_heads

    if bias_all.shape[0] == 1:                 # no shift: one bias for all windows
        bias_block = (1, nH, Np, Np)
        bias_map = lambda s: (0, 0, 0, 0)
    elif wpi == nW:                            # whole images per step
        bias_block = (nW, nH, Np, Np)
        bias_map = lambda s: (0, 0, 0, 0)
    else:                                      # sub-image window tiling
        steps_per_image = nW // wpi
        bias_block = (wpi, nH, Np, Np)
        bias_map = lambda s: (s % steps_per_image, 0, 0, 0)

    kernel = functools.partial(_attn_kernel, num_heads, head_dim, wb_images, wpi, Np)
    out = pl.pallas_call(
        kernel,
        out_shape=jax.ShapeDtypeStruct((B_ * Np, C), jnp.float32),
        grid=(n_steps,),
        in_specs=[
            pl.BlockSpec((rows, C), lambda s: (s, 0)),      # x (token rows)
            pl.BlockSpec((1, C), lambda s: (0, 0)),         # gamma1
            pl.BlockSpec((1, C), lambda s: (0, 0)),         # beta1
            pl.BlockSpec((C, C), lambda s: (0, 0)),         # Wq (scaled, bf16)
            pl.BlockSpec((C, C), lambda s: (0, 0)),         # Wk (bf16)
            pl.BlockSpec((C, C), lambda s: (0, 0)),         # Wv (bf16)
            pl.BlockSpec((1, C), lambda s: (0, 0)),         # bq (scaled)
            pl.BlockSpec((1, C), lambda s: (0, 0)),         # bk
            pl.BlockSpec((1, C), lambda s: (0, 0)),         # bv
            pl.BlockSpec((C, C), lambda s: (0, 0)),         # Wproj (bf16)
            pl.BlockSpec((1, C), lambda s: (0, 0)),         # bproj
            pl.BlockSpec(bias_block, bias_map),             # combined rel-bias(+mask)
        ],
        out_specs=pl.BlockSpec((rows, C), lambda s: (s, 0)),
        compiler_params=pltpu.CompilerParams(
            dimension_semantics=("parallel",),
            vmem_limit_bytes=_hw()["vmem_limit"]),
    )(xw.reshape(B_ * Np, C), p["gamma1"], p["beta1"],
      p["wq_bf"], p["wk_bf"], p["wv_bf"], p["bq"], p["bk"], p["bv"],
      p["w_proj_bf"], p["b_proj"], bias_all)
    return out.reshape(B_, Np, C)


def _mlp_kernel(s_ref, a_ref, g_ref, be_ref, w1_ref, b1_ref, w2_ref, b2_ref, o_ref):
    """Residual-1 add + LN2 + MLP(GELU) + residual-2, per row tile."""
    x = s_ref[...] + a_ref[...]
    mean = jnp.mean(x, axis=-1, keepdims=True)
    var = jnp.mean(jnp.square(x - mean), axis=-1, keepdims=True)
    xn = (x - mean) * jax.lax.rsqrt(var + 1e-5) * g_ref[...] + be_ref[...]
    h = jnp.dot(xn.astype(jnp.bfloat16), w1_ref[...],
                preferred_element_type=jnp.float32) + b1_ref[...]
    h = jax.nn.gelu(h, approximate=False)           # exact (erf) GELU, f32, as nn.GELU
    y = jnp.dot(h.astype(jnp.bfloat16), w2_ref[...],
                preferred_element_type=jnp.float32) + b2_ref[...]
    o_ref[...] = x + y


def mlp_residual_pallas(shortcut, attn_out, p):
    B, L, C = shortcut.shape
    rows = B * L
    hidden = p["w1"].shape[1]
    hw = _hw()
    tile, need_pad = _choose_row_tile(rows, hw["mlp_target_rows"],
                                      hw["prefer_multi_step"])
    s2 = shortcut.reshape(rows, C)
    a2 = attn_out.reshape(rows, C)
    rows_p = rows
    if need_pad:
        rows_p = ((rows + tile - 1) // tile) * tile
        s2 = jnp.pad(s2, ((0, rows_p - rows), (0, 0)))
        a2 = jnp.pad(a2, ((0, rows_p - rows), (0, 0)))
    out = pl.pallas_call(
        _mlp_kernel,
        out_shape=jax.ShapeDtypeStruct((rows_p, C), jnp.float32),
        grid=(rows_p // tile,),
        in_specs=[
            pl.BlockSpec((tile, C), lambda r: (r, 0)),
            pl.BlockSpec((tile, C), lambda r: (r, 0)),
            pl.BlockSpec((1, C), lambda r: (0, 0)),
            pl.BlockSpec((1, C), lambda r: (0, 0)),
            pl.BlockSpec((C, hidden), lambda r: (0, 0)),      # W1 (bf16), resident
            pl.BlockSpec((1, hidden), lambda r: (0, 0)),
            pl.BlockSpec((hidden, C), lambda r: (0, 0)),      # W2 (bf16), resident
            pl.BlockSpec((1, C), lambda r: (0, 0)),
        ],
        out_specs=pl.BlockSpec((tile, C), lambda r: (r, 0)),
        compiler_params=pltpu.CompilerParams(
            dimension_semantics=("parallel",),
            vmem_limit_bytes=hw["vmem_limit"]),
    )(s2, a2, p["gamma2"], p["beta2"], p["w1_bf"], p["b1"], p["w2_bf"], p["b2"])
    if rows_p != rows:
        out = out[:rows]
    return out.reshape(B, L, C)


# --------------------------- Swin block / BasicLayer --------------------------- #
def swin_block_pallas(x, p, shift, H, W, ws, num_heads):
    B, L, C = x.shape
    N = ws * ws
    Np = ((N + 7) // 8) * 8                 # pad tokens/window to a sublane multiple
    shortcut = x
    # LN1 is fused inside the attention kernel (per-token, commutes with shift/partition).
    xs = x.reshape(B, H, W, C)
    if shift > 0:
        xs = jnp.roll(xs, shift=(-shift, -shift), axis=(1, 2))
    xw = window_partition(xs, ws).reshape(-1, N, C)
    B_ = xw.shape[0]
    nW = B_ // B
    if Np != N:
        xw = jnp.pad(xw, ((0, 0), (0, Np - N), (0, 0)))
    hw = _hw()
    wb_images, wpi = _choose_window_tiling(B, nW, Np, hw["attn_target_rows"],
                                           hw["prefer_multi_step"])
    attn_w = window_attention_pallas(xw, p["attn_bias"], p, num_heads,
                                     wb_images, wpi, nW)
    attn_w = attn_w[:, :N, :]
    shifted = window_reverse(attn_w.reshape(-1, ws, ws, C), ws, H, W)
    if shift > 0:
        shifted = jnp.roll(shifted, shift=(shift, shift), axis=(1, 2))
    attn_out = shifted.reshape(B, L, C)
    return mlp_residual_pallas(shortcut, attn_out, p)


def basic_layer_forward(x, blocks, H, W, ws, num_heads):
    for p, shift in blocks:
        x = swin_block_pallas(x, p, shift, H, W, ws, num_heads)
    # downsample=None in this BasicLayer configuration
    return x


# ------------------------------ pure-JAX reference ------------------------------ #
def _ln(x, g, b):
    m = jnp.mean(x, -1, keepdims=True)
    v = jnp.mean(jnp.square(x - m), -1, keepdims=True)
    return (x - m) * jax.lax.rsqrt(v + 1e-5) * g + b


def ref_block(x, p, shift, H, W, ws, num_heads):
    B, L, C = x.shape
    hd = C // num_heads
    scale = hd ** (-0.5)
    N = ws * ws
    shortcut = x
    xn = _ln(x, p["gamma1"][0], p["beta1"][0])
    xs = xn.reshape(B, H, W, C)
    if shift > 0:
        xs = jnp.roll(xs, (-shift, -shift), (1, 2))
    xw = window_partition(xs, ws).reshape(-1, N, C)
    B_ = xw.shape[0]
    nW = B_ // B
    qkv = xw @ p["w_qkv"] + p["b_qkv"][0]
    qkv = qkv.reshape(B_, N, 3, num_heads, hd).transpose(2, 0, 3, 1, 4)
    q, k, v = qkv[0] * scale, qkv[1], qkv[2]
    attn = jnp.einsum("bhnd,bhmd->bhnm", q, k)
    attn = attn + p["rel_bias"][None]
    if shift > 0:
        attn = attn.reshape(B, nW, num_heads, N, N) + p["attn_mask"][None, :, None]
        attn = attn.reshape(B_, num_heads, N, N)
    attn = jax.nn.softmax(attn, axis=-1)
    out = jnp.einsum("bhnm,bhmd->bhnd", attn, v).transpose(0, 2, 1, 3).reshape(B_, N, C)
    out = out @ p["w_proj"] + p["b_proj"][0]
    out = window_reverse(out.reshape(-1, ws, ws, C), ws, H, W)
    if shift > 0:
        out = jnp.roll(out, (shift, shift), (1, 2))
    x = shortcut + out.reshape(B, L, C)
    xn2 = _ln(x, p["gamma2"][0], p["beta2"][0])
    h = jax.nn.gelu(xn2 @ p["w1"] + p["b1"][0], approximate=False)
    return x + (h @ p["w2"] + p["b2"][0])


def ref_forward(x, blocks, H, W, ws, num_heads):
    for p, shift in blocks:
        x = ref_block(x, p, shift, H, W, ws, num_heads)
    return x


# ------------------------------------ main ------------------------------------ #
def init_block_params(key, dim, num_heads, ws, mlp_ratio):
    hidden = int(dim * mlp_ratio)
    ks = jax.random.split(key, 8)
    n = lambda k, s: (jax.random.normal(k, s, jnp.float32) * 0.02)
    return {
        "gamma1": jnp.ones((1, dim), jnp.float32),
        "beta1": jnp.zeros((1, dim), jnp.float32),
        "w_qkv": n(ks[0], (dim, 3 * dim)),
        "b_qkv": n(ks[1], (1, 3 * dim)),
        "w_proj": n(ks[2], (dim, dim)),
        "b_proj": n(ks[3], (1, dim)),
        "rel_table": n(ks[4], ((2 * ws - 1) * (2 * ws - 1), num_heads)),
        "gamma2": jnp.ones((1, dim), jnp.float32),
        "beta2": jnp.zeros((1, dim), jnp.float32),
        "w1": n(ks[5], (dim, hidden)),
        "b1": n(ks[6], (1, hidden)),
        "w2": n(ks[7], (hidden, dim)),
        "b2": jnp.zeros((1, dim), jnp.float32),
    }


def prepare_block_params(p, dim, num_heads, ws, shift):
    """Kernel-side parameter prep: scale folding, bf16 weight copies, combined bias."""
    C = dim
    head_dim = C // num_heads
    scale = head_dim ** (-0.5)
    N = ws * ws
    Np = ((N + 7) // 8) * 8
    # attention scale folded into the Q projection (free at init, saves a VPU mul/elem)
    p["wq_bf"] = (p["w_qkv"][:, :C] * scale).astype(jnp.bfloat16)
    p["wk_bf"] = p["w_qkv"][:, C:2 * C].astype(jnp.bfloat16)
    p["wv_bf"] = p["w_qkv"][:, 2 * C:].astype(jnp.bfloat16)
    p["bq"] = p["b_qkv"][:, :C] * scale
    p["bk"] = p["b_qkv"][:, C:2 * C]
    p["bv"] = p["b_qkv"][:, 2 * C:]
    p["w_proj_bf"] = p["w_proj"].astype(jnp.bfloat16)
    p["w1_bf"] = p["w1"].astype(jnp.bfloat16)
    p["w2_bf"] = p["w2"].astype(jnp.bfloat16)
    # combined relative-position bias (+ shift mask), padded to Np tokens per window
    rb = p["rel_bias"]                                   # (nH, N, N)
    if Np != N:
        rb = jnp.pad(rb, ((0, 0), (0, Np - N), (0, Np - N)))
        rb = rb.at[:, :, N:].set(-1e9)                   # kill padded keys in softmax
    if shift > 0:
        m = p["attn_mask"]                               # (nW, N, N)
        if Np != N:
            m = jnp.pad(m, ((0, 0), (0, Np - N), (0, Np - N)))
        p["attn_bias"] = rb[None] + m[:, None]           # (nW, nH, Np, Np)
    else:
        p["attn_bias"] = rb[None]                        # (1, nH, Np, Np)
    return p


if __name__ == "__main__":
    B, H, W = 2, 8, 8
    dim, depth, num_heads, window_size, mlp_ratio = 32, 2, 4, 4, 4.0

    # SwinTransformerBlock rule: if min(resolution) <= window_size -> no shift, ws=min(res)
    ws = window_size if min(H, W) > window_size else min(H, W)
    force_no_shift = min(H, W) <= window_size
    N = ws * ws

    key = jax.random.PRNGKey(0)
    kx, kp = jax.random.split(key)
    x = jax.random.normal(kx, (B, H * W, dim), jnp.float32)

    rel_idx = relative_position_index(ws)
    bkeys = jax.random.split(kp, depth)
    blocks = []
    for i in range(depth):
        p = init_block_params(bkeys[i], dim, num_heads, ws, mlp_ratio)
        p["rel_bias"] = p["rel_table"][rel_idx.reshape(-1)].reshape(
            N, N, num_heads).transpose(2, 0, 1)                  # (nH, N, N)
        shift = 0 if (i % 2 == 0 or force_no_shift) else ws // 2
        if shift > 0:
            p["attn_mask"] = make_attn_mask(H, W, ws, shift)     # (nW, N, N)
        p = prepare_block_params(p, dim, num_heads, ws, shift)
        blocks.append((p, shift))

    out = basic_layer_forward(x, blocks, H, W, ws, num_heads)
    out = jax.block_until_ready(out)

    ref = ref_forward(x, blocks, H, W, ws, num_heads)
    np.testing.assert_allclose(np.asarray(out), np.asarray(ref), atol=5e-3, rtol=5e-3)

    print("KERNEL_OK")
</pallas_src>

<mosaic_0001>
module attributes {stable_mosaic.version = 11 : i64} {
  func.func @_attn_kernel(%arg0: i32, %arg1: memref<64x32xf32, #tpu.memory_space<vmem>>, %arg2: memref<1x32xf32, #tpu.memory_space<vmem>>, %arg3: memref<1x32xf32, #tpu.memory_space<vmem>>, %arg4: memref<32x32xbf16, #tpu.memory_space<vmem>>, %arg5: memref<32x32xbf16, #tpu.memory_space<vmem>>, %arg6: memref<32x32xbf16, #tpu.memory_space<vmem>>, %arg7: memref<1x32xf32, #tpu.memory_space<vmem>>, %arg8: memref<1x32xf32, #tpu.memory_space<vmem>>, %arg9: memref<1x32xf32, #tpu.memory_space<vmem>>, %arg10: memref<32x32xbf16, #tpu.memory_space<vmem>>, %arg11: memref<1x32xf32, #tpu.memory_space<vmem>>, %arg12: memref<1x4x16x16xf32, #tpu.memory_space<vmem>>, %arg13: memref<64x32xf32, #tpu.memory_space<vmem>>) attributes {dimension_semantics = [#tpu.dimension_semantics<parallel>], iteration_bounds = array<i64: 2>, scalar_prefetch = 0 : i64, scratch_operands = 0 : i64, tpu.core_type = #tpu.core_type<tc>, window_params = [{transform_indices = @transform_0, window_bounds = array<i64: 64, 32>}, {pipeline_mode = #tpu.pipeline_mode<synchronous>, transform_indices = @transform_1, window_bounds = array<i64: 1, 32>}, {pipeline_mode = #tpu.pipeline_mode<synchronous>, transform_indices = @transform_2, window_bounds = array<i64: 1, 32>}, {pipeline_mode = #tpu.pipeline_mode<synchronous>, transform_indices = @transform_3, window_bounds = array<i64: 32, 32>}, {pipeline_mode = #tpu.pipeline_mode<synchronous>, transform_indices = @transform_4, window_bounds = array<i64: 32, 32>}, {pipeline_mode = #tpu.pipeline_mode<synchronous>, transform_indices = @transform_5, window_bounds = array<i64: 32, 32>}, {pipeline_mode = #tpu.pipeline_mode<synchronous>, transform_indices = @transform_6, window_bounds = array<i64: 1, 32>}, {pipeline_mode = #tpu.pipeline_mode<synchronous>, transform_indices = @transform_7, window_bounds = array<i64: 1, 32>}, {pipeline_mode = #tpu.pipeline_mode<synchronous>, transform_indices = @transform_8, window_bounds = array<i64: 1, 32>}, {pipeline_mode = #tpu.pipeline_mode<synchronous>, transform_indices = @transform_9, window_bounds = array<i64: 32, 32>}, {pipeline_mode = #tpu.pipeline_mode<synchronous>, transform_indices = @transform_10, window_bounds = array<i64: 1, 32>}, {pipeline_mode = #tpu.pipeline_mode<synchronous>, transform_indices = @transform_11, window_bounds = array<i64: 1, 4, 16, 16>}, {transform_indices = @transform_12, window_bounds = array<i64: 64, 32>}]} {
    %c0 = arith.constant 0 : index
    %c0_0 = arith.constant 0 : index
    %0 = vector.load %arg1[%c0, %c0_0] : memref<64x32xf32, #tpu.memory_space<vmem>>, vector<64x32xf32>
    %cst = arith.constant dense<0.000000e+00> : vector<64xf32>
    %1 = vector.multi_reduction <add>, %0, %cst [1] : vector<64x32xf32> to vector<64xf32>
    %2 = vector.shape_cast %1 : vector<64xf32> to vector<64x1xf32>
    %cst_1 = arith.constant 3.200000e+01 : f32
    %3 = vector.broadcast %cst_1 : f32 to vector<64x1xf32>
    %4 = arith.divf %2, %3 : vector<64x1xf32>
    %5 = vector.broadcast %4 : vector<64x1xf32> to vector<64x32xf32>
    %6 = arith.subf %0, %5 : vector<64x32xf32>
    %7 = arith.mulf %6, %6 : vector<64x32xf32>
    %cst_2 = arith.constant dense<0.000000e+00> : vector<64xf32>
    %8 = vector.multi_reduction <add>, %7, %cst_2 [1] : vector<64x32xf32> to vector<64xf32>
    %9 = vector.shape_cast %8 : vector<64xf32> to vector<64x1xf32>
    %cst_3 = arith.constant 3.200000e+01 : f32
    %10 = vector.broadcast %cst_3 : f32 to vector<64x1xf32>
    %11 = arith.divf %9, %10 : vector<64x1xf32>
    %12 = vector.broadcast %4 : vector<64x1xf32> to vector<64x32xf32>
    %13 = arith.subf %0, %12 : vector<64x32xf32>
    %cst_4 = arith.constant 9.99999974E-6 : f32
    %14 = vector.broadcast %cst_4 : f32 to vector<64x1xf32>
    %15 = arith.addf %11, %14 : vector<64x1xf32>
    %16 = math.rsqrt %15 : vector<64x1xf32>
    %17 = vector.broadcast %16 : vector<64x1xf32> to vector<64x32xf32>
    %18 = arith.mulf %13, %17 : vector<64x32xf32>
    %c0_5 = arith.constant 0 : index
    %c0_6 = arith.constant 0 : index
    %19 = vector.load %arg2[%c0_5, %c0_6] : memref<1x32xf32, #tpu.memory_space<vmem>>, vector<1x32xf32>
    %20 = vector.broadcast %19 : vector<1x32xf32> to vector<64x32xf32>
    %21 = arith.mulf %18, %20 : vector<64x32xf32>
    %c0_7 = arith.constant 0 : index
    %c0_8 = arith.constant 0 : index
    %22 = vector.load %arg3[%c0_7, %c0_8] : memref<1x32xf32, #tpu.memory_space<vmem>>, vector<1x32xf32>
    %23 = vector.broadcast %22 : vector<1x32xf32> to vector<64x32xf32>
    %24 = arith.addf %21, %23 : vector<64x32xf32>
    %25 = arith.truncf %24 : vector<64x32xf32> to vector<64x32xbf16>
    %c0_9 = arith.constant 0 : index
    %c0_10 = arith.constant 0 : index
    %26 = vector.load %arg4[%c0_9, %c0_10] : memref<32x32xbf16, #tpu.memory_space<vmem>>, vector<32x32xbf16>
    %cst_11 = arith.constant dense<0.000000e+00> : vector<64x32xf32>
    %27 = tpu.matmul %25, %26, %cst_11 {dimension_numbers = #tpu.dot_dimension_numbers<[1], [0], [0], [1], [0, 0, 1, 1], [], []>} : vector<64x32xbf16>, vector<32x32xbf16>, vector<64x32xf32> -> vector<64x32xf32>
    %c0_12 = arith.constant 0 : index
    %c0_13 = arith.constant 0 : index
    %28 = vector.load %arg7[%c0_12, %c0_13] : memref<1x32xf32, #tpu.memory_space<vmem>>, vector<1x32xf32>
    %29 = vector.broadcast %28 : vector<1x32xf32> to vector<64x32xf32>
    %30 = arith.addf %27, %29 : vector<64x32xf32>
    %31 = arith.truncf %30 : vector<64x32xf32> to vector<64x32xbf16>
    %32 = vector.shape_cast %31 : vector<64x32xbf16> to vector<4x16x32xbf16>
    %c0_14 = arith.constant 0 : index
    %c0_15 = arith.constant 0 : index
    %33 = vector.load %arg5[%c0_14, %c0_15] : memref<32x32xbf16, #tpu.memory_space<vmem>>, vector<32x32xbf16>
    %cst_16 = arith.constant dense<0.000000e+00> : vector<64x32xf32>
    %34 = tpu.matmul %25, %33, %cst_16 {dimension_numbers = #tpu.dot_dimension_numbers<[1], [0], [0], [1], [0, 0, 1, 1], [], []>} : vector<64x32xbf16>, vector<32x32xbf16>, vector<64x32xf32> -> vector<64x32xf32>
    %c0_17 = arith.constant 0 : index
    %c0_18 = arith.constant 0 : index
    %35 = vector.load %arg8[%c0_17, %c0_18] : memref<1x32xf32, #tpu.memory_space<vmem>>, vector<1x32xf32>
    %36 = vector.broadcast %35 : vector<1x32xf32> to vector<64x32xf32>
    %37 = arith.addf %34, %36 : vector<64x32xf32>
    %38 = arith.truncf %37 : vector<64x32xf32> to vector<64x32xbf16>
    %39 = vector.shape_cast %38 : vector<64x32xbf16> to vector<4x16x32xbf16>
    %c0_19 = arith.constant 0 : index
    %c0_20 = arith.constant 0 : index
    %40 = vector.load %arg6[%c0_19, %c0_20] : memref<32x32xbf16, #tpu.memory_space<vmem>>, vector<32x32xbf16>
    %cst_21 = arith.constant dense<0.000000e+00> : vector<64x32xf32>
    %41 = tpu.matmul %25, %40, %cst_21 {dimension_numbers = #tpu.dot_dimension_numbers<[1], [0], [0], [1], [0, 0, 1, 1], [], []>} : vector<64x32xbf16>, vector<32x32xbf16>, vector<64x32xf32> -> vector<64x32xf32>
    %c0_22 = arith.constant 0 : index
    %c0_23 = arith.constant 0 : index
    %42 = vector.load %arg9[%c0_22, %c0_23] : memref<1x32xf32, #tpu.memory_space<vmem>>, vector<1x32xf32>
    %43 = vector.broadcast %42 : vector<1x32xf32> to vector<64x32xf32>
    %44 = arith.addf %41, %43 : vector<64x32xf32>
    %45 = arith.truncf %44 : vector<64x32xf32> to vector<64x32xbf16>
    %46 = vector.shape_cast %45 : vector<64x32xbf16> to vector<4x16x32xbf16>
    %c0_24 = arith.constant 0 : index
    %c0_25 = arith.constant 0 : index
    %c0_26 = arith.constant 0 : index
    %c0_27 = arith.constant 0 : index
    %47 = vector.load %arg12[%c0_24, %c0_25, %c0_26, %c0_27] : memref<1x4x16x16xf32, #tpu.memory_space<vmem>>, vector<1x4x16x16xf32>
    %48 = vector.extract_strided_slice %32 {offsets = [0, 0, 0], sizes = [4, 16, 8], strides = [1, 1, 1]} : vector<4x16x32xbf16> to vector<4x16x8xbf16>
    %49 = vector.extract_strided_slice %39 {offsets = [0, 0, 0], sizes = [4, 16, 8], strides = [1, 1, 1]} : vector<4x16x32xbf16> to vector<4x16x8xbf16>
    %50 = vector.extract_strided_slice %46 {offsets = [0, 0, 0], sizes = [4, 16, 8], strides = [1, 1, 1]} : vector<4x16x32xbf16> to vector<4x16x8xbf16>
    "tpu.trace_start"() <{level = 10 : i32, message = "wnd,wmd->wnm"}> : () -> ()
    %cst_28 = arith.constant dense<0.000000e+00> : vector<4x16x16xf32>
    %51 = tpu.matmul %48, %49, %cst_28 {dimension_numbers = #tpu.dot_dimension_numbers<[2], [2], [1], [1], [0, 0, 0, 1, 1, 1], [0], [0]>} : vector<4x16x8xbf16>, vector<4x16x8xbf16>, vector<4x16x16xf32> -> vector<4x16x16xf32>
    "tpu.trace_stop"() : () -> ()
    %52 = vector.extract_strided_slice %47 {offsets = [0, 0, 0, 0], sizes = [1, 1, 16, 16], strides = [1, 1, 1, 1]} : vector<1x4x16x16xf32> to vector<1x1x16x16xf32>
    %53 = vector.shape_cast %52 : vector<1x1x16x16xf32> to vector<1x16x16xf32>
    %54 = vector.broadcast %53 : vector<1x16x16xf32> to vector<4x16x16xf32>
    %55 = arith.addf %51, %54 : vector<4x16x16xf32>
    %cst_29 = arith.constant dense<0xFF800000> : vector<4x16xf32>
    %56 = vector.multi_reduction <maximumf>, %55, %cst_29 [2] : vector<4x16x16xf32> to vector<4x16xf32>
    %57 = vector.shape_cast %56 : vector<4x16xf32> to vector<4x16x1xf32>
    %58 = vector.broadcast %57 : vector<4x16x1xf32> to vector<4x16x16xf32>
    %59 = arith.subf %55, %58 : vector<4x16x16xf32>
    %60 = math.exp %59 : vector<4x16x16xf32>
    %cst_30 = arith.constant dense<0.000000e+00> : vector<4x16xf32>
    %61 = vector.multi_reduction <add>, %60, %cst_30 [2] : vector<4x16x16xf32> to vector<4x16xf32>
    %62 = vector.shape_cast %61 : vector<4x16xf32> to vector<4x16x1xf32>
    %63 = tpu.reciprocal %62 {approx = true} : vector<4x16x1xf32> -> vector<4x16x1xf32>
    %64 = vector.broadcast %63 : vector<4x16x1xf32> to vector<4x16x16xf32>
    %65 = arith.mulf %60, %64 : vector<4x16x16xf32>
    %66 = arith.truncf %65 : vector<4x16x16xf32> to vector<4x16x16xbf16>
    "tpu.trace_start"() <{level = 10 : i32, message = "wnm,wmd->wnd"}> : () -> ()
    %cst_31 = arith.constant dense<0.000000e+00> : vector<4x16x8xf32>
    %67 = tpu.matmul %66, %50, %cst_31 {dimension_numbers = #tpu.dot_dimension_numbers<[2], [1], [1], [2], [0, 0, 0, 1, 1, 2], [0], [0]>} : vector<4x16x16xbf16>, vector<4x16x8xbf16>, vector<4x16x8xf32> -> vector<4x16x8xf32>
    "tpu.trace_stop"() : () -> ()
    %68 = arith.truncf %67 : vector<4x16x8xf32> to vector<4x16x8xbf16>
    %69 = vector.extract_strided_slice %32 {offsets = [0, 0, 8], sizes = [4, 16, 8], strides = [1, 1, 1]} : vector<4x16x32xbf16> to vector<4x16x8xbf16>
    %70 = vector.extract_strided_slice %39 {offsets = [0, 0, 8], sizes = [4, 16, 8], strides = [1, 1, 1]} : vector<4x16x32xbf16> to vector<4x16x8xbf16>
    %71 = vector.extract_strided_slice %46 {offsets = [0, 0, 8], sizes = [4, 16, 8], strides = [1, 1, 1]} : vector<4x16x32xbf16> to vector<4x16x8xbf16>
    "tpu.trace_start"() <{level = 10 : i32, message = "wnd,wmd->wnm"}> : () -> ()
    %cst_32 = arith.constant dense<0.000000e+00> : vector<4x16x16xf32>
    %72 = tpu.matmul %69, %70, %cst_32 {dimension_numbers = #tpu.dot_dimension_numbers<[2], [2], [1], [1], [0, 0, 0, 1, 1, 1], [0], [0]>} : vector<4x16x8xbf16>, vector<4x16x8xbf16>, vector<4x16x16xf32> -> vector<4x16x16xf32>
    "tpu.trace_stop"() : () -> ()
    %73 = vector.extract_strided_slice %47 {offsets = [0, 1, 0, 0], sizes = [1, 1, 16, 16], strides = [1, 1, 1, 1]} : vector<1x4x16x16xf32> to vector<1x1x16x16xf32>
    %74 = vector.shape_cast %73 : vector<1x1x16x16xf32> to vector<1x16x16xf32>
    %75 = vector.broadcast %74 : vector<1x16x16xf32> to vector<4x16x16xf32>
    %76 = arith.addf %72, %75 : vector<4x16x16xf32>
    %cst_33 = arith.constant dense<0xFF800000> : vector<4x16xf32>
    %77 = vector.multi_reduction <maximumf>, %76, %cst_33 [2] : vector<4x16x16xf32> to vector<4x16xf32>
    %78 = vector.shape_cast %77 : vector<4x16xf32> to vector<4x16x1xf32>
    %79 = vector.broadcast %78 : vector<4x16x1xf32> to vector<4x16x16xf32>
    %80 = arith.subf %76, %79 : vector<4x16x16xf32>
    %81 = math.exp %80 : vector<4x16x16xf32>
    %cst_34 = arith.constant dense<0.000000e+00> : vector<4x16xf32>
    %82 = vector.multi_reduction <add>, %81, %cst_34 [2] : vector<4x16x16xf32> to vector<4x16xf32>
    %83 = vector.shape_cast %82 : vector<4x16xf32> to vector<4x16x1xf32>
    %84 = tpu.reciprocal %83 {approx = true} : vector<4x16x1xf32> -> vector<4x16x1xf32>
    %85 = vector.broadcast %84 : vector<4x16x1xf32> to vector<4x16x16xf32>
    %86 = arith.mulf %81, %85 : vector<4x16x16xf32>
    %87 = arith.truncf %86 : vector<4x16x16xf32> to vector<4x16x16xbf16>
    "tpu.trace_start"() <{level = 10 : i32, message = "wnm,wmd->wnd"}> : () -> ()
    %cst_35 = arith.constant dense<0.000000e+00> : vector<4x16x8xf32>
    %88 = tpu.matmul %87, %71, %cst_35 {dimension_numbers = #tpu.dot_dimension_numbers<[2], [1], [1], [2], [0, 0, 0, 1, 1, 2], [0], [0]>} : vector<4x16x16xbf16>, vector<4x16x8xbf16>, vector<4x16x8xf32> -> vector<4x16x8xf32>
    "tpu.trace_stop"() : () -> ()
    %89 = arith.truncf %88 : vector<4x16x8xf32> to vector<4x16x8xbf16>
    %90 = vector.extract_strided_slice %32 {offsets = [0, 0, 16], sizes = [4, 16, 8], strides = [1, 1, 1]} : vector<4x16x32xbf16> to vector<4x16x8xbf16>
    %91 = vector.extract_strided_slice %39 {offsets = [0, 0, 16], sizes = [4, 16, 8], strides = [1, 1, 1]} : vector<4x16x32xbf16> to vector<4x16x8xbf16>
    %92 = vector.extract_strided_slice %46 {offsets = [0, 0, 16], sizes = [4, 16, 8], strides = [1, 1, 1]} : vector<4x16x32xbf16> to vector<4x16x8xbf16>
    "tpu.trace_start"() <{level = 10 : i32, message = "wnd,wmd->wnm"}> : () -> ()
    %cst_36 = arith.constant dense<0.000000e+00> : vector<4x16x16xf32>
    %93 = tpu.matmul %90, %91, %cst_36 {dimension_numbers = #tpu.dot_dimension_numbers<[2], [2], [1], [1], [0, 0, 0, 1, 1, 1], [0], [0]>} : vector<4x16x8xbf16>, vector<4x16x8xbf16>, vector<4x16x16xf32> -> vector<4x16x16xf32>
    "tpu.trace_stop"() : () -> ()
    %94 = vector.extract_strided_slice %47 {offsets = [0, 2, 0, 0], sizes = [1, 1, 16, 16], strides = [1, 1, 1, 1]} : vector<1x4x16x16xf32> to vector<1x1x16x16xf32>
    %95 = vector.shape_cast %94 : vector<1x1x16x16xf32> to vector<1x16x16xf32>
    %96 = vector.broadcast %95 : vector<1x16x16xf32> to vector<4x16x16xf32>
    %97 = arith.addf %93, %96 : vector<4x16x16xf32>
    %cst_37 = arith.constant dense<0xFF800000> : vector<4x16xf32>
    %98 = vector.multi_reduction <maximumf>, %97, %cst_37 [2] : vector<4x16x16xf32> to vector<4x16xf32>
    %99 = vector.shape_cast %98 : vector<4x16xf32> to vector<4x16x1xf32>
    %100 = vector.broadcast %99 : vector<4x16x1xf32> to vector<4x16x16xf32>
    %101 = arith.subf %97, %100 : vector<4x16x16xf32>
    %102 = math.exp %101 : vector<4x16x16xf32>
    %cst_38 = arith.constant dense<0.000000e+00> : vector<4x16xf32>
    %103 = vector.multi_reduction <add>, %102, %cst_38 [2] : vector<4x16x16xf32> to vector<4x16xf32>
    %104 = vector.shape_cast %103 : vector<4x16xf32> to vector<4x16x1xf32>
    %105 = tpu.reciprocal %104 {approx = true} : vector<4x16x1xf32> -> vector<4x16x1xf32>
    %106 = vector.broadcast %105 : vector<4x16x1xf32> to vector<4x16x16xf32>
    %107 = arith.mulf %102, %106 : vector<4x16x16xf32>
    %108 = arith.truncf %107 : vector<4x16x16xf32> to vector<4x16x16xbf16>
    "tpu.trace_start"() <{level = 10 : i32, message = "wnm,wmd->wnd"}> : () -> ()
    %cst_39 = arith.constant dense<0.000000e+00> : vector<4x16x8xf32>
    %109 = tpu.matmul %108, %92, %cst_39 {dimension_numbers = #tpu.dot_dimension_numbers<[2], [1], [1], [2], [0, 0, 0, 1, 1, 2], [0], [0]>} : vector<4x16x16xbf16>, vector<4x16x8xbf16>, vector<4x16x8xf32> -> vector<4x16x8xf32>
    "tpu.trace_stop"() : () -> ()
    %110 = arith.truncf %109 : vector<4x16x8xf32> to vector<4x16x8xbf16>
    %111 = vector.extract_strided_slice %32 {offsets = [0, 0, 24], sizes = [4, 16, 8], strides = [1, 1, 1]} : vector<4x16x32xbf16> to vector<4x16x8xbf16>
    %112 = vector.extract_strided_slice %39 {offsets = [0, 0, 24], sizes = [4, 16, 8], strides = [1, 1, 1]} : vector<4x16x32xbf16> to vector<4x16x8xbf16>
    %113 = vector.extract_strided_slice %46 {offsets = [0, 0, 24], sizes = [4, 16, 8], strides = [1, 1, 1]} : vector<4x16x32xbf16> to vector<4x16x8xbf16>
    "tpu.trace_start"() <{level = 10 : i32, message = "wnd,wmd->wnm"}> : () -> ()
    %cst_40 = arith.constant dense<0.000000e+00> : vector<4x16x16xf32>
    %114 = tpu.matmul %111, %112, %cst_40 {dimension_numbers = #tpu.dot_dimension_numbers<[2], [2], [1], [1], [0, 0, 0, 1, 1, 1], [0], [0]>} : vector<4x16x8xbf16>, vector<4x16x8xbf16>, vector<4x16x16xf32> -> vector<4x16x16xf32>
    "tpu.trace_stop"() : () -> ()
    %115 = vector.extract_strided_slice %47 {offsets = [0, 3, 0, 0], sizes = [1, 1, 16, 16], strides = [1, 1, 1, 1]} : vector<1x4x16x16xf32> to vector<1x1x16x16xf32>
    %116 = vector.shape_cast %115 : vector<1x1x16x16xf32> to vector<1x16x16xf32>
    %117 = vector.broadcast %116 : vector<1x16x16xf32> to vector<4x16x16xf32>
    %118 = arith.addf %114, %117 : vector<4x16x16xf32>
    %cst_41 = arith.constant dense<0xFF800000> : vector<4x16xf32>
    %119 = vector.multi_reduction <maximumf>, %118, %cst_41 [2] : vector<4x16x16xf32> to vector<4x16xf32>
    %120 = vector.shape_cast %119 : vector<4x16xf32> to vector<4x16x1xf32>
    %121 = vector.broadcast %120 : vector<4x16x1xf32> to vector<4x16x16xf32>
    %122 = arith.subf %118, %121 : vector<4x16x16xf32>
    %123 = math.exp %122 : vector<4x16x16xf32>
    %cst_42 = arith.constant dense<0.000000e+00> : vector<4x16xf32>
    %124 = vector.multi_reduction <add>, %123, %cst_42 [2] : vector<4x16x16xf32> to vector<4x16xf32>
    %125 = vector.shape_cast %124 : vector<4x16xf32> to vector<4x16x1xf32>
    %126 = tpu.reciprocal %125 {approx = true} : vector<4x16x1xf32> -> vector<4x16x1xf32>
    %127 = vector.broadcast %126 : vector<4x16x1xf32> to vector<4x16x16xf32>
    %128 = arith.mulf %123, %127 : vector<4x16x16xf32>
    %129 = arith.truncf %128 : vector<4x16x16xf32> to vector<4x16x16xbf16>
    "tpu.trace_start"() <{level = 10 : i32, message = "wnm,wmd->wnd"}> : () -> ()
    %cst_43 = arith.constant dense<0.000000e+00> : vector<4x16x8xf32>
    %130 = tpu.matmul %129, %113, %cst_43 {dimension_numbers = #tpu.dot_dimension_numbers<[2], [1], [1], [2], [0, 0, 0, 1, 1, 2], [0], [0]>} : vector<4x16x16xbf16>, vector<4x16x8xbf16>, vector<4x16x8xf32> -> vector<4x16x8xf32>
    "tpu.trace_stop"() : () -> ()
    %131 = arith.truncf %130 : vector<4x16x8xf32> to vector<4x16x8xbf16>
    %132 = tpu.concatenate %68, %89, %110, %131 in 2 : vector<4x16x8xbf16>, vector<4x16x8xbf16>, vector<4x16x8xbf16>, vector<4x16x8xbf16> -> vector<4x16x32xbf16>
    %133 = vector.shape_cast %132 : vector<4x16x32xbf16> to vector<64x32xbf16>
    %c0_44 = arith.constant 0 : index
    %c0_45 = arith.constant 0 : index
    %134 = vector.load %arg10[%c0_44, %c0_45] : memref<32x32xbf16, #tpu.memory_space<vmem>>, vector<32x32xbf16>
    %cst_46 = arith.constant dense<0.000000e+00> : vector<64x32xf32>
    %135 = tpu.matmul %133, %134, %cst_46 {dimension_numbers = #tpu.dot_dimension_numbers<[1], [0], [0], [1], [0, 0, 1, 1], [], []>} : vector<64x32xbf16>, vector<32x32xbf16>, vector<64x32xf32> -> vector<64x32xf32>
    %c0_47 = arith.constant 0 : index
    %c0_48 = arith.constant 0 : index
    %136 = vector.load %arg11[%c0_47, %c0_48] : memref<1x32xf32, #tpu.memory_space<vmem>>, vector<1x32xf32>
    %137 = vector.broadcast %136 : vector<1x32xf32> to vector<64x32xf32>
    %138 = arith.addf %135, %137 : vector<64x32xf32>
    %c0_49 = arith.constant 0 : index
    %c0_50 = arith.constant 0 : index
    %139 = vector.load %arg13[%c0_49, %c0_50] : memref<64x32xf32, #tpu.memory_space<vmem>>, vector<64x32xf32>
    tpu.vector_store %arg13[%c0_49, %c0_50], %138 {strides = array<i32>} : memref<64x32xf32, #tpu.memory_space<vmem>>, vector<64x32xf32>,
    return
  }
  func.func @transform_0(%arg0: i32) -> (i32, i32) {
    %c0_i32 = arith.constant 0 : i32
    %c0_i32_0 = arith.constant 0 : i32
    return %arg0, %c0_i32 : i32, i32
  }
  func.func @transform_1(%arg0: i32) -> (i32, i32) {
    %c0_i32 = arith.constant 0 : i32
    %c0_i32_0 = arith.constant 0 : i32
    %c0_i32_1 = arith.constant 0 : i32
    return %c0_i32, %c0_i32_0 : i32, i32
  }
  func.func @transform_2(%arg0: i32) -> (i32, i32) {
    %c0_i32 = arith.constant 0 : i32
    %c0_i32_0 = arith.constant 0 : i32
    %c0_i32_1 = arith.constant 0 : i32
    return %c0_i32, %c0_i32_0 : i32, i32
  }
  func.func @transform_3(%arg0: i32) -> (i32, i32) {
    %c0_i32 = arith.constant 0 : i32
    %c0_i32_0 = arith.constant 0 : i32
    %c0_i32_1 = arith.constant 0 : i32
    return %c0_i32, %c0_i32_0 : i32, i32
  }
  func.func @transform_4(%arg0: i32) -> (i32, i32) {
    %c0_i32 = arith.constant 0 : i32
    %c0_i32_0 = arith.constant 0 : i32
    %c0_i32_1 = arith.constant 0 : i32
    return %c0_i32, %c0_i32_0 : i32, i32
  }
  func.func @transform_5(%arg0: i32) -> (i32, i32) {
    %c0_i32 = arith.constant 0 : i32
    %c0_i32_0 = arith.constant 0 : i32
    %c0_i32_1 = arith.constant 0 : i32
    return %c0_i32, %c0_i32_0 : i32, i32
  }
  func.func @transform_6(%arg0: i32) -> (i32, i32) {
    %c0_i32 = arith.constant 0 : i32
    %c0_i32_0 = arith.constant 0 : i32
    %c0_i32_1 = arith.constant 0 : i32
    return %c0_i32, %c0_i32_0 : i32, i32
  }
  func.func @transform_7(%arg0: i32) -> (i32, i32) {
    %c0_i32 = arith.constant 0 : i32
    %c0_i32_0 = arith.constant 0 : i32
    %c0_i32_1 = arith.constant 0 : i32
    return %c0_i32, %c0_i32_0 : i32, i32
  }
  func.func @transform_8(%arg0: i32) -> (i32, i32) {
    %c0_i32 = arith.constant 0 : i32
    %c0_i32_0 = arith.constant 0 : i32
    %c0_i32_1 = arith.constant 0 : i32
    return %c0_i32, %c0_i32_0 : i32, i32
  }
  func.func @transform_9(%arg0: i32) -> (i32, i32) {
    %c0_i32 = arith.constant 0 : i32
    %c0_i32_0 = arith.constant 0 : i32
    %c0_i32_1 = arith.constant 0 : i32
    return %c0_i32, %c0_i32_0 : i32, i32
  }
  func.func @transform_10(%arg0: i32) -> (i32, i32) {
    %c0_i32 = arith.constant 0 : i32
    %c0_i32_0 = arith.constant 0 : i32
    %c0_i32_1 = arith.constant 0 : i32
    return %c0_i32, %c0_i32_0 : i32, i32
  }
  func.func @transform_11(%arg0: i32) -> (i32, i32, i32, i32) {
    %c0_i32 = arith.constant 0 : i32
    %c0_i32_0 = arith.constant 0 : i32
    %c0_i32_1 = arith.constant 0 : i32
    %c0_i32_2 = arith.constant 0 : i32
    %c0_i32_3 = arith.constant 0 : i32
    return %c0_i32, %c0_i32_0, %c0_i32_1, %c0_i32_2 : i32, i32, i32, i32
  }
  func.func @transform_12(%arg0: i32) -> (i32, i32) {
    %c0_i32 = arith.constant 0 : i32
    %c0_i32_0 = arith.constant 0 : i32
    return %arg0, %c0_i32 : i32, i32
  }
}

</mosaic_0001>

<llo_original>
// kernel: tpu_custom_call.1
$region0: #{tpu_custom_call.1}
  #allocation0 [shape = 'u32[]', space=smem, size = 0x4, offset = 0x4, fixed_abs, tag = 'smem constant byte address 0x4 - core index']
  #allocation1 [shape = 'u32[144,128]{1,0:T(1,128)}', space=vmem, size = 0x12000, scoped, tag = 'internal scratch']
  %s0 = inlined_call_operand.vmem [shape: f32[128,32], index: 0, kind: input, shape index: {}]
  %s1 = inlined_call_operand.vmem [shape: f32[1,32], index: 1, kind: input, shape index: {}]
  %s2 = inlined_call_operand.vmem [shape: f32[1,32], index: 2, kind: input, shape index: {}]
  %s3 = inlined_call_operand.vmem [shape: bf16[32,32], index: 3, kind: input, shape index: {}]
  %s4 = inlined_call_operand.vmem [shape: bf16[32,32], index: 4, kind: input, shape index: {}]
  %s5 = inlined_call_operand.vmem [shape: bf16[32,32], index: 5, kind: input, shape index: {}]
  %s6 = inlined_call_operand.vmem [shape: f32[1,32], index: 6, kind: input, shape index: {}]
  %s7 = inlined_call_operand.vmem [shape: f32[1,32], index: 7, kind: input, shape index: {}]
  %s8 = inlined_call_operand.vmem [shape: f32[1,32], index: 8, kind: input, shape index: {}]
  %s9 = inlined_call_operand.vmem [shape: bf16[32,32], index: 9, kind: input, shape index: {}]
  %s10 = inlined_call_operand.vmem [shape: f32[1,32], index: 10, kind: input, shape index: {}]
  %s11 = inlined_call_operand.vmem [shape: f32[1,4,16,16], index: 11, kind: input, shape index: {}]
  %s12 = inlined_call_operand.vmem [shape: f32[128,32], index: 12, kind: output, shape index: {}]
  %s13 = sld [smem:[#allocation0]]
  $region81: #{tpu_custom_call.1} parent=0
    _
  %s15 = ssub.s32 1, %s13
  %s16 = scalar_select 0, %s15, %s13
  loop: start=0, step=1, limit=4
  $region2: #{tpu_custom_call.1} parent=0 // loop_pre_header
    _
  $region3: #{tpu_custom_call.1} parent=0 // loop_header
    %s18 = sphi 0, %s22
    %p19 = scmp.ge.s32.totalorder %s18, 4
    %s28 = sphi 0, %s30
    %s31 = sphi 0, %s28
    %s32 = sphi 0, %s31
    %s48 = sphi 0, %s32
    %s52 = sphi 0, %s52
    %s54 = sphi 0, %s52
    %s55 = sphi 0, %s54
    %s69 = sphi 0, %s55
    %s73 = sphi 0, %s73
    %s75 = sphi 0, %s73
    %s76 = sphi 0, %s75
    %s90 = sphi 0, %s76
    %s94 = sphi 0, %s94
    %s96 = sphi 0, %s94
    %s97 = sphi 0, %s96
    %s111 = sphi 0, %s97
    %s115 = sphi 0, %s115
    %s117 = sphi 0, %s115
    %s118 = sphi 0, %s117
    %s132 = sphi 0, %s118
    %s136 = sphi 0, %s136
    %s138 = sphi 0, %s136
    %s139 = sphi 0, %s138
    %s153 = sphi 0, %s139
    %s157 = sphi 0, %s157
    %s159 = sphi 0, %s157
    %s160 = sphi 0, %s159
    %s174 = sphi 0, %s160
    %s178 = sphi 0, %s178
    %s180 = sphi 0, %s178
    %s181 = sphi 0, %s180
    %s195 = sphi 0, %s181
    %s199 = sphi 0, %s199
    %s201 = sphi 0, %s199
    %s202 = sphi 0, %s201
    %s216 = sphi 0, %s202
    %s220 = sphi 0, %s220
    %s222 = sphi 0, %s220
    %s223 = sphi 0, %s222
    %s237 = sphi 0, %s223
    %s241 = sphi 0, %s241
    %s243 = sphi 0, %s241
    %s244 = sphi 0, %s243
    %s258 = sphi 0, %s244
    %s262 = sphi 0, %s262
    %s264 = sphi 0, %s262
    %s265 = sphi 0, %s264
    %s279 = sphi 0, %s265
    %s285 = sphi 0, %s287
    %s288 = sphi 0, %s285
    %s289 = sphi 0, %s288
    %s305 = sphi 0, %s289
  $region4: #{tpu_custom_call.1} parent=0 // loop_header_branch
    %21 = sbr.rel (%p19) target = $region8
  $region5: #{tpu_custom_call.1} parent=0 // loop_body
    %s23 = ssub.s32 %s18, 1
    %s24 = ssub.s32 %s18, 2
    %s25 = sadd.s32 %s18, 1
    %s26 = ssub.s32 %s18, %s25
    %p27 = scmp.eq.s32.totalorder %s26, 0
    %s29 = sadd.s32 %s28, 1
    %s30 = scalar_select %p27, %s28, %s29
    %p33 = pneg %p27
    %p34 = scmp.eq.s32.totalorder %s18, 1
    %p35 = por %p33, %p34
    %p36 = scmp.ne.s32.totalorder %s28, %s31
    %p37 = scmp.eq.s32.totalorder %s18, 0
    %p38 = por %p36, %p37
    %p39 = scmp.ne.s32.totalorder %s28, %s31
    %p40 = scmp.eq.s32.totalorder %s23, 1
    %p41 = por %p39, %p40
    %p42 = scmp.ne.s32.totalorder %s31, %s32
    %p43 = scmp.eq.s32.totalorder %s23, 0
    %p44 = por %p42, %p43
    %p45 = scmp.ne.s32.totalorder %s31, %s32
    %p46 = scmp.eq.s32.totalorder %s24, 1
    %p47 = por %p45, %p46
    %p49 = scmp.ne.s32.totalorder %s32, %s48
    %p50 = scmp.eq.s32.totalorder %s24, 0
    %p51 = por %p49, %p50
    %s53 = sadd.s32 %s52, 1
    %p56 = scmp.eq.s32.totalorder %s18, 1
    %p57 = scmp.ne.s32.totalorder %s52, %s54
    %p58 = scmp.eq.s32.totalorder %s18, 0
    %p59 = por %p57, %p58
    %p60 = scmp.ne.s32.totalorder %s52, %s54
    %p61 = scmp.eq.s32.totalorder %s23, 1
    %p62 = por %p60, %p61
    %p63 = scmp.ne.s32.totalorder %s54, %s55
    %p64 = scmp.eq.s32.totalorder %s23, 0
    %p65 = por %p63, %p64
    %p66 = scmp.ne.s32.totalorder %s54, %s55
    %p67 = scmp.eq.s32.totalorder %s24, 1
    %p68 = por %p66, %p67
    %p70 = scmp.ne.s32.totalorder %s55, %s69
    %p71 = scmp.eq.s32.totalorder %s24, 0
    %p72 = por %p70, %p71
    %s74 = sadd.s32 %s73, 1
    %p77 = scmp.eq.s32.totalorder %s18, 1
    %p78 = scmp.ne.s32.totalorder %s73, %s75
    %p79 = scmp.eq.s32.totalorder %s18, 0
    %p80 = por %p78, %p79
    %p81 = scmp.ne.s32.totalorder %s73, %s75
    %p82 = scmp.eq.s32.totalorder %s23, 1
    %p83 = por %p81, %p82
    %p84 = scmp.ne.s32.totalorder %s75, %s76
    %p85 = scmp.eq.s32.totalorder %s23, 0
    %p86 = por %p84, %p85
    %p87 = scmp.ne.s32.totalorder %s75, %s76
    %p88 = scmp.eq.s32.totalorder %s24, 1
    %p89 = por %p87, %p88
    %p91 = scmp.ne.s32.totalorder %s76, %s90
    %p92 = scmp.eq.s32.totalorder %s24, 0
    %p93 = por %p91, %p92
    %s95 = sadd.s32 %s94, 1
    %p98 = scmp.eq.s32.totalorder %s18, 1
    %p99 = scmp.ne.s32.totalorder %s94, %s96
    %p100 = scmp.eq.s32.totalorder %s18, 0
    %p101 = por %p99, %p100
    %p102 = scmp.ne.s32.totalorder %s94, %s96
    %p103 = scmp.eq.s32.totalorder %s23, 1
    %p104 = por %p102, %p103
    %p105 = scmp.ne.s32.totalorder %s96, %s97
    %p106 = scmp.eq.s32.totalorder %s23, 0
    %p107 = por %p105, %p106
    %p108 = scmp.ne.s32.totalorder %s96, %s97
    %p109 = scmp.eq.s32.totalorder %s24, 1
    %p110 = por %p108, %p109
    %p112 = scmp.ne.s32.totalorder %s97, %s111
    %p113 = scmp.eq.s32.totalorder %s24, 0
    %p114 = por %p112, %p113
    %s116 = sadd.s32 %s115, 1
    %p119 = scmp.eq.s32.totalorder %s18, 1
    %p120 = scmp.ne.s32.totalorder %s115, %s117
    %p121 = scmp.eq.s32.totalorder %s18, 0
    %p122 = por %p120, %p121
    %p123 = scmp.ne.s32.totalorder %s115, %s117
    %p124 = scmp.eq.s32.totalorder %s23, 1
    %p125 = por %p123, %p124
    %p126 = scmp.ne.s32.totalorder %s117, %s118
    %p127 = scmp.eq.s32.totalorder %s23, 0
    %p128 = por %p126, %p127
    %p129 = scmp.ne.s32.totalorder %s117, %s118
    %p130 = scmp.eq.s32.totalorder %s24, 1
    %p131 = por %p129, %p130
    %p133 = scmp.ne.s32.totalorder %s118, %s132
    %p134 = scmp.eq.s32.totalorder %s24, 0
    %p135 = por %p133, %p134
    %s137 = sadd.s32 %s136, 1
    %p140 = scmp.eq.s32.totalorder %s18, 1
    %p141 = scmp.ne.s32.totalorder %s136, %s138
    %p142 = scmp.eq.s32.totalorder %s18, 0
    %p143 = por %p141, %p142
    %p144 = scmp.ne.s32.totalorder %s136, %s138
    %p145 = scmp.eq.s32.totalorder %s23, 1
    %p146 = por %p144, %p145
    %p147 = scmp.ne.s32.totalorder %s138, %s139
    %p148 = scmp.eq.s32.totalorder %s23, 0
    %p149 = por %p147, %p148
    %p150 = scmp.ne.s32.totalorder %s138, %s139
    %p151 = scmp.eq.s32.totalorder %s24, 1
    %p152 = por %p150, %p151
    %p154 = scmp.ne.s32.totalorder %s139, %s153
    %p155 = scmp.eq.s32.totalorder %s24, 0
    %p156 = por %p154, %p155
    %s158 = sadd.s32 %s157, 1
    %p161 = scmp.eq.s32.totalorder %s18, 1
    %p162 = scmp.ne.s32.totalorder %s157, %s159
    %p163 = scmp.eq.s32.totalorder %s18, 0
    %p164 = por %p162, %p163
    %p165 = scmp.ne.s32.totalorder %s157, %s159
    %p166 = scmp.eq.s32.totalorder %s23, 1
    %p167 = por %p165, %p166
    %p168 = scmp.ne.s32.totalorder %s159, %s160
    %p169 = scmp.eq.s32.totalorder %s23, 0
    %p170 = por %p168, %p169
    %p171 = scmp.ne.s32.totalorder %s159, %s160
    %p172 = scmp.eq.s32.totalorder %s24, 1
    %p173 = por %p171, %p172
    %p175 = scmp.ne.s32.totalorder %s160, %s174
    %p176 = scmp.eq.s32.totalorder %s24, 0
    %p177 = por %p175, %p176
    %s179 = sadd.s32 %s178, 1
    %p182 = scmp.eq.s32.totalorder %s18, 1
    %p183 = scmp.ne.s32.totalorder %s178, %s180
    %p184 = scmp.eq.s32.totalorder %s18, 0
    %p185 = por %p183, %p184
    %p186 = scmp.ne.s32.totalorder %s178, %s180
    %p187 = scmp.eq.s32.totalorder %s23, 1
    %p188 = por %p186, %p187
    %p189 = scmp.ne.s32.totalorder %s180, %s181
    %p190 = scmp.eq.s32.totalorder %s23, 0
    %p191 = por %p189, %p190
    %p192 = scmp.ne.s32.totalorder %s180, %s181
    %p193 = scmp.eq.s32.totalorder %s24, 1
    %p194 = por %p192, %p193
    %p196 = scmp.ne.s32.totalorder %s181, %s195
    %p197 = scmp.eq.s32.totalorder %s24, 0
    %p198 = por %p196, %p197
    %s200 = sadd.s32 %s199, 1
    %p203 = scmp.eq.s32.totalorder %s18, 1
    %p204 = scmp.ne.s32.totalorder %s199, %s201
    %p205 = scmp.eq.s32.totalorder %s18, 0
    %p206 = por %p204, %p205
    %p207 = scmp.ne.s32.totalorder %s199, %s201
    %p208 = scmp.eq.s32.totalorder %s23, 1
    %p209 = por %p207, %p208
    %p210 = scmp.ne.s32.totalorder %s201, %s202
    %p211 = scmp.eq.s32.totalorder %s23, 0
    %p212 = por %p210, %p211
    %p213 = scmp.ne.s32.totalorder %s201, %s202
    %p214 = scmp.eq.s32.totalorder %s24, 1
    %p215 = por %p213, %p214
    %p217 = scmp.ne.s32.totalorder %s202, %s216
    %p218 = scmp.eq.s32.totalorder %s24, 0
    %p219 = por %p217, %p218
    %s221 = sadd.s32 %s220, 1
    %p224 = scmp.eq.s32.totalorder %s18, 1
    %p225 = scmp.ne.s32.totalorder %s220, %s222
    %p226 = scmp.eq.s32.totalorder %s18, 0
    %p227 = por %p225, %p226
    %p228 = scmp.ne.s32.totalorder %s220, %s222
    %p229 = scmp.eq.s32.totalorder %s23, 1
    %p230 = por %p228, %p229
    %p231 = scmp.ne.s32.totalorder %s222, %s223
    %p232 = scmp.eq.s32.totalorder %s23, 0
    %p233 = por %p231, %p232
    %p234 = scmp.ne.s32.totalorder %s222, %s223
    %p235 = scmp.eq.s32.totalorder %s24, 1
    %p236 = por %p234, %p235
    %p238 = scmp.ne.s32.totalorder %s223, %s237
    %p239 = scmp.eq.s32.totalorder %s24, 0
    %p240 = por %p238, %p239
    %s242 = sadd.s32 %s241, 1
    %p245 = scmp.eq.s32.totalorder %s18, 1
    %p246 = scmp.ne.s32.totalorder %s241, %s243
    %p247 = scmp.eq.s32.totalorder %s18, 0
    %p248 = por %p246, %p247
    %p249 = scmp.ne.s32.totalorder %s241, %s243
    %p250 = scmp.eq.s32.totalorder %s23, 1
    %p251 = por %p249, %p250
    %p252 = scmp.ne.s32.totalorder %s243, %s244
    %p253 = scmp.eq.s32.totalorder %s23, 0
    %p254 = por %p252, %p253
    %p255 = scmp.ne.s32.totalorder %s243, %s244
    %p256 = scmp.eq.s32.totalorder %s24, 1
    %p257 = por %p255, %p256
    %p259 = scmp.ne.s32.totalorder %s244, %s258
    %p260 = scmp.eq.s32.totalorder %s24, 0
    %p261 = por %p259, %p260
    %s263 = sadd.s32 %s262, 1
    %p266 = scmp.eq.s32.totalorder %s18, 1
    %p267 = scmp.ne.s32.totalorder %s262, %s264
    %p268 = scmp.eq.s32.totalorder %s18, 0
    %p269 = por %p267, %p268
    %p270 = scmp.ne.s32.totalorder %s262, %s264
    %p271 = scmp.eq.s32.totalorder %s23, 1
    %p272 = por %p270, %p271
    %p273 = scmp.ne.s32.totalorder %s264, %s265
    %p274 = scmp.eq.s32.totalorder %s23, 0
    %p275 = por %p273, %p274
    %p276 = scmp.ne.s32.totalorder %s264, %s265
    %p277 = scmp.eq.s32.totalorder %s24, 1
    %p278 = por %p276, %p277
    %p280 = scmp.ne.s32.totalorder %s265, %s279
    %p281 = scmp.eq.s32.totalorder %s24, 0
    %p282 = por %p280, %p281
    %s283 = ssub.s32 %s18, %s25
    %p284 = scmp.eq.s32.totalorder %s283, 0
    %s286 = sadd.s32 %s285, 1
    %s287 = scalar_select %p284, %s285, %s286
    %p290 = pneg %p284
    %p291 = scmp.eq.s32.totalorder %s18, 1
    %p292 = por %p290, %p291
    %p293 = scmp.ne.s32.totalorder %s285, %s288
    %p294 = scmp.eq.s32.totalorder %s18, 0
    %p295 = por %p293, %p294
    %p296 = scmp.ne.s32.totalorder %s285, %s288
    %p297 = scmp.eq.s32.totalorder %s23, 1
    %p298 = por %p296, %p297
    %p299 = scmp.ne.s32.totalorder %s288, %s289
    %p300 = scmp.eq.s32.totalorder %s23, 0
    %p301 = por %p299, %p300
    %p302 = scmp.ne.s32.totalorder %s288, %s289
    %p303 = scmp.eq.s32.totalorder %s24, 1
    %p304 = por %p302, %p303
    %p306 = scmp.ne.s32.totalorder %s289, %s305
    %p307 = scmp.eq.s32.totalorder %s24, 0
    %p308 = por %p306, %p307
    %p309 = scmp.le.s32.totalorder 1, %s18
    %p310 = scmp.lt.s32.totalorder %s18, 3
    %p311 = pnand %p309, %p310
    %p312 = pneg %p311
    // Predicated region
    $region9: #{tpu_custom_call.1} parent=5 // pred_check
      _
    $region10: #{tpu_custom_call.1} parent=5 // pred_check_branch
      %314 = sbr.rel (%p311) target = $region12
    $region11: #{tpu_custom_call.1} parent=5 // pred_region
      %s315 = ssub.s32 %s18, 1
      // Predicated region
      $region13: #{tpu_custom_call.1} parent=11 // pred_check
        %p316 = pneg %p65
      $region14: #{tpu_custom_call.1} parent=11 // pred_check_branch
        %318 = sbr.rel (%p316) target = $region16
      $region15: #{tpu_custom_call.1} parent=11 // pred_region
        _
      $region16: #{tpu_custom_call.1} parent=11 // pred_fallthru
        _
      // Predicated region
      $region17: #{tpu_custom_call.1} parent=11 // pred_check
        %p319 = pneg %p86
      $region18: #{tpu_custom_call.1} parent=11 // pred_check_branch
        %321 = sbr.rel (%p319) target = $region20
      $region19: #{tpu_custom_call.1} parent=11 // pred_region
        _
      $region20: #{tpu_custom_call.1} parent=11 // pred_fallthru
        _
      // Predicated region
      $region21: #{tpu_custom_call.1} parent=11 // pred_check
        %p322 = pneg %p107
      $region22: #{tpu_custom_call.1} parent=11 // pred_check_branch
        %324 = sbr.rel (%p322) target = $region24
      $region23: #{tpu_custom_call.1} parent=11 // pred_region
        _
      $region24: #{tpu_custom_call.1} parent=11 // pred_fallthru
        _
      // Predicated region
      $region25: #{tpu_custom_call.1} parent=11 // pred_check
        %p325 = pneg %p128
      $region26: #{tpu_custom_call.1} parent=11 // pred_check_branch
        %327 = sbr.rel (%p325) target = $region28
      $region27: #{tpu_custom_call.1} parent=11 // pred_region
        _
      $region28: #{tpu_custom_call.1} parent=11 // pred_fallthru
        _
      // Predicated region
      $region29: #{tpu_custom_call.1} parent=11 // pred_check
        %p328 = pneg %p149
      $region30: #{tpu_custom_call.1} parent=11 // pred_check_branch
        %330 = sbr.rel (%p328) target = $region32
      $region31: #{tpu_custom_call.1} parent=11 // pred_region
        _
      $region32: #{tpu_custom_call.1} parent=11 // pred_fallthru
        _
      // Predicated region
      $region33: #{tpu_custom_call.1} parent=11 // pred_check
        %p331 = pneg %p170
      $region34: #{tpu_custom_call.1} parent=11 // pred_check_branch
        %333 = sbr.rel (%p331) target = $region36
      $region35: #{tpu_custom_call.1} parent=11 // pred_region
        _
      $region36: #{tpu_custom_call.1} parent=11 // pred_fallthru
        _
      // Predicated region
      $region37: #{tpu_custom_call.1} parent=11 // pred_check
        %p334 = pneg %p191
      $region38: #{tpu_custom_call.1} parent=11 // pred_check_branch
        %336 = sbr.rel (%p334) target = $region40
      $region39: #{tpu_custom_call.1} parent=11 // pred_region
        _
      $region40: #{tpu_custom_call.1} parent=11 // pred_fallthru
        _
      // Predicated region
      $region41: #{tpu_custom_call.1} parent=11 // pred_check
        %p337 = pneg %p212
      $region42: #{tpu_custom_call.1} parent=11 // pred_check_branch
        %339 = sbr.rel (%p337) target = $region44
      $region43: #{tpu_custom_call.1} parent=11 // pred_region
        _
      $region44: #{tpu_custom_call.1} parent=11 // pred_fallthru
        _
      // Predicated region
      $region45: #{tpu_custom_call.1} parent=11 // pred_check
        %p340 = pneg %p233
      $region46: #{tpu_custom_call.1} parent=11 // pred_check_branch
        %342 = sbr.rel (%p340) target = $region48
      $region47: #{tpu_custom_call.1} parent=11 // pred_region
        _
      $region48: #{tpu_custom_call.1} parent=11 // pred_fallthru
        _
      // Predicated region
      $region49: #{tpu_custom_call.1} parent=11 // pred_check
        %p343 = pneg %p254
      $region50: #{tpu_custom_call.1} parent=11 // pred_check_branch
        %345 = sbr.rel (%p343) target = $region52
      $region51: #{tpu_custom_call.1} parent=11 // pred_region
        _
      $region52: #{tpu_custom_call.1} parent=11 // pred_fallthru
        _
      // Predicated region
      $region53: #{tpu_custom_call.1} parent=11 // pred_check
        %p346 = pneg %p275
      $region54: #{tpu_custom_call.1} parent=11 // pred_check_branch
        %348 = sbr.rel (%p346) target = $region56
      $region55: #{tpu_custom_call.1} parent=11 // pred_region
        _
      $region56: #{tpu_custom_call.1} parent=11 // pred_fallthru
        _
    $region12: #{tpu_custom_call.1} parent=5 // pred_fallthru
      _
    %p349 = scmp.lt.s32.totalorder %s18, 2
    // Predicated region
    $region57: #{tpu_custom_call.1} parent=5 // pred_check
      %p350 = pneg %p349
    $region58: #{tpu_custom_call.1} parent=5 // pred_check_branch
      %352 = sbr.rel (%p350) target = $region60
    $region59: #{tpu_custom_call.1} parent=5 // pred_region
      // Predicated region
      $region61: #{tpu_custom_call.1} parent=59 // pred_check
        %p353 = pneg %p38
      $region62: #{tpu_custom_call.1} parent=59 // pred_check_branch
        %355 = sbr.rel (%p353) target = $region64
      $region63: #{tpu_custom_call.1} parent=59 // pred_region
        %s356 = smul.u32 8, %s18
        %p357 = scmp.lt.s32.totalorder %s356, 15
        %s358 = scalar_select %p357, %s356, 15
        %s359 = smul.addr %s358, 8
        %s360 = scalar_lea.vmem %s0, %s359
        %s361 = smul.u32 8, %s18
      $region64: #{tpu_custom_call.1} parent=59 // pred_fallthru
        _
    $region60: #{tpu_custom_call.1} parent=5 // pred_fallthru
      _
    %p362 = scmp.le.s32.totalorder 1, %s18
    %p363 = scmp.lt.s32.totalorder %s18, 3
    %p364 = pnand %p362, %p363
    %p365 = pneg %p364
    // Predicated region
    $region65: #{tpu_custom_call.1} parent=5 // pred_check
      _
    $region66: #{tpu_custom_call.1} parent=5 // pred_check_branch
      %367 = sbr.rel (%p364) target = $region68
    $region67: #{tpu_custom_call.1} parent=5 // pred_region
      %s368 = ssub.s32 %s18, 1
      %s369 = smul.u32 8, %s23
      %p370 = scmp.lt.s32.totalorder %s369, 15
      %s371 = scalar_select %p370, %s369, 15
      %s372 = smul.addr %s371, 8
      %s373 = scalar_lea.vmem %s0, %s372
      %p374 = pneg %p44
      %p375 = pneg %p41
      %p376 = pneg %p65
      %p377 = pneg %p62
      %p378 = pneg %p86
      %p379 = pneg %p83
      %p380 = pneg %p107
      %p381 = pneg %p104
      %p382 = pneg %p128
      %p383 = pneg %p125
      %p384 = pneg %p149
      %p385 = pneg %p146
      %p386 = pneg %p170
      %p387 = pneg %p167
      %p388 = pneg %p191
      %p389 = pneg %p188
      %p390 = pneg %p212
      %p391 = pneg %p209
      %p392 = pneg %p233
      %p393 = pneg %p230
      %p394 = pneg %p254
      %p395 = pneg %p251
      %p396 = pneg %p275
      %p397 = pneg %p272
      %p398 = pneg %p301
      %p399 = pneg %p298
      %s400 = smul.u32 8, %s23
      %p401 = scmp.lt.s32.totalorder %s400, 15
      %s402 = scalar_select %p401, %s400, 15
      %s403 = smul.addr %s402, 8
      %s404 = scalar_lea.vmem %s12, %s403
      %s405 = smul.u32 8, %s23
      %p406 = scmp.lt.s32.totalorder %s405, 15
      %s407 = scalar_select %p406, %s405, 15
      %s408 = smul.addr %s407, 8
      %s409 = scalar_lea.vmem %s0, %s408
      %s410 = smul.u32 8, %s23
      %s411 = smul.u32 8, %s23
      %p412 = scmp.lt.s32.totalorder %s411, 15
      %s413 = scalar_select %p412, %s411, 15
      %s414 = smul.addr %s413, 8
      %s415 = scalar_lea.vmem %s12, %s414
      %s416 = smul.u32 8, %s23
      %v418 = vld [vmem:[%s409] sm:$0xff]
      %v419 = vld [vmem:[%s409 + $0x8] sm:$0xff]
      %v420 = vld [vmem:[%s409 + $0x10] sm:$0xff]
      %v421 = vld [vmem:[%s409 + $0x18] sm:$0xff]
      %v422 = vld [vmem:[%s409 + $0x20] sm:$0xff]
      %v423 = vld [vmem:[%s409 + $0x28] sm:$0xff]
      %v424 = vld [vmem:[%s409 + $0x30] sm:$0xff]
      %v425 = vld [vmem:[%s409 + $0x38] sm:$0xff]
      %vm426 = vcmask 261120
      %v427 = vsel %vm426, %v418, 0.0
      %428 = vadd.xlane.f32.xlu0 %v427
      %v429 = vpop.xlane.xlu0 %428
      %v430 = vsel %vm426, %v419, 0.0
      %431 = vadd.xlane.f32.xlu0 %v430
      %v432 = vpop.xlane.xlu0 %431
      %v433 = vsel %vm426, %v420, 0.0
      %434 = vadd.xlane.f32.xlu0 %v433
      %v435 = vpop.xlane.xlu0 %434
      %v436 = vsel %vm426, %v421, 0.0
      %437 = vadd.xlane.f32.xlu0 %v436
      %v438 = vpop.xlane.xlu0 %437
      %v439 = vsel %vm426, %v422, 0.0
      %440 = vadd.xlane.f32.xlu0 %v439
      %v441 = vpop.xlane.xlu0 %440
      %v442 = vsel %vm426, %v423, 0.0
      %443 = vadd.xlane.f32.xlu0 %v442
      %v444 = vpop.xlane.xlu0 %443
      %v445 = vsel %vm426, %v424, 0.0
      %446 = vadd.xlane.f32.xlu0 %v445
      %v447 = vpop.xlane.xlu0 %446
      %v448 = vsel %vm426, %v425, 0.0
      %449 = vadd.xlane.f32.xlu0 %v448
      %v450 = vpop.xlane.xlu0 %449
      %v451 = vrcp.pop 32.0
      %v452 = vmul.f32 %v429, %v451
      %v453 = vmul.f32 %v432, %v451
      %v454 = vmul.f32 %v435, %v451
      %v455 = vmul.f32 %v438, %v451
      %v456 = vmul.f32 %v441, %v451
      %v457 = vmul.f32 %v444, %v451
      %v458 = vmul.f32 %v447, %v451
      %v459 = vmul.f32 %v450, %v451
      %v460 = vsub.f32 %v418, %v452
      %v461 = vsub.f32 %v419, %v453
      %v462 = vsub.f32 %v420, %v454
      %v463 = vsub.f32 %v421, %v455
      %v464 = vsub.f32 %v422, %v456
      %v465 = vsub.f32 %v423, %v457
      %v466 = vsub.f32 %v424, %v458
      %v467 = vsub.f32 %v425, %v459
      %v468 = vmul.f32 %v460, %v460
      %v469 = vmul.f32 %v461, %v461
      %v470 = vmul.f32 %v462, %v462
      %v471 = vmul.f32 %v463, %v463
      %v472 = vmul.f32 %v464, %v464
      %v473 = vmul.f32 %v465, %v465
      %v474 = vmul.f32 %v466, %v466
      %v475 = vmul.f32 %v467, %v467
      %v476 = vsel %vm426, %v468, 0.0
      %477 = vadd.xlane.f32.xlu0 %v476
      %v478 = vpop.xlane.xlu0 %477
      %v479 = vsel %vm426, %v469, 0.0
      %480 = vadd.xlane.f32.xlu0 %v479
      %v481 = vpop.xlane.xlu0 %480
      %v482 = vsel %vm426, %v470, 0.0
      %483 = vadd.xlane.f32.xlu0 %v482
      %v484 = vpop.xlane.xlu0 %483
      %v485 = vsel %vm426, %v471, 0.0
      %486 = vadd.xlane.f32.xlu0 %v485
      %v487 = vpop.xlane.xlu0 %486
      %v488 = vsel %vm426, %v472, 0.0
      %489 = vadd.xlane.f32.xlu0 %v488
      %v490 = vpop.xlane.xlu0 %489
      %v491 = vsel %vm426, %v473, 0.0
      %492 = vadd.xlane.f32.xlu0 %v491
      %v493 = vpop.xlane.xlu0 %492
      %v494 = vsel %vm426, %v474, 0.0
      %495 = vadd.xlane.f32.xlu0 %v494
      %v496 = vpop.xlane.xlu0 %495
      %v497 = vsel %vm426, %v475, 0.0
      %498 = vadd.xlane.f32.xlu0 %v497
      %v499 = vpop.xlane.xlu0 %498
      %v500 = vmul.f32 %v478, %v451
      %v501 = vmul.f32 %v481, %v451
      %v502 = vmul.f32 %v484, %v451
      %v503 = vmul.f32 %v487, %v451
      %v504 = vmul.f32 %v490, %v451
      %v505 = vmul.f32 %v493, %v451
      %v506 = vmul.f32 %v496, %v451
      %v507 = vmul.f32 %v499, %v451
      %v508 = vadd.f32 %v500, 1e-05
      %v509 = vadd.f32 %v501, 1e-05
      %v510 = vadd.f32 %v502, 1e-05
      %v511 = vadd.f32 %v503, 1e-05
      %v512 = vadd.f32 %v504, 1e-05
      %v513 = vadd.f32 %v505, 1e-05
      %v514 = vadd.f32 %v506, 1e-05
      %v515 = vadd.f32 %v507, 1e-05
      %v516 = vrsqrt.pop %v508
      %v517 = vrsqrt.pop %v509
      %v518 = vrsqrt.pop %v510
      %v519 = vrsqrt.pop %v511
      %v520 = vrsqrt.pop %v512
      %v521 = vrsqrt.pop %v513
      %v522 = vrsqrt.pop %v514
      %v523 = vrsqrt.pop %v515
      %v524 = vmul.f32 %v460, %v516
      %v525 = vmul.f32 %v461, %v517
      %v526 = vmul.f32 %v462, %v518
      %v527 = vmul.f32 %v463, %v519
      %v528 = vmul.f32 %v464, %v520
      %v529 = vmul.f32 %v465, %v521
      %v530 = vmul.f32 %v466, %v522
      %v531 = vmul.f32 %v467, %v523
      %v532 = vld [vmem:[%s1] sm:$0x1]
      %v534 = vlaneseq
      %v535 = vshrl.u32 %v534, 7
      %v536 = vsub.s32 0, %v535
      %v537 = vrot.slane %v532, %v536
      %v539 = vmul.f32 %v524, %v537
      %v540 = vmul.f32 %v525, %v537
      %v541 = vmul.f32 %v526, %v537
      %v542 = vmul.f32 %v527, %v537
      %v543 = vmul.f32 %v528, %v537
      %v544 = vmul.f32 %v529, %v537
      %v545 = vmul.f32 %v530, %v537
      %v546 = vmul.f32 %v531, %v537
      %v547 = vld [vmem:[%s2] sm:$0x1]
      %v549 = vlaneseq
      %v550 = vshrl.u32 %v549, 7
      %v551 = vsub.s32 0, %v550
      %v552 = vrot.slane %v547, %v551
      %v554 = vadd.f32 %v539, %v552
      %v555 = vadd.f32 %v540, %v552
      %v556 = vadd.f32 %v541, %v552
      %v557 = vadd.f32 %v542, %v552
      %v558 = vadd.f32 %v543, %v552
      %v559 = vadd.f32 %v544, %v552
      %v560 = vadd.f32 %v545, %v552
      %v561 = vadd.f32 %v546, %v552
      %v562 = vpack.c.bf16 %v555, %v554
      %v563 = vpack.c.bf16 %v557, %v556
      %v564 = vpack.c.bf16 %v559, %v558
      %v565 = vpack.c.bf16 %v561, %v560
      %v566 = vld [vmem:[%s3] sm:$0xf]
      %v567 = vld [vmem:[%s3 + $0x4] sm:$0xf]
      %v568 = vld [vmem:[%s3 + $0x8] sm:$0xf]
      %v569 = vld [vmem:[%s3 + $0xc] sm:$0xf]
      %v570 = vld [vmem:[%s6] sm:$0x1]
      %v572 = vlaneseq
      %v573 = vshrl.u32 %v572, 7
      %v574 = vsub.s32 0, %v573
      %v575 = vrot.slane %v570, %v574
      %v581 = vunpack.c.l.b16 %v566
      %v582 = vunpack.c.l.b16 %v567
      %v583 = vunpack.c.l.b16 %v568
      %v584 = vunpack.c.l.b16 %v569
      %v585 = vpack.c.b16 %v582, %v581
      %v586 = vpack.c.b16 %v584, %v583
      %v590 = vsel %vm426, %v562, 0
      %v593 = vsel %vm426, %v563, 0
      %v596 = vsel %vm426, %v564, 0
      %v599 = vsel %vm426, %v565, 0
      %601 = vmatprep.subr.bf16.mxu0 0
      %602 = vmatpush1.bf16.msra.mxu0 0
      %603 = vmatprep.subr.bf16.mxu0 0
      %604 = vmatpush1.bf16.msra.mxu0 0
      %605 = vmatprep.subr.bf16.mxu0 0
      %606 = vmatpush1.bf16.msra.mxu0 0
      %607 = vmatprep.subr.bf16.mxu0 0
      %608 = vmatpush1.bf16.msra.mxu0 0
      %609 = vmatprep.subr.bf16.mxu0 0
      %610 = vmatpush1.bf16.msra.mxu0 0
      %611 = vmatprep.subr.bf16.mxu0 0
      %612 = vmatpush1.bf16.msra.mxu0 0
      %613 = vmatprep.subr.bf16.mxu0 0
      %614 = vmatpush1.bf16.msra.mxu0 %v586
      %615 = vmatprep.subr.bf16.mxu0 0
      %616 = vmatpush1.bf16.msra.mxu0 %v585
      %617 = vmatprep.subr.bf16.mxu0 0
      %618 = vmatpush2.bf16.msra.mxu0 0
      %619 = vmatprep.subr.bf16.mxu0 0
      %620 = vmatpush2.bf16.msra.mxu0 0
      %621 = vmatprep.subr.bf16.mxu0 0
      %622 = vmatpush2.bf16.msra.mxu0 0
      %623 = vmatprep.subr.bf16.mxu0 0
      %624 = vmatpush2.bf16.msra.mxu0 0
      %625 = vmatprep.subr.bf16.mxu0 0
      %626 = vmatpush2.bf16.msra.mxu0 0
      %627 = vmatprep.subr.bf16.mxu0 0
      %628 = vmatpush2.bf16.msra.mxu0 0
      %629 = vmatprep.subr.bf16.mxu0 0
      %630 = vmatpush2.bf16.msra.mxu0 0
      %631 = vmatprep.subr.bf16.mxu0 0
      %632 = vmatpush2.bf16.msra.mxu0 0
      %633 = vmatprep.mubr.bf16.mxu0 0
      %634 = vmatmul.mubr.bf16.gmra.mxu0 %v590
      %v635 = vpop.f32.mrf.mxu0
      %v636 = vadd.f32 %v575, %v635
      %v637 = vpop.f32.mrf.mxu0
      %v638 = vpop.f32.mrf.mxu0
      %v639 = vadd.f32 %v575, %v638
      %v640 = vpop.f32.mrf.mxu0
      %641 = vmatprep.mubr.bf16.mxu0 0
      %642 = vmatmul.mubr.bf16.gmra.mxu0 %v593
      %v643 = vpop.f32.mrf.mxu0
      %v644 = vadd.f32 %v575, %v643
      %v645 = vpop.f32.mrf.mxu0
      %v646 = vpop.f32.mrf.mxu0
      %v647 = vadd.f32 %v575, %v646
      %v648 = vpop.f32.mrf.mxu0
      %649 = vmatprep.mubr.bf16.mxu0 0
      %650 = vmatmul.mubr.bf16.gmra.mxu0 %v596
      %v651 = vpop.f32.mrf.mxu0
      %v652 = vadd.f32 %v575, %v651
      %v653 = vpop.f32.mrf.mxu0
      %v654 = vpop.f32.mrf.mxu0
      %v655 = vadd.f32 %v575, %v654
      %v656 = vpop.f32.mrf.mxu0
      %657 = vmatprep.mubr.bf16.mxu0 0
      %658 = vmatmul.mubr.bf16.gmra.mxu0 %v599
      %v659 = vpop.f32.mrf.mxu0
      %v660 = vadd.f32 %v575, %v659
      %v661 = vpop.f32.mrf.mxu0
      %v662 = vpop.f32.mrf.mxu0
      %v663 = vadd.f32 %v575, %v662
      %v664 = vpop.f32.mrf.mxu0
      %665 = vdwg.mxu0
      %v666 = vpack.c.bf16 %v639, %v636
      %v667 = vpack.c.bf16 %v647, %v644
      %v668 = vpack.c.bf16 %v655, %v652
      %v669 = vpack.c.bf16 %v663, %v660
      %v670 = vld [vmem:[%s4] sm:$0xf]
      %v671 = vld [vmem:[%s4 + $0x4] sm:$0xf]
      %v672 = vld [vmem:[%s4 + $0x8] sm:$0xf]
      %v673 = vld [vmem:[%s4 + $0xc] sm:$0xf]
      %v674 = vld [vmem:[%s7] sm:$0x1]
      %v676 = vlaneseq
      %v677 = vshrl.u32 %v676, 7
      %v678 = vsub.s32 0, %v677
      %v679 = vrot.slane %v674, %v678
      %v685 = vunpack.c.l.b16 %v670
      %v686 = vunpack.c.l.b16 %v671
      %v687 = vunpack.c.l.b16 %v672
      %v688 = vunpack.c.l.b16 %v673
      %v689 = vpack.c.b16 %v686, %v685
      %v690 = vpack.c.b16 %v688, %v687
      %693 = vmatprep.subr.bf16.mxu0 0
      %694 = vmatpush1.bf16.msra.mxu0 0
      %695 = vmatprep.subr.bf16.mxu0 0
      %696 = vmatpush1.bf16.msra.mxu0 0
      %697 = vmatprep.subr.bf16.mxu0 0
      %698 = vmatpush1.bf16.msra.mxu0 0
      %699 = vmatprep.subr.bf16.mxu0 0
      %700 = vmatpush1.bf16.msra.mxu0 0
      %701 = vmatprep.subr.bf16.mxu0 0
      %702 = vmatpush1.bf16.msra.mxu0 0
      %703 = vmatprep.subr.bf16.mxu0 0
      %704 = vmatpush1.bf16.msra.mxu0 0
      %705 = vmatprep.subr.bf16.mxu0 0
      %706 = vmatpush1.bf16.msra.mxu0 %v690
      %707 = vmatprep.subr.bf16.mxu0 0
      %708 = vmatpush1.bf16.msra.mxu0 %v689
      %709 = vmatprep.subr.bf16.mxu0 0
      %710 = vmatpush2.bf16.msra.mxu0 0
      %711 = vmatprep.subr.bf16.mxu0 0
      %712 = vmatpush2.bf16.msra.mxu0 0
      %713 = vmatprep.subr.bf16.mxu0 0
      %714 = vmatpush2.bf16.msra.mxu0 0
      %715 = vmatprep.subr.bf16.mxu0 0
      %716 = vmatpush2.bf16.msra.mxu0 0
      %717 = vmatprep.subr.bf16.mxu0 0
      %718 = vmatpush2.bf16.msra.mxu0 0
      %719 = vmatprep.subr.bf16.mxu0 0
      %720 = vmatpush2.bf16.msra.mxu0 0
      %721 = vmatprep.subr.bf16.mxu0 0
      %722 = vmatpush2.bf16.msra.mxu0 0
      %723 = vmatprep.subr.bf16.mxu0 0
      %724 = vmatpush2.bf16.msra.mxu0 0
      %725 = vmatprep.mubr.bf16.mxu0 0
      %726 = vmatmul.mubr.bf16.gmra.mxu0 %v590
      %v727 = vpop.f32.mrf.mxu0
      %v728 = vadd.f32 %v679, %v727
      %v729 = vpop.f32.mrf.mxu0
      %v730 = vpop.f32.mrf.mxu0
      %v731 = vadd.f32 %v679, %v730
      %v732 = vpop.f32.mrf.mxu0
      %733 = vmatprep.mubr.bf16.mxu0 0
      %734 = vmatmul.mubr.bf16.gmra.mxu0 %v593
      %v735 = vpop.f32.mrf.mxu0
      %v736 = vadd.f32 %v679, %v735
      %v737 = vpop.f32.mrf.mxu0
      %v738 = vpop.f32.mrf.mxu0
      %v739 = vadd.f32 %v679, %v738
      %v740 = vpop.f32.mrf.mxu0
      %741 = vmatprep.mubr.bf16.mxu0 0
      %742 = vmatmul.mubr.bf16.gmra.mxu0 %v596
      %v743 = vpop.f32.mrf.mxu0
      %v744 = vadd.f32 %v679, %v743
      %v745 = vpop.f32.mrf.mxu0
      %v746 = vpop.f32.mrf.mxu0
      %v747 = vadd.f32 %v679, %v746
      %v748 = vpop.f32.mrf.mxu0
      %749 = vmatprep.mubr.bf16.mxu0 0
      %750 = vmatmul.mubr.bf16.gmra.mxu0 %v599
      %v751 = vpop.f32.mrf.mxu0
      %v752 = vadd.f32 %v679, %v751
      %v753 = vpop.f32.mrf.mxu0
      %v754 = vpop.f32.mrf.mxu0
      %v755 = vadd.f32 %v679, %v754
      %v756 = vpop.f32.mrf.mxu0
      %757 = vdwg.mxu0
      %v758 = vpack.c.bf16 %v731, %v728
      %v759 = vpack.c.bf16 %v739, %v736
      %v760 = vpack.c.bf16 %v747, %v744
      %v761 = vpack.c.bf16 %v755, %v752
      %v762 = vld [vmem:[%s5] sm:$0xf]
      %v763 = vld [vmem:[%s5 + $0x4] sm:$0xf]
      %v764 = vld [vmem:[%s5 + $0x8] sm:$0xf]
      %v765 = vld [vmem:[%s5 + $0xc] sm:$0xf]
      %v766 = vld [vmem:[%s8] sm:$0x1]
      %v768 = vlaneseq
      %v769 = vshrl.u32 %v768, 7
      %v770 = vsub.s32 0, %v769
      %v771 = vrot.slane %v766, %v770
      %v777 = vunpack.c.l.b16 %v762
      %v778 = vunpack.c.l.b16 %v763
      %v779 = vunpack.c.l.b16 %v764
      %v780 = vunpack.c.l.b16 %v765
      %v781 = vpack.c.b16 %v778, %v777
      %v782 = vpack.c.b16 %v780, %v779
      %785 = vmatprep.subr.bf16.mxu0 0
      %786 = vmatpush1.bf16.msra.mxu0 0
      %787 = vmatprep.subr.bf16.mxu0 0
      %788 = vmatpush1.bf16.msra.mxu0 0
      %789 = vmatprep.subr.bf16.mxu0 0
      %790 = vmatpush1.bf16.msra.mxu0 0
      %791 = vmatprep.subr.bf16.mxu0 0
      %792 = vmatpush1.bf16.msra.mxu0 0
      %793 = vmatprep.subr.bf16.mxu0 0
      %794 = vmatpush1.bf16.msra.mxu0 0
      %795 = vmatprep.subr.bf16.mxu0 0
      %796 = vmatpush1.bf16.msra.mxu0 0
      %797 = vmatprep.subr.bf16.mxu0 0
      %798 = vmatpush1.bf16.msra.mxu0 %v782
      %799 = vmatprep.subr.bf16.mxu0 0
      %800 = vmatpush1.bf16.msra.mxu0 %v781
      %801 = vmatprep.subr.bf16.mxu0 0
      %802 = vmatpush2.bf16.msra.mxu0 0
      %803 = vmatprep.subr.bf16.mxu0 0
      %804 = vmatpush2.bf16.msra.mxu0 0
      %805 = vmatprep.subr.bf16.mxu0 0
      %806 = vmatpush2.bf16.msra.mxu0 0
      %807 = vmatprep.subr.bf16.mxu0 0
      %808 = vmatpush2.bf16.msra.mxu0 0
      %809 = vmatprep.subr.bf16.mxu0 0
      %810 = vmatpush2.bf16.msra.mxu0 0
      %811 = vmatprep.subr.bf16.mxu0 0
      %812 = vmatpush2.bf16.msra.mxu0 0
      %813 = vmatprep.subr.bf16.mxu0 0
      %814 = vmatpush2.bf16.msra.mxu0 0
      %815 = vmatprep.subr.bf16.mxu0 0
      %816 = vmatpush2.bf16.msra.mxu0 0
      %817 = vmatprep.mubr.bf16.mxu0 0
      %818 = vmatmul.mubr.bf16.gmra.mxu0 %v590
      %v819 = vpop.f32.mrf.mxu0
      %v820 = vadd.f32 %v771, %v819
      %v821 = vpop.f32.mrf.mxu0
      %v822 = vpop.f32.mrf.mxu0
      %v823 = vadd.f32 %v771, %v822
      %v824 = vpop.f32.mrf.mxu0
      %825 = vmatprep.mubr.bf16.mxu0 0
      %826 = vmatmul.mubr.bf16.gmra.mxu0 %v593
      %v827 = vpop.f32.mrf.mxu0
      %v828 = vadd.f32 %v771, %v827
      %v829 = vpop.f32.mrf.mxu0
      %v830 = vpop.f32.mrf.mxu0
      %v831 = vadd.f32 %v771, %v830
      %v832 = vpop.f32.mrf.mxu0
      %833 = vmatprep.mubr.bf16.mxu0 0
      %834 = vmatmul.mubr.bf16.gmra.mxu0 %v596
      %v835 = vpop.f32.mrf.mxu0
      %v836 = vadd.f32 %v771, %v835
      %v837 = vpop.f32.mrf.mxu0
      %v838 = vpop.f32.mrf.mxu0
      %v839 = vadd.f32 %v771, %v838
      %v840 = vpop.f32.mrf.mxu0
      %841 = vmatprep.mubr.bf16.mxu0 0
      %842 = vmatmul.mubr.bf16.gmra.mxu0 %v599
      %v843 = vpop.f32.mrf.mxu0
      %v844 = vadd.f32 %v771, %v843
      %v845 = vpop.f32.mrf.mxu0
      %v846 = vpop.f32.mrf.mxu0
      %v847 = vadd.f32 %v771, %v846
      %v848 = vpop.f32.mrf.mxu0
      %849 = vdwg.mxu0
      %v850 = vpack.c.bf16 %v823, %v820
      %v851 = vpack.c.bf16 %v831, %v828
      %v852 = vpack.c.bf16 %v839, %v836
      %v853 = vpack.c.bf16 %v847, %v844
      %v854 = vld [vmem:[%s11] sm:$0xff]
      %v855 = vld [vmem:[%s11 + $0x8] sm:$0xff]
      %v856 = vld [vmem:[%s11 + $0x10] sm:$0xff]
      %v857 = vld [vmem:[%s11 + $0x18] sm:$0xff]
      %v858 = vld [vmem:[%s11 + $0x20] sm:$0xff]
      %v859 = vld [vmem:[%s11 + $0x28] sm:$0xff]
      %v860 = vld [vmem:[%s11 + $0x30] sm:$0xff]
      %v861 = vld [vmem:[%s11 + $0x38] sm:$0xff]
      %vm862 = vcmask 64512
      %v864 = vsel %vm862, %v666, 0
      %v867 = vsel %vm862, %v758, 0
      %869 = vmatprep.subr.bf16.mxu0 0
      %870 = vmatpush1.bf16.xpose.msra.mxu0 0
      %871 = vmatprep.subr.bf16.mxu0 0
      %872 = vmatpush1.bf16.xpose.msra.mxu0 0
      %873 = vmatprep.subr.bf16.mxu0 0
      %874 = vmatpush1.bf16.xpose.msra.mxu0 0
      %875 = vmatprep.subr.bf16.mxu0 0
      %876 = vmatpush1.bf16.xpose.msra.mxu0 0
      %877 = vmatprep.subr.bf16.mxu0 0
      %878 = vmatpush1.bf16.xpose.msra.mxu0 0
      %879 = vmatprep.subr.bf16.mxu0 0
      %880 = vmatpush1.bf16.xpose.msra.mxu0 0
      %881 = vmatprep.subr.bf16.mxu0 0
      %882 = vmatpush1.bf16.xpose.msra.mxu0 0
      %883 = vmatprep.subr.bf16.mxu0 0
      %884 = vmatpush1.bf16.xpose.msra.mxu0 %v867
      %885 = vmatprep.subr.bf16.mxu0 0
      %886 = vmatpush2.bf16.xpose.msra.mxu0 0
      %887 = vmatprep.subr.bf16.mxu0 0
      %888 = vmatpush2.bf16.xpose.msra.mxu0 0
      %889 = vmatprep.subr.bf16.mxu0 0
      %890 = vmatpush2.bf16.xpose.msra.mxu0 0
      %891 = vmatprep.subr.bf16.mxu0 0
      %892 = vmatpush2.bf16.xpose.msra.mxu0 0
      %893 = vmatprep.subr.bf16.mxu0 0
      %894 = vmatpush2.bf16.xpose.msra.mxu0 0
      %895 = vmatprep.subr.bf16.mxu0 0
      %896 = vmatpush2.bf16.xpose.msra.mxu0 0
      %897 = vmatprep.subr.bf16.mxu0 0
      %898 = vmatpush2.bf16.xpose.msra.mxu0 0
      %899 = vmatprep.subr.bf16.mxu0 0
      %900 = vmatpush2.bf16.xpose.msra.mxu0 0
      %901 = vmatprep.mubr.bf16.mxu0 0
      %902 = vmatmul.mubr.bf16.gmra.mxu0 %v864
      %v903 = vpop.f32.mrf.mxu0
      %v904 = vadd.f32 %v854, %v903
      %v905 = vpop.f32.mrf.mxu0
      %v906 = vpop.f32.mrf.mxu0
      %v907 = vadd.f32 %v855, %v906
      %v908 = vpop.f32.mrf.mxu0
      %909 = vdwg.mxu0
      %v911 = vsel %vm862, %v667, 0
      %v914 = vsel %vm862, %v759, 0
      %916 = vmatprep.subr.bf16.mxu0 0
      %917 = vmatpush1.bf16.xpose.msra.mxu0 0
      %918 = vmatprep.subr.bf16.mxu0 0
      %919 = vmatpush1.bf16.xpose.msra.mxu0 0
      %920 = vmatprep.subr.bf16.mxu0 0
      %921 = vmatpush1.bf16.xpose.msra.mxu0 0
      %922 = vmatprep.subr.bf16.mxu0 0
      %923 = vmatpush1.bf16.xpose.msra.mxu0 0
      %924 = vmatprep.subr.bf16.mxu0 0
      %925 = vmatpush1.bf16.xpose.msra.mxu0 0
      %926 = vmatprep.subr.bf16.mxu0 0
      %927 = vmatpush1.bf16.xpose.msra.mxu0 0
      %928 = vmatprep.subr.bf16.mxu0 0
      %929 = vmatpush1.bf16.xpose.msra.mxu0 0
      %930 = vmatprep.subr.bf16.mxu0 0
      %931 = vmatpush1.bf16.xpose.msra.mxu0 %v914
      %932 = vmatprep.subr.bf16.mxu0 0
      %933 = vmatpush2.bf16.xpose.msra.mxu0 0
      %934 = vmatprep.subr.bf16.mxu0 0
      %935 = vmatpush2.bf16.xpose.msra.mxu0 0
      %936 = vmatprep.subr.bf16.mxu0 0
      %937 = vmatpush2.bf16.xpose.msra.mxu0 0
      %938 = vmatprep.subr.bf16.mxu0 0
      %939 = vmatpush2.bf16.xpose.msra.mxu0 0
      %940 = vmatprep.subr.bf16.mxu0 0
      %941 = vmatpush2.bf16.xpose.msra.mxu0 0
      %942 = vmatprep.subr.bf16.mxu0 0
      %943 = vmatpush2.bf16.xpose.msra.mxu0 0
      %944 = vmatprep.subr.bf16.mxu0 0
      %945 = vmatpush2.bf16.xpose.msra.mxu0 0
      %946 = vmatprep.subr.bf16.mxu0 0
      %947 = vmatpush2.bf16.xpose.msra.mxu0 0
      %948 = vmatprep.mubr.bf16.mxu0 0
      %949 = vmatmul.mubr.bf16.gmra.mxu0 %v911
      %v950 = vpop.f32.mrf.mxu0
      %v951 = vadd.f32 %v854, %v950
      %v952 = vpop.f32.mrf.mxu0
      %v953 = vpop.f32.mrf.mxu0
      %v954 = vadd.f32 %v855, %v953
      %v955 = vpop.f32.mrf.mxu0
      %956 = vdwg.mxu0
      %v958 = vsel %vm862, %v668, 0
      %v961 = vsel %vm862, %v760, 0
      %963 = vmatprep.subr.bf16.mxu0 0
      %964 = vmatpush1.bf16.xpose.msra.mxu0 0
      %965 = vmatprep.subr.bf16.mxu0 0
      %966 = vmatpush1.bf16.xpose.msra.mxu0 0
      %967 = vmatprep.subr.bf16.mxu0 0
      %968 = vmatpush1.bf16.xpose.msra.mxu0 0
      %969 = vmatprep.subr.bf16.mxu0 0
      %970 = vmatpush1.bf16.xpose.msra.mxu0 0
      %971 = vmatprep.subr.bf16.mxu0 0
      %972 = vmatpush1.bf16.xpose.msra.mxu0 0
      %973 = vmatprep.subr.bf16.mxu0 0
      %974 = vmatpush1.bf16.xpose.msra.mxu0 0
      %975 = vmatprep.subr.bf16.mxu0 0
      %976 = vmatpush1.bf16.xpose.msra.mxu0 0
      %977 = vmatprep.subr.bf16.mxu0 0
      %978 = vmatpush1.bf16.xpose.msra.mxu0 %v961
      %979 = vmatprep.subr.bf16.mxu0 0
      %980 = vmatpush2.bf16.xpose.msra.mxu0 0
      %981 = vmatprep.subr.bf16.mxu0 0
      %982 = vmatpush2.bf16.xpose.msra.mxu0 0
      %983 = vmatprep.subr.bf16.mxu0 0
      %984 = vmatpush2.bf16.xpose.msra.mxu0 0
      %985 = vmatprep.subr.bf16.mxu0 0
      %986 = vmatpush2.bf16.xpose.msra.mxu0 0
      %987 = vmatprep.subr.bf16.mxu0 0
      %988 = vmatpush2.bf16.xpose.msra.mxu0 0
      %989 = vmatprep.subr.bf16.mxu0 0
      %990 = vmatpush2.bf16.xpose.msra.mxu0 0
      %991 = vmatprep.subr.bf16.mxu0 0
      %992 = vmatpush2.bf16.xpose.msra.mxu0 0
      %993 = vmatprep.subr.bf16.mxu0 0
      %994 = vmatpush2.bf16.xpose.msra.mxu0 0
      %995 = vmatprep.mubr.bf16.mxu0 0
      %996 = vmatmul.mubr.bf16.gmra.mxu0 %v958
      %v997 = vpop.f32.mrf.mxu0
      %v998 = vadd.f32 %v854, %v997
      %v999 = vpop.f32.mrf.mxu0
      %v1000 = vpop.f32.mrf.mxu0
      %v1001 = vadd.f32 %v855, %v1000
      %v1002 = vpop.f32.mrf.mxu0
      %1003 = vdwg.mxu0
      %v1005 = vsel %vm862, %v669, 0
      %v1008 = vsel %vm862, %v761, 0
      %1010 = vmatprep.subr.bf16.mxu0 0
      %1011 = vmatpush1.bf16.xpose.msra.mxu0 0
      %1012 = vmatprep.subr.bf16.mxu0 0
      %1013 = vmatpush1.bf16.xpose.msra.mxu0 0
      %1014 = vmatprep.subr.bf16.mxu0 0
      %1015 = vmatpush1.bf16.xpose.msra.mxu0 0
      %1016 = vmatprep.subr.bf16.mxu0 0
      %1017 = vmatpush1.bf16.xpose.msra.mxu0 0
      %1018 = vmatprep.subr.bf16.mxu0 0
      %1019 = vmatpush1.bf16.xpose.msra.mxu0 0
      %1020 = vmatprep.subr.bf16.mxu0 0
      %1021 = vmatpush1.bf16.xpose.msra.mxu0 0
      %1022 = vmatprep.subr.bf16.mxu0 0
      %1023 = vmatpush1.bf16.xpose.msra.mxu0 0
      %1024 = vmatprep.subr.bf16.mxu0 0
      %1025 = vmatpush1.bf16.xpose.msra.mxu0 %v1008
      %1026 = vmatprep.subr.bf16.mxu0 0
      %1027 = vmatpush2.bf16.xpose.msra.mxu0 0
      %1028 = vmatprep.subr.bf16.mxu0 0
      %1029 = vmatpush2.bf16.xpose.msra.mxu0 0
      %1030 = vmatprep.subr.bf16.mxu0 0
      %1031 = vmatpush2.bf16.xpose.msra.mxu0 0
      %1032 = vmatprep.subr.bf16.mxu0 0
      %1033 = vmatpush2.bf16.xpose.msra.mxu0 0
      %1034 = vmatprep.subr.bf16.mxu0 0
      %1035 = vmatpush2.bf16.xpose.msra.mxu0 0
      %1036 = vmatprep.subr.bf16.mxu0 0
      %1037 = vmatpush2.bf16.xpose.msra.mxu0 0
      %1038 = vmatprep.subr.bf16.mxu0 0
      %1039 = vmatpush2.bf16.xpose.msra.mxu0 0
      %1040 = vmatprep.subr.bf16.mxu0 0
      %1041 = vmatpush2.bf16.xpose.msra.mxu0 0
      %1042 = vmatprep.mubr.bf16.mxu0 0
      %1043 = vmatmul.mubr.bf16.gmra.mxu0 %v1005
      %v1044 = vpop.f32.mrf.mxu0
      %v1045 = vadd.f32 %v854, %v1044
      %v1046 = vpop.f32.mrf.mxu0
      %v1047 = vpop.f32.mrf.mxu0
      %v1048 = vadd.f32 %v855, %v1047
      %v1049 = vpop.f32.mrf.mxu0
      %1050 = vdwg.mxu0
      %vm1051 = vcmask 130048
      %v1052 = vsel %vm1051, %v904, -inf
      %1053 = vmax.xlane.f32.xlu0 %v1052
      %v1054 = vpop.xlane.xlu0 %1053
      %v1055 = vsel %vm1051, %v907, -inf
      %1056 = vmax.xlane.f32.xlu0 %v1055
      %v1057 = vpop.xlane.xlu0 %1056
      %v1058 = vsel %vm1051, %v951, -inf
      %1059 = vmax.xlane.f32.xlu0 %v1058
      %v1060 = vpop.xlane.xlu0 %1059
      %v1061 = vsel %vm1051, %v954, -inf
      %1062 = vmax.xlane.f32.xlu0 %v1061
      %v1063 = vpop.xlane.xlu0 %1062
      %v1064 = vsel %vm1051, %v998, -inf
      %1065 = vmax.xlane.f32.xlu0 %v1064
      %v1066 = vpop.xlane.xlu0 %1065
      %v1067 = vsel %vm1051, %v1001, -inf
      %1068 = vmax.xlane.f32.xlu0 %v1067
      %v1069 = vpop.xlane.xlu0 %1068
      %v1070 = vsel %vm1051, %v1045, -inf
      %1071 = vmax.xlane.f32.xlu0 %v1070
      %v1072 = vpop.xlane.xlu0 %1071
      %v1073 = vsel %vm1051, %v1048, -inf
      %1074 = vmax.xlane.f32.xlu0 %v1073
      %v1075 = vpop.xlane.xlu0 %1074
      %v1076 = vsub.f32 %v904, %v1054
      %v1077 = vsub.f32 %v907, %v1057
      %v1078 = vsub.f32 %v951, %v1060
      %v1079 = vsub.f32 %v954, %v1063
      %v1080 = vsub.f32 %v998, %v1066
      %v1081 = vsub.f32 %v1001, %v1069
      %v1082 = vsub.f32 %v1045, %v1072
      %v1083 = vsub.f32 %v1048, %v1075
      %v1084 = vmul.f32 %v1076, 1.442695
      %v1085 = vpow.pop %v1084
      %v1086 = vmul.f32 %v1077, 1.442695
      %v1087 = vpow.pop %v1086
      %v1088 = vmul.f32 %v1078, 1.442695
      %v1089 = vpow.pop %v1088
      %v1090 = vmul.f32 %v1079, 1.442695
      %v1091 = vpow.pop %v1090
      %v1092 = vmul.f32 %v1080, 1.442695
      %v1093 = vpow.pop %v1092
      %v1094 = vmul.f32 %v1081, 1.442695
      %v1095 = vpow.pop %v1094
      %v1096 = vmul.f32 %v1082, 1.442695
      %v1097 = vpow.pop %v1096
      %v1098 = vmul.f32 %v1083, 1.442695
      %v1099 = vpow.pop %v1098
      %v1100 = vsel %vm1051, %v1085, 0.0
      %1101 = vadd.xlane.f32.xlu0 %v1100
      %v1102 = vpop.xlane.xlu0 %1101
      %v1103 = vsel %vm1051, %v1087, 0.0
      %1104 = vadd.xlane.f32.xlu0 %v1103
      %v1105 = vpop.xlane.xlu0 %1104
      %v1106 = vsel %vm1051, %v1089, 0.0
      %1107 = vadd.xlane.f32.xlu0 %v1106
      %v1108 = vpop.xlane.xlu0 %1107
      %v1109 = vsel %vm1051, %v1091, 0.0
      %1110 = vadd.xlane.f32.xlu0 %v1109
      %v1111 = vpop.xlane.xlu0 %1110
      %v1112 = vsel %vm1051, %v1093, 0.0
      %1113 = vadd.xlane.f32.xlu0 %v1112
      %v1114 = vpop.xlane.xlu0 %1113
      %v1115 = vsel %vm1051, %v1095, 0.0
      %1116 = vadd.xlane.f32.xlu0 %v1115
      %v1117 = vpop.xlane.xlu0 %1116
      %v1118 = vsel %vm1051, %v1097, 0.0
      %1119 = vadd.xlane.f32.xlu0 %v1118
      %v1120 = vpop.xlane.xlu0 %1119
      %v1121 = vsel %vm1051, %v1099, 0.0
      %1122 = vadd.xlane.f32.xlu0 %v1121
      %v1123 = vpop.xlane.xlu0 %1122
      %v1124 = vrcp.pop %v1102
      %v1125 = vrcp.pop %v1105
      %v1126 = vrcp.pop %v1108
      %v1127 = vrcp.pop %v1111
      %v1128 = vrcp.pop %v1114
      %v1129 = vrcp.pop %v1117
      %v1130 = vrcp.pop %v1120
      %v1131 = vrcp.pop %v1123
      %v1132 = vmul.f32 %v1085, %v1124
      %v1133 = vmul.f32 %v1087, %v1125
      %v1134 = vmul.f32 %v1089, %v1126
      %v1135 = vmul.f32 %v1091, %v1127
      %v1136 = vmul.f32 %v1093, %v1128
      %v1137 = vmul.f32 %v1095, %v1129
      %v1138 = vmul.f32 %v1097, %v1130
      %v1139 = vmul.f32 %v1099, %v1131
      %v1140 = vpack.c.bf16 %v1133, %v1132
      %v1141 = vpack.c.bf16 %v1135, %v1134
      %v1142 = vpack.c.bf16 %v1137, %v1136
      %v1143 = vpack.c.bf16 %v1139, %v1138
      %v1145 = vsel %vm1051, %v1140, 0
      %1147 = vmatprep.subr.bf16.mxu0 0
      %1148 = vmatpush1.bf16.msra.mxu0 0
      %1149 = vmatprep.subr.bf16.mxu0 0
      %1150 = vmatpush1.bf16.msra.mxu0 0
      %1151 = vmatprep.subr.bf16.mxu0 0
      %1152 = vmatpush1.bf16.msra.mxu0 0
      %1153 = vmatprep.subr.bf16.mxu0 0
      %1154 = vmatpush1.bf16.msra.mxu0 0
      %1155 = vmatprep.subr.bf16.mxu0 0
      %1156 = vmatpush1.bf16.msra.mxu0 0
      %1157 = vmatprep.subr.bf16.mxu0 0
      %1158 = vmatpush1.bf16.msra.mxu0 0
      %1159 = vmatprep.subr.bf16.mxu0 0
      %1160 = vmatpush1.bf16.msra.mxu0 0
      %1161 = vmatprep.subr.bf16.mxu0 0
      %1162 = vmatpush1.bf16.msra.mxu0 %v850
      %1163 = vmatprep.subr.bf16.mxu0 0
      %1164 = vmatpush2.bf16.msra.mxu0 0
      %1165 = vmatprep.subr.bf16.mxu0 0
      %1166 = vmatpush2.bf16.msra.mxu0 0
      %1167 = vmatprep.subr.bf16.mxu0 0
      %1168 = vmatpush2.bf16.msra.mxu0 0
      %1169 = vmatprep.subr.bf16.mxu0 0
      %1170 = vmatpush2.bf16.msra.mxu0 0
      %1171 = vmatprep.subr.bf16.mxu0 0
      %1172 = vmatpush2.bf16.msra.mxu0 0
      %1173 = vmatprep.subr.bf16.mxu0 0
      %1174 = vmatpush2.bf16.msra.mxu0 0
      %1175 = vmatprep.subr.bf16.mxu0 0
      %1176 = vmatpush2.bf16.msra.mxu0 0
      %1177 = vmatprep.subr.bf16.mxu0 0
      %1178 = vmatpush2.bf16.msra.mxu0 0
      %1179 = vmatprep.mubr.bf16.mxu0 0
      %1180 = vmatmul.mubr.bf16.gmra.mxu0 %v1145
      %v1181 = vpop.f32.mrf.mxu0
      %v1182 = vadd.f32 0.0, %v1181
      %v1183 = vpop.f32.mrf.mxu0
      %v1184 = vpop.f32.mrf.mxu0
      %v1185 = vadd.f32 0.0, %v1184
      %v1186 = vpop.f32.mrf.mxu0
      %1187 = vdwg.mxu0
      %v1189 = vsel %vm1051, %v1141, 0
      %1191 = vmatprep.subr.bf16.mxu0 0
      %1192 = vmatpush1.bf16.msra.mxu0 0
      %1193 = vmatprep.subr.bf16.mxu0 0
      %1194 = vmatpush1.bf16.msra.mxu0 0
      %1195 = vmatprep.subr.bf16.mxu0 0
      %1196 = vmatpush1.bf16.msra.mxu0 0
      %1197 = vmatprep.subr.bf16.mxu0 0
      %1198 = vmatpush1.bf16.msra.mxu0 0
      %1199 = vmatprep.subr.bf16.mxu0 0
      %1200 = vmatpush1.bf16.msra.mxu0 0
      %1201 = vmatprep.subr.bf16.mxu0 0
      %1202 = vmatpush1.bf16.msra.mxu0 0
      %1203 = vmatprep.subr.bf16.mxu0 0
      %1204 = vmatpush1.bf16.msra.mxu0 0
      %1205 = vmatprep.subr.bf16.mxu0 0
      %1206 = vmatpush1.bf16.msra.mxu0 %v851
      %1207 = vmatprep.subr.bf16.mxu0 0
      %1208 = vmatpush2.bf16.msra.mxu0 0
      %1209 = vmatprep.subr.bf16.mxu0 0
      %1210 = vmatpush2.bf16.msra.mxu0 0
      %1211 = vmatprep.subr.bf16.mxu0 0
      %1212 = vmatpush2.bf16.msra.mxu0 0
      %1213 = vmatprep.subr.bf16.mxu0 0
      %1214 = vmatpush2.bf16.msra.mxu0 0
      %1215 = vmatprep.subr.bf16.mxu0 0
      %1216 = vmatpush2.bf16.msra.mxu0 0
      %1217 = vmatprep.subr.bf16.mxu0 0
      %1218 = vmatpush2.bf16.msra.mxu0 0
      %1219 = vmatprep.subr.bf16.mxu0 0
      %1220 = vmatpush2.bf16.msra.mxu0 0
      %1221 = vmatprep.subr.bf16.mxu0 0
      %1222 = vmatpush2.bf16.msra.mxu0 0
      %1223 = vmatprep.mubr.bf16.mxu0 0
      %1224 = vmatmul.mubr.bf16.gmra.mxu0 %v1189
      %v1225 = vpop.f32.mrf.mxu0
      %v1226 = vadd.f32 0.0, %v1225
      %v1227 = vpop.f32.mrf.mxu0
      %v1228 = vpop.f32.mrf.mxu0
      %v1229 = vadd.f32 0.0, %v1228
      %v1230 = vpop.f32.mrf.mxu0
      %1231 = vdwg.mxu0
      %v1233 = vsel %vm1051, %v1142, 0
      %1235 = vmatprep.subr.bf16.mxu0 0
      %1236 = vmatpush1.bf16.msra.mxu0 0
      %1237 = vmatprep.subr.bf16.mxu0 0
      %1238 = vmatpush1.bf16.msra.mxu0 0
      %1239 = vmatprep.subr.bf16.mxu0 0
      %1240 = vmatpush1.bf16.msra.mxu0 0
      %1241 = vmatprep.subr.bf16.mxu0 0
      %1242 = vmatpush1.bf16.msra.mxu0 0
      %1243 = vmatprep.subr.bf16.mxu0 0
      %1244 = vmatpush1.bf16.msra.mxu0 0
      %1245 = vmatprep.subr.bf16.mxu0 0
      %1246 = vmatpush1.bf16.msra.mxu0 0
      %1247 = vmatprep.subr.bf16.mxu0 0
      %1248 = vmatpush1.bf16.msra.mxu0 0
      %1249 = vmatprep.subr.bf16.mxu0 0
      %1250 = vmatpush1.bf16.msra.mxu0 %v852
      %1251 = vmatprep.subr.bf16.mxu0 0
      %1252 = vmatpush2.bf16.msra.mxu0 0
      %1253 = vmatprep.subr.bf16.mxu0 0
      %1254 = vmatpush2.bf16.msra.mxu0 0
      %1255 = vmatprep.subr.bf16.mxu0 0
      %1256 = vmatpush2.bf16.msra.mxu0 0
      %1257 = vmatprep.subr.bf16.mxu0 0
      %1258 = vmatpush2.bf16.msra.mxu0 0
      %1259 = vmatprep.subr.bf16.mxu0 0
      %1260 = vmatpush2.bf16.msra.mxu0 0
      %1261 = vmatprep.subr.bf16.mxu0 0
      %1262 = vmatpush2.bf16.msra.mxu0 0
      %1263 = vmatprep.subr.bf16.mxu0 0
      %1264 = vmatpush2.bf16.msra.mxu0 0
      %1265 = vmatprep.subr.bf16.mxu0 0
      %1266 = vmatpush2.bf16.msra.mxu0 0
      %1267 = vmatprep.mubr.bf16.mxu0 0
      %1268 = vmatmul.mubr.bf16.gmra.mxu0 %v1233
      %v1269 = vpop.f32.mrf.mxu0
      %v1270 = vadd.f32 0.0, %v1269
      %v1271 = vpop.f32.mrf.mxu0
      %v1272 = vpop.f32.mrf.mxu0
      %v1273 = vadd.f32 0.0, %v1272
      %v1274 = vpop.f32.mrf.mxu0
      %1275 = vdwg.mxu0
      %v1277 = vsel %vm1051, %v1143, 0
      %1279 = vmatprep.subr.bf16.mxu0 0
      %1280 = vmatpush1.bf16.msra.mxu0 0
      %1281 = vmatprep.subr.bf16.mxu0 0
      %1282 = vmatpush1.bf16.msra.mxu0 0
      %1283 = vmatprep.subr.bf16.mxu0 0
      %1284 = vmatpush1.bf16.msra.mxu0 0
      %1285 = vmatprep.subr.bf16.mxu0 0
      %1286 = vmatpush1.bf16.msra.mxu0 0
      %1287 = vmatprep.subr.bf16.mxu0 0
      %1288 = vmatpush1.bf16.msra.mxu0 0
      %1289 = vmatprep.subr.bf16.mxu0 0
      %1290 = vmatpush1.bf16.msra.mxu0 0
      %1291 = vmatprep.subr.bf16.mxu0 0
      %1292 = vmatpush1.bf16.msra.mxu0 0
      %1293 = vmatprep.subr.bf16.mxu0 0
      %1294 = vmatpush1.bf16.msra.mxu0 %v853
      %1295 = vmatprep.subr.bf16.mxu0 0
      %1296 = vmatpush2.bf16.msra.mxu0 0
      %1297 = vmatprep.subr.bf16.mxu0 0
      %1298 = vmatpush2.bf16.msra.mxu0 0
      %1299 = vmatprep.subr.bf16.mxu0 0
      %1300 = vmatpush2.bf16.msra.mxu0 0
      %1301 = vmatprep.subr.bf16.mxu0 0
      %1302 = vmatpush2.bf16.msra.mxu0 0
      %1303 = vmatprep.subr.bf16.mxu0 0
      %1304 = vmatpush2.bf16.msra.mxu0 0
      %1305 = vmatprep.subr.bf16.mxu0 0
      %1306 = vmatpush2.bf16.msra.mxu0 0
      %1307 = vmatprep.subr.bf16.mxu0 0
      %1308 = vmatpush2.bf16.msra.mxu0 0
      %1309 = vmatprep.subr.bf16.mxu0 0
      %1310 = vmatpush2.bf16.msra.mxu0 0
      %1311 = vmatprep.mubr.bf16.mxu0 0
      %1312 = vmatmul.mubr.bf16.gmra.mxu0 %v1277
      %v1313 = vpop.f32.mrf.mxu0
      %v1314 = vadd.f32 0.0, %v1313
      %v1315 = vpop.f32.mrf.mxu0
      %v1316 = vpop.f32.mrf.mxu0
      %v1317 = vadd.f32 0.0, %v1316
      %v1318 = vpop.f32.mrf.mxu0
      %1319 = vdwg.mxu0
      %v1320 = vpack.c.bf16 %v1185, %v1182
      %v1321 = vpack.c.bf16 %v1229, %v1226
      %v1322 = vpack.c.bf16 %v1273, %v1270
      %v1323 = vpack.c.bf16 %v1317, %v1314
      %1325 = vrot.lane.b32.xlu0 %v666, 120
      %v1326 = vpop.permute.xlu0 %1325
      %1328 = vrot.lane.b32.xlu0 %v758, 120
      %v1329 = vpop.permute.xlu0 %1328
      %v1331 = vsel %vm862, %v1326, 0
      %v1334 = vsel %vm862, %v1329, 0
      %1336 = vmatprep.subr.bf16.mxu0 0
      %1337 = vmatpush1.bf16.xpose.msra.mxu0 0
      %1338 = vmatprep.subr.bf16.mxu0 0
      %1339 = vmatpush1.bf16.xpose.msra.mxu0 0
      %1340 = vmatprep.subr.bf16.mxu0 0
      %1341 = vmatpush1.bf16.xpose.msra.mxu0 0
      %1342 = vmatprep.subr.bf16.mxu0 0
      %1343 = vmatpush1.bf16.xpose.msra.mxu0 0
      %1344 = vmatprep.subr.bf16.mxu0 0
      %1345 = vmatpush1.bf16.xpose.msra.mxu0 0
      %1346 = vmatprep.subr.bf16.mxu0 0
      %1347 = vmatpush1.bf16.xpose.msra.mxu0 0
      %1348 = vmatprep.subr.bf16.mxu0 0
      %1349 = vmatpush1.bf16.xpose.msra.mxu0 0
      %1350 = vmatprep.subr.bf16.mxu0 0
      %1351 = vmatpush1.bf16.xpose.msra.mxu0 %v1334
      %1352 = vmatprep.subr.bf16.mxu0 0
      %1353 = vmatpush2.bf16.xpose.msra.mxu0 0
      %1354 = vmatprep.subr.bf16.mxu0 0
      %1355 = vmatpush2.bf16.xpose.msra.mxu0 0
      %1356 = vmatprep.subr.bf16.mxu0 0
      %1357 = vmatpush2.bf16.xpose.msra.mxu0 0
      %1358 = vmatprep.subr.bf16.mxu0 0
      %1359 = vmatpush2.bf16.xpose.msra.mxu0 0
      %1360 = vmatprep.subr.bf16.mxu0 0
      %1361 = vmatpush2.bf16.xpose.msra.mxu0 0
      %1362 = vmatprep.subr.bf16.mxu0 0
      %1363 = vmatpush2.bf16.xpose.msra.mxu0 0
      %1364 = vmatprep.subr.bf16.mxu0 0
      %1365 = vmatpush2.bf16.xpose.msra.mxu0 0
      %1366 = vmatprep.subr.bf16.mxu0 0
      %1367 = vmatpush2.bf16.xpose.msra.mxu0 0
      %1368 = vmatprep.mubr.bf16.mxu0 0
      %1369 = vmatmul.mubr.bf16.gmra.mxu0 %v1331
      %v1370 = vpop.f32.mrf.mxu0
      %v1371 = vadd.f32 %v856, %v1370
      %v1372 = vpop.f32.mrf.mxu0
      %v1373 = vpop.f32.mrf.mxu0
      %v1374 = vadd.f32 %v857, %v1373
      %v1375 = vpop.f32.mrf.mxu0
      %1376 = vdwg.mxu0
      %1378 = vrot.lane.b32.xlu0 %v667, 120
      %v1379 = vpop.permute.xlu0 %1378
      %1381 = vrot.lane.b32.xlu0 %v759, 120
      %v1382 = vpop.permute.xlu0 %1381
      %v1384 = vsel %vm862, %v1379, 0
      %v1387 = vsel %vm862, %v1382, 0
      %1389 = vmatprep.subr.bf16.mxu0 0
      %1390 = vmatpush1.bf16.xpose.msra.mxu0 0
      %1391 = vmatprep.subr.bf16.mxu0 0
      %1392 = vmatpush1.bf16.xpose.msra.mxu0 0
      %1393 = vmatprep.subr.bf16.mxu0 0
      %1394 = vmatpush1.bf16.xpose.msra.mxu0 0
      %1395 = vmatprep.subr.bf16.mxu0 0
      %1396 = vmatpush1.bf16.xpose.msra.mxu0 0
      %1397 = vmatprep.subr.bf16.mxu0 0
      %1398 = vmatpush1.bf16.xpose.msra.mxu0 0
      %1399 = vmatprep.subr.bf16.mxu0 0
      %1400 = vmatpush1.bf16.xpose.msra.mxu0 0
      %1401 = vmatprep.subr.bf16.mxu0 0
      %1402 = vmatpush1.bf16.xpose.msra.mxu0 0
      %1403 = vmatprep.subr.bf16.mxu0 0
      %1404 = vmatpush1.bf16.xpose.msra.mxu0 %v1387
      %1405 = vmatprep.subr.bf16.mxu0 0
      %1406 = vmatpush2.bf16.xpose.msra.mxu0 0
      %1407 = vmatprep.subr.bf16.mxu0 0
      %1408 = vmatpush2.bf16.xpose.msra.mxu0 0
      %1409 = vmatprep.subr.bf16.mxu0 0
      %1410 = vmatpush2.bf16.xpose.msra.mxu0 0
      %1411 = vmatprep.subr.bf16.mxu0 0
      %1412 = vmatpush2.bf16.xpose.msra.mxu0 0
      %1413 = vmatprep.subr.bf16.mxu0 0
      %1414 = vmatpush2.bf16.xpose.msra.mxu0 0
      %1415 = vmatprep.subr.bf16.mxu0 0
      %1416 = vmatpush2.bf16.xpose.msra.mxu0 0
      %1417 = vmatprep.subr.bf16.mxu0 0
      %1418 = vmatpush2.bf16.xpose.msra.mxu0 0
      %1419 = vmatprep.subr.bf16.mxu0 0
      %1420 = vmatpush2.bf16.xpose.msra.mxu0 0
      %1421 = vmatprep.mubr.bf16.mxu0 0
      %1422 = vmatmul.mubr.bf16.gmra.mxu0 %v1384
      %v1423 = vpop.f32.mrf.mxu0
      %v1424 = vadd.f32 %v856, %v1423
      %v1425 = vpop.f32.mrf.mxu0
      %v1426 = vpop.f32.mrf.mxu0
      %v1427 = vadd.f32 %v857, %v1426
      %v1428 = vpop.f32.mrf.mxu0
      %1429 = vdwg.mxu0
      %1431 = vrot.lane.b32.xlu0 %v668, 120
      %v1432 = vpop.permute.xlu0 %1431
      %1434 = vrot.lane.b32.xlu0 %v760, 120
      %v1435 = vpop.permute.xlu0 %1434
      %v1437 = vsel %vm862, %v1432, 0
      %v1440 = vsel %vm862, %v1435, 0
      %1442 = vmatprep.subr.bf16.mxu0 0
      %1443 = vmatpush1.bf16.xpose.msra.mxu0 0
      %1444 = vmatprep.subr.bf16.mxu0 0
      %1445 = vmatpush1.bf16.xpose.msra.mxu0 0
      %1446 = vmatprep.subr.bf16.mxu0 0
      %1447 = vmatpush1.bf16.xpose.msra.mxu0 0
      %1448 = vmatprep.subr.bf16.mxu0 0
      %1449 = vmatpush1.bf16.xpose.msra.mxu0 0
      %1450 = vmatprep.subr.bf16.mxu0 0
      %1451 = vmatpush1.bf16.xpose.msra.mxu0 0
      %1452 = vmatprep.subr.bf16.mxu0 0
      %1453 = vmatpush1.bf16.xpose.msra.mxu0 0
      %1454 = vmatprep.subr.bf16.mxu0 0
      %1455 = vmatpush1.bf16.xpose.msra.mxu0 0
      %1456 = vmatprep.subr.bf16.mxu0 0
      %1457 = vmatpush1.bf16.xpose.msra.mxu0 %v1440
      %1458 = vmatprep.subr.bf16.mxu0 0
      %1459 = vmatpush2.bf16.xpose.msra.mxu0 0
      %1460 = vmatprep.subr.bf16.mxu0 0
      %1461 = vmatpush2.bf16.xpose.msra.mxu0 0
      %1462 = vmatprep.subr.bf16.mxu0 0
      %1463 = vmatpush2.bf16.xpose.msra.mxu0 0
      %1464 = vmatprep.subr.bf16.mxu0 0
      %1465 = vmatpush2.bf16.xpose.msra.mxu0 0
      %1466 = vmatprep.subr.bf16.mxu0 0
      %1467 = vmatpush2.bf16.xpose.msra.mxu0 0
      %1468 = vmatprep.subr.bf16.mxu0 0
      %1469 = vmatpush2.bf16.xpose.msra.mxu0 0
      %1470 = vmatprep.subr.bf16.mxu0 0
      %1471 = vmatpush2.bf16.xpose.msra.mxu0 0
      %1472 = vmatprep.subr.bf16.mxu0 0
      %1473 = vmatpush2.bf16.xpose.msra.mxu0 0
      %1474 = vmatprep.mubr.bf16.mxu0 0
      %1475 = vmatmul.mubr.bf16.gmra.mxu0 %v1437
      %v1476 = vpop.f32.mrf.mxu0
      %v1477 = vadd.f32 %v856, %v1476
      %v1478 = vpop.f32.mrf.mxu0
      %v1479 = vpop.f32.mrf.mxu0
      %v1480 = vadd.f32 %v857, %v1479
      %v1481 = vpop.f32.mrf.mxu0
      %1482 = vdwg.mxu0
      %1484 = vrot.lane.b32.xlu0 %v669, 120
      %v1485 = vpop.permute.xlu0 %1484
      %1487 = vrot.lane.b32.xlu0 %v761, 120
      %v1488 = vpop.permute.xlu0 %1487
      %v1490 = vsel %vm862, %v1485, 0
      %v1493 = vsel %vm862, %v1488, 0
      %1495 = vmatprep.subr.bf16.mxu0 0
      %1496 = vmatpush1.bf16.xpose.msra.mxu0 0
      %1497 = vmatprep.subr.bf16.mxu0 0
      %1498 = vmatpush1.bf16.xpose.msra.mxu0 0
      %1499 = vmatprep.subr.bf16.mxu0 0
      %1500 = vmatpush1.bf16.xpose.msra.mxu0 0
      %1501 = vmatprep.subr.bf16.mxu0 0
      %1502 = vmatpush1.bf16.xpose.msra.mxu0 0
      %1503 = vmatprep.subr.bf16.mxu0 0
      %1504 = vmatpush1.bf16.xpose.msra.mxu0 0
      %1505 = vmatprep.subr.bf16.mxu0 0
      %1506 = vmatpush1.bf16.xpose.msra.mxu0 0
      %1507 = vmatprep.subr.bf16.mxu0 0
      %1508 = vmatpush1.bf16.xpose.msra.mxu0 0
      %1509 = vmatprep.subr.bf16.mxu0 0
      %1510 = vmatpush1.bf16.xpose.msra.mxu0 %v1493
      %1511 = vmatprep.subr.bf16.mxu0 0
      %1512 = vmatpush2.bf16.xpose.msra.mxu0 0
      %1513 = vmatprep.subr.bf16.mxu0 0
      %1514 = vmatpush2.bf16.xpose.msra.mxu0 0
      %1515 = vmatprep.subr.bf16.mxu0 0
      %1516 = vmatpush2.bf16.xpose.msra.mxu0 0
      %1517 = vmatprep.subr.bf16.mxu0 0
      %1518 = vmatpush2.bf16.xpose.msra.mxu0 0
      %1519 = vmatprep.subr.bf16.mxu0 0
      %1520 = vmatpush2.bf16.xpose.msra.mxu0 0
      %1521 = vmatprep.subr.bf16.mxu0 0
      %1522 = vmatpush2.bf16.xpose.msra.mxu0 0
      %1523 = vmatprep.subr.bf16.mxu0 0
      %1524 = vmatpush2.bf16.xpose.msra.mxu0 0
      %1525 = vmatprep.subr.bf16.mxu0 0
      %1526 = vmatpush2.bf16.xpose.msra.mxu0 0
      %1527 = vmatprep.mubr.bf16.mxu0 0
      %1528 = vmatmul.mubr.bf16.gmra.mxu0 %v1490
      %v1529 = vpop.f32.mrf.mxu0
      %v1530 = vadd.f32 %v856, %v1529
      %v1531 = vpop.f32.mrf.mxu0
      %v1532 = vpop.f32.mrf.mxu0
      %v1533 = vadd.f32 %v857, %v1532
      %v1534 = vpop.f32.mrf.mxu0
      %1535 = vdwg.mxu0
      %v1536 = vsel %vm1051, %v1371, -inf
      %1537 = vmax.xlane.f32.xlu0 %v1536
      %v1538 = vpop.xlane.xlu0 %1537
      %v1539 = vsel %vm1051, %v1374, -inf
      %1540 = vmax.xlane.f32.xlu0 %v1539
      %v1541 = vpop.xlane.xlu0 %1540
      %v1542 = vsel %vm1051, %v1424, -inf
      %1543 = vmax.xlane.f32.xlu0 %v1542
      %v1544 = vpop.xlane.xlu0 %1543
      %v1545 = vsel %vm1051, %v1427, -inf
      %1546 = vmax.xlane.f32.xlu0 %v1545
      %v1547 = vpop.xlane.xlu0 %1546
      %v1548 = vsel %vm1051, %v1477, -inf
      %1549 = vmax.xlane.f32.xlu0 %v1548
      %v1550 = vpop.xlane.xlu0 %1549
      %v1551 = vsel %vm1051, %v1480, -inf
      %1552 = vmax.xlane.f32.xlu0 %v1551
      %v1553 = vpop.xlane.xlu0 %1552
      %v1554 = vsel %vm1051, %v1530, -inf
      %1555 = vmax.xlane.f32.xlu0 %v1554
      %v1556 = vpop.xlane.xlu0 %1555
      %v1557 = vsel %vm1051, %v1533, -inf
      %1558 = vmax.xlane.f32.xlu0 %v1557
      %v1559 = vpop.xlane.xlu0 %1558
      %v1560 = vsub.f32 %v1371, %v1538
      %v1561 = vsub.f32 %v1374, %v1541
      %v1562 = vsub.f32 %v1424, %v1544
      %v1563 = vsub.f32 %v1427, %v1547
      %v1564 = vsub.f32 %v1477, %v1550
      %v1565 = vsub.f32 %v1480, %v1553
      %v1566 = vsub.f32 %v1530, %v1556
      %v1567 = vsub.f32 %v1533, %v1559
      %v1568 = vmul.f32 %v1560, 1.442695
      %v1569 = vpow.pop %v1568
      %v1570 = vmul.f32 %v1561, 1.442695
      %v1571 = vpow.pop %v1570
      %v1572 = vmul.f32 %v1562, 1.442695
      %v1573 = vpow.pop %v1572
      %v1574 = vmul.f32 %v1563, 1.442695
      %v1575 = vpow.pop %v1574
      %v1576 = vmul.f32 %v1564, 1.442695
      %v1577 = vpow.pop %v1576
      %v1578 = vmul.f32 %v1565, 1.442695
      %v1579 = vpow.pop %v1578
      %v1580 = vmul.f32 %v1566, 1.442695
      %v1581 = vpow.pop %v1580
      %v1582 = vmul.f32 %v1567, 1.442695
      %v1583 = vpow.pop %v1582
      %v1584 = vsel %vm1051, %v1569, 0.0
      %1585 = vadd.xlane.f32.xlu0 %v1584
      %v1586 = vpop.xlane.xlu0 %1585
      %v1587 = vsel %vm1051, %v1571, 0.0
      %1588 = vadd.xlane.f32.xlu0 %v1587
      %v1589 = vpop.xlane.xlu0 %1588
      %v1590 = vsel %vm1051, %v1573, 0.0
      %1591 = vadd.xlane.f32.xlu0 %v1590
      %v1592 = vpop.xlane.xlu0 %1591
      %v1593 = vsel %vm1051, %v1575, 0.0
      %1594 = vadd.xlane.f32.xlu0 %v1593
      %v1595 = vpop.xlane.xlu0 %1594
      %v1596 = vsel %vm1051, %v1577, 0.0
      %1597 = vadd.xlane.f32.xlu0 %v1596
      %v1598 = vpop.xlane.xlu0 %1597
      %v1599 = vsel %vm1051, %v1579, 0.0
      %1600 = vadd.xlane.f32.xlu0 %v1599
      %v1601 = vpop.xlane.xlu0 %1600
      %v1602 = vsel %vm1051, %v1581, 0.0
      %1603 = vadd.xlane.f32.xlu0 %v1602
      %v1604 = vpop.xlane.xlu0 %1603
      %v1605 = vsel %vm1051, %v1583, 0.0
      %1606 = vadd.xlane.f32.xlu0 %v1605
      %v1607 = vpop.xlane.xlu0 %1606
      %v1608 = vrcp.pop %v1586
      %v1609 = vrcp.pop %v1589
      %v1610 = vrcp.pop %v1592
      %v1611 = vrcp.pop %v1595
      %v1612 = vrcp.pop %v1598
      %v1613 = vrcp.pop %v1601
      %v1614 = vrcp.pop %v1604
      %v1615 = vrcp.pop %v1607
      %v1616 = vmul.f32 %v1569, %v1608
      %v1617 = vmul.f32 %v1571, %v1609
      %v1618 = vmul.f32 %v1573, %v1610
      %v1619 = vmul.f32 %v1575, %v1611
      %v1620 = vmul.f32 %v1577, %v1612
      %v1621 = vmul.f32 %v1579, %v1613
      %v1622 = vmul.f32 %v1581, %v1614
      %v1623 = vmul.f32 %v1583, %v1615
      %v1624 = vpack.c.bf16 %v1617, %v1616
      %v1625 = vpack.c.bf16 %v1619, %v1618
      %v1626 = vpack.c.bf16 %v1621, %v1620
      %v1627 = vpack.c.bf16 %v1623, %v1622
      %1629 = vrot.lane.b32.xlu0 %v850, 120
      %v1630 = vpop.permute.xlu0 %1629
      %v1633 = vsel %vm1051, %v1624, 0
      %1635 = vmatprep.subr.bf16.mxu0 0
      %1636 = vmatpush1.bf16.msra.mxu0 0
      %1637 = vmatprep.subr.bf16.mxu0 0
      %1638 = vmatpush1.bf16.msra.mxu0 0
      %1639 = vmatprep.subr.bf16.mxu0 0
      %1640 = vmatpush1.bf16.msra.mxu0 0
      %1641 = vmatprep.subr.bf16.mxu0 0
      %1642 = vmatpush1.bf16.msra.mxu0 0
      %1643 = vmatprep.subr.bf16.mxu0 0
      %1644 = vmatpush1.bf16.msra.mxu0 0
      %1645 = vmatprep.subr.bf16.mxu0 0
      %1646 = vmatpush1.bf16.msra.mxu0 0
      %1647 = vmatprep.subr.bf16.mxu0 0
      %1648 = vmatpush1.bf16.msra.mxu0 0
      %1649 = vmatprep.subr.bf16.mxu0 0
      %1650 = vmatpush1.bf16.msra.mxu0 %v1630
      %1651 = vmatprep.subr.bf16.mxu0 0
      %1652 = vmatpush2.bf16.msra.mxu0 0
      %1653 = vmatprep.subr.bf16.mxu0 0
      %1654 = vmatpush2.bf16.msra.mxu0 0
      %1655 = vmatprep.subr.bf16.mxu0 0
      %1656 = vmatpush2.bf16.msra.mxu0 0
      %1657 = vmatprep.subr.bf16.mxu0 0
      %1658 = vmatpush2.bf16.msra.mxu0 0
      %1659 = vmatprep.subr.bf16.mxu0 0
      %1660 = vmatpush2.bf16.msra.mxu0 0
      %1661 = vmatprep.subr.bf16.mxu0 0
      %1662 = vmatpush2.bf16.msra.mxu0 0
      %1663 = vmatprep.subr.bf16.mxu0 0
      %1664 = vmatpush2.bf16.msra.mxu0 0
      %1665 = vmatprep.subr.bf16.mxu0 0
      %1666 = vmatpush2.bf16.msra.mxu0 0
      %1667 = vmatprep.mubr.bf16.mxu0 0
      %1668 = vmatmul.mubr.bf16.gmra.mxu0 %v1633
      %v1669 = vpop.f32.mrf.mxu0
      %v1670 = vadd.f32 0.0, %v1669
      %v1671 = vpop.f32.mrf.mxu0
      %v1672 = vpop.f32.mrf.mxu0
      %v1673 = vadd.f32 0.0, %v1672
      %v1674 = vpop.f32.mrf.mxu0
      %1675 = vdwg.mxu0
      %1677 = vrot.lane.b32.xlu0 %v851, 120
      %v1678 = vpop.permute.xlu0 %1677
      %v1681 = vsel %vm1051, %v1625, 0
      %1683 = vmatprep.subr.bf16.mxu0 0
      %1684 = vmatpush1.bf16.msra.mxu0 0
      %1685 = vmatprep.subr.bf16.mxu0 0
      %1686 = vmatpush1.bf16.msra.mxu0 0
      %1687 = vmatprep.subr.bf16.mxu0 0
      %1688 = vmatpush1.bf16.msra.mxu0 0
      %1689 = vmatprep.subr.bf16.mxu0 0
      %1690 = vmatpush1.bf16.msra.mxu0 0
      %1691 = vmatprep.subr.bf16.mxu0 0
      %1692 = vmatpush1.bf16.msra.mxu0 0
      %1693 = vmatprep.subr.bf16.mxu0 0
      %1694 = vmatpush1.bf16.msra.mxu0 0
      %1695 = vmatprep.subr.bf16.mxu0 0
      %1696 = vmatpush1.bf16.msra.mxu0 0
      %1697 = vmatprep.subr.bf16.mxu0 0
      %1698 = vmatpush1.bf16.msra.mxu0 %v1678
      %1699 = vmatprep.subr.bf16.mxu0 0
      %1700 = vmatpush2.bf16.msra.mxu0 0
      %1701 = vmatprep.subr.bf16.mxu0 0
      %1702 = vmatpush2.bf16.msra.mxu0 0
      %1703 = vmatprep.subr.bf16.mxu0 0
      %1704 = vmatpush2.bf16.msra.mxu0 0
      %1705 = vmatprep.subr.bf16.mxu0 0
      %1706 = vmatpush2.bf16.msra.mxu0 0
      %1707 = vmatprep.subr.bf16.mxu0 0
      %1708 = vmatpush2.bf16.msra.mxu0 0
      %1709 = vmatprep.subr.bf16.mxu0 0
      %1710 = vmatpush2.bf16.msra.mxu0 0
      %1711 = vmatprep.subr.bf16.mxu0 0
      %1712 = vmatpush2.bf16.msra.mxu0 0
      %1713 = vmatprep.subr.bf16.mxu0 0
      %1714 = vmatpush2.bf16.msra.mxu0 0
      %1715 = vmatprep.mubr.bf16.mxu0 0
      %1716 = vmatmul.mubr.bf16.gmra.mxu0 %v1681
      %v1717 = vpop.f32.mrf.mxu0
      %v1718 = vadd.f32 0.0, %v1717
      %v1719 = vpop.f32.mrf.mxu0
      %v1720 = vpop.f32.mrf.mxu0
      %v1721 = vadd.f32 0.0, %v1720
      %v1722 = vpop.f32.mrf.mxu0
      %1723 = vdwg.mxu0
      %1725 = vrot.lane.b32.xlu0 %v852, 120
      %v1726 = vpop.permute.xlu0 %1725
      %v1729 = vsel %vm1051, %v1626, 0
      %1731 = vmatprep.subr.bf16.mxu0 0
      %1732 = vmatpush1.bf16.msra.mxu0 0
      %1733 = vmatprep.subr.bf16.mxu0 0
      %1734 = vmatpush1.bf16.msra.mxu0 0
      %1735 = vmatprep.subr.bf16.mxu0 0
      %1736 = vmatpush1.bf16.msra.mxu0 0
      %1737 = vmatprep.subr.bf16.mxu0 0
      %1738 = vmatpush1.bf16.msra.mxu0 0
      %1739 = vmatprep.subr.bf16.mxu0 0
      %1740 = vmatpush1.bf16.msra.mxu0 0
      %1741 = vmatprep.subr.bf16.mxu0 0
      %1742 = vmatpush1.bf16.msra.mxu0 0
      %1743 = vmatprep.subr.bf16.mxu0 0
      %1744 = vmatpush1.bf16.msra.mxu0 0
      %1745 = vmatprep.subr.bf16.mxu0 0
      %1746 = vmatpush1.bf16.msra.mxu0 %v1726
      %1747 = vmatprep.subr.bf16.mxu0 0
      %1748 = vmatpush2.bf16.msra.mxu0 0
      %1749 = vmatprep.subr.bf16.mxu0 0
      %1750 = vmatpush2.bf16.msra.mxu0 0
      %1751 = vmatprep.subr.bf16.mxu0 0
      %1752 = vmatpush2.bf16.msra.mxu0 0
      %1753 = vmatprep.subr.bf16.mxu0 0
      %1754 = vmatpush2.bf16.msra.mxu0 0
      %1755 = vmatprep.subr.bf16.mxu0 0
      %1756 = vmatpush2.bf16.msra.mxu0 0
      %1757 = vmatprep.subr.bf16.mxu0 0
      %1758 = vmatpush2.bf16.msra.mxu0 0
      %1759 = vmatprep.subr.bf16.mxu0 0
      %1760 = vmatpush2.bf16.msra.mxu0 0
      %1761 = vmatprep.subr.bf16.mxu0 0
      %1762 = vmatpush2.bf16.msra.mxu0 0
      %1763 = vmatprep.mubr.bf16.mxu0 0
      %1764 = vmatmul.mubr.bf16.gmra.mxu0 %v1729
      %v1765 = vpop.f32.mrf.mxu0
      %v1766 = vadd.f32 0.0, %v1765
      %v1767 = vpop.f32.mrf.mxu0
      %v1768 = vpop.f32.mrf.mxu0
      %v1769 = vadd.f32 0.0, %v1768
      %v1770 = vpop.f32.mrf.mxu0
      %1771 = vdwg.mxu0
      %1773 = vrot.lane.b32.xlu0 %v853, 120
      %v1774 = vpop.permute.xlu0 %1773
      %v1777 = vsel %vm1051, %v1627, 0
      %1779 = vmatprep.subr.bf16.mxu0 0
      %1780 = vmatpush1.bf16.msra.mxu0 0
      %1781 = vmatprep.subr.bf16.mxu0 0
      %1782 = vmatpush1.bf16.msra.mxu0 0
      %1783 = vmatprep.subr.bf16.mxu0 0
      %1784 = vmatpush1.bf16.msra.mxu0 0
      %1785 = vmatprep.subr.bf16.mxu0 0
      %1786 = vmatpush1.bf16.msra.mxu0 0
      %1787 = vmatprep.subr.bf16.mxu0 0
      %1788 = vmatpush1.bf16.msra.mxu0 0
      %1789 = vmatprep.subr.bf16.mxu0 0
      %1790 = vmatpush1.bf16.msra.mxu0 0
      %1791 = vmatprep.subr.bf16.mxu0 0
      %1792 = vmatpush1.bf16.msra.mxu0 0
      %1793 = vmatprep.subr.bf16.mxu0 0
      %1794 = vmatpush1.bf16.msra.mxu0 %v1774
      %1795 = vmatprep.subr.bf16.mxu0 0
      %1796 = vmatpush2.bf16.msra.mxu0 0
      %1797 = vmatprep.subr.bf16.mxu0 0
      %1798 = vmatpush2.bf16.msra.mxu0 0
      %1799 = vmatprep.subr.bf16.mxu0 0
      %1800 = vmatpush2.bf16.msra.mxu0 0
      %1801 = vmatprep.subr.bf16.mxu0 0
      %1802 = vmatpush2.bf16.msra.mxu0 0
      %1803 = vmatprep.subr.bf16.mxu0 0
      %1804 = vmatpush2.bf16.msra.mxu0 0
      %1805 = vmatprep.subr.bf16.mxu0 0
      %1806 = vmatpush2.bf16.msra.mxu0 0
      %1807 = vmatprep.subr.bf16.mxu0 0
      %1808 = vmatpush2.bf16.msra.mxu0 0
      %1809 = vmatprep.subr.bf16.mxu0 0
      %1810 = vmatpush2.bf16.msra.mxu0 0
      %1811 = vmatprep.mubr.bf16.mxu0 0
      %1812 = vmatmul.mubr.bf16.gmra.mxu0 %v1777
      %v1813 = vpop.f32.mrf.mxu0
      %v1814 = vadd.f32 0.0, %v1813
      %v1815 = vpop.f32.mrf.mxu0
      %v1816 = vpop.f32.mrf.mxu0
      %v1817 = vadd.f32 0.0, %v1816
      %v1818 = vpop.f32.mrf.mxu0
      %1819 = vdwg.mxu0
      %v1820 = vpack.c.bf16 %v1673, %v1670
      %v1821 = vpack.c.bf16 %v1721, %v1718
      %v1822 = vpack.c.bf16 %v1769, %v1766
      %v1823 = vpack.c.bf16 %v1817, %v1814
      %1824 = vrot.lane.b32.xlu0 %v666, 112
      %v1825 = vpop.permute.xlu0 %1824
      %1826 = vrot.lane.b32.xlu0 %v758, 112
      %v1827 = vpop.permute.xlu0 %1826
      %v1829 = vsel %vm862, %v1825, 0
      %v1832 = vsel %vm862, %v1827, 0
      %1834 = vmatprep.subr.bf16.mxu0 0
      %1835 = vmatpush1.bf16.xpose.msra.mxu0 0
      %1836 = vmatprep.subr.bf16.mxu0 0
      %1837 = vmatpush1.bf16.xpose.msra.mxu0 0
      %1838 = vmatprep.subr.bf16.mxu0 0
      %1839 = vmatpush1.bf16.xpose.msra.mxu0 0
      %1840 = vmatprep.subr.bf16.mxu0 0
      %1841 = vmatpush1.bf16.xpose.msra.mxu0 0
      %1842 = vmatprep.subr.bf16.mxu0 0
      %1843 = vmatpush1.bf16.xpose.msra.mxu0 0
      %1844 = vmatprep.subr.bf16.mxu0 0
      %1845 = vmatpush1.bf16.xpose.msra.mxu0 0
      %1846 = vmatprep.subr.bf16.mxu0 0
      %1847 = vmatpush1.bf16.xpose.msra.mxu0 0
      %1848 = vmatprep.subr.bf16.mxu0 0
      %1849 = vmatpush1.bf16.xpose.msra.mxu0 %v1832
      %1850 = vmatprep.subr.bf16.mxu0 0
      %1851 = vmatpush2.bf16.xpose.msra.mxu0 0
      %1852 = vmatprep.subr.bf16.mxu0 0
      %1853 = vmatpush2.bf16.xpose.msra.mxu0 0
      %1854 = vmatprep.subr.bf16.mxu0 0
      %1855 = vmatpush2.bf16.xpose.msra.mxu0 0
      %1856 = vmatprep.subr.bf16.mxu0 0
      %1857 = vmatpush2.bf16.xpose.msra.mxu0 0
      %1858 = vmatprep.subr.bf16.mxu0 0
      %1859 = vmatpush2.bf16.xpose.msra.mxu0 0
      %1860 = vmatprep.subr.bf16.mxu0 0
      %1861 = vmatpush2.bf16.xpose.msra.mxu0 0
      %1862 = vmatprep.subr.bf16.mxu0 0
      %1863 = vmatpush2.bf16.xpose.msra.mxu0 0
      %1864 = vmatprep.subr.bf16.mxu0 0
      %1865 = vmatpush2.bf16.xpose.msra.mxu0 0
      %1866 = vmatprep.mubr.bf16.mxu0 0
      %1867 = vmatmul.mubr.bf16.gmra.mxu0 %v1829
      %v1868 = vpop.f32.mrf.mxu0
      %v1869 = vadd.f32 %v858, %v1868
      %v1870 = vpop.f32.mrf.mxu0
      %v1871 = vpop.f32.mrf.mxu0
      %v1872 = vadd.f32 %v859, %v1871
      %v1873 = vpop.f32.mrf.mxu0
      %1874 = vdwg.mxu0
      %1875 = vrot.lane.b32.xlu0 %v667, 112
      %v1876 = vpop.permute.xlu0 %1875
      %1877 = vrot.lane.b32.xlu0 %v759, 112
      %v1878 = vpop.permute.xlu0 %1877
      %v1880 = vsel %vm862, %v1876, 0
      %v1883 = vsel %vm862, %v1878, 0
      %1885 = vmatprep.subr.bf16.mxu0 0
      %1886 = vmatpush1.bf16.xpose.msra.mxu0 0
      %1887 = vmatprep.subr.bf16.mxu0 0
      %1888 = vmatpush1.bf16.xpose.msra.mxu0 0
      %1889 = vmatprep.subr.bf16.mxu0 0
      %1890 = vmatpush1.bf16.xpose.msra.mxu0 0
      %1891 = vmatprep.subr.bf16.mxu0 0
      %1892 = vmatpush1.bf16.xpose.msra.mxu0 0
      %1893 = vmatprep.subr.bf16.mxu0 0
      %1894 = vmatpush1.bf16.xpose.msra.mxu0 0
      %1895 = vmatprep.subr.bf16.mxu0 0
      %1896 = vmatpush1.bf16.xpose.msra.mxu0 0
      %1897 = vmatprep.subr.bf16.mxu0 0
      %1898 = vmatpush1.bf16.xpose.msra.mxu0 0
      %1899 = vmatprep.subr.bf16.mxu0 0
      %1900 = vmatpush1.bf16.xpose.msra.mxu0 %v1883
      %1901 = vmatprep.subr.bf16.mxu0 0
      %1902 = vmatpush2.bf16.xpose.msra.mxu0 0
      %1903 = vmatprep.subr.bf16.mxu0 0
      %1904 = vmatpush2.bf16.xpose.msra.mxu0 0
      %1905 = vmatprep.subr.bf16.mxu0 0
      %1906 = vmatpush2.bf16.xpose.msra.mxu0 0
      %1907 = vmatprep.subr.bf16.mxu0 0
      %1908 = vmatpush2.bf16.xpose.msra.mxu0 0
      %1909 = vmatprep.subr.bf16.mxu0 0
      %1910 = vmatpush2.bf16.xpose.msra.mxu0 0
      %1911 = vmatprep.subr.bf16.mxu0 0
      %1912 = vmatpush2.bf16.xpose.msra.mxu0 0
      %1913 = vmatprep.subr.bf16.mxu0 0
      %1914 = vmatpush2.bf16.xpose.msra.mxu0 0
      %1915 = vmatprep.subr.bf16.mxu0 0
      %1916 = vmatpush2.bf16.xpose.msra.mxu0 0
      %1917 = vmatprep.mubr.bf16.mxu0 0
      %1918 = vmatmul.mubr.bf16.gmra.mxu0 %v1880
      %v1919 = vpop.f32.mrf.mxu0
      %v1920 = vadd.f32 %v858, %v1919
      %v1921 = vpop.f32.mrf.mxu0
      %v1922 = vpop.f32.mrf.mxu0
      %v1923 = vadd.f32 %v859, %v1922
      %v1924 = vpop.f32.mrf.mxu0
      %1925 = vdwg.mxu0
      %1926 = vrot.lane.b32.xlu0 %v668, 112
      %v1927 = vpop.permute.xlu0 %1926
      %1928 = vrot.lane.b32.xlu0 %v760, 112
      %v1929 = vpop.permute.xlu0 %1928
      %v1931 = vsel %vm862, %v1927, 0
      %v1934 = vsel %vm862, %v1929, 0
      %1936 = vmatprep.subr.bf16.mxu0 0
      %1937 = vmatpush1.bf16.xpose.msra.mxu0 0
      %1938 = vmatprep.subr.bf16.mxu0 0
      %1939 = vmatpush1.bf16.xpose.msra.mxu0 0
      %1940 = vmatprep.subr.bf16.mxu0 0
      %1941 = vmatpush1.bf16.xpose.msra.mxu0 0
      %1942 = vmatprep.subr.bf16.mxu0 0
      %1943 = vmatpush1.bf16.xpose.msra.mxu0 0
      %1944 = vmatprep.subr.bf16.mxu0 0
      %1945 = vmatpush1.bf16.xpose.msra.mxu0 0
      %1946 = vmatprep.subr.bf16.mxu0 0
      %1947 = vmatpush1.bf16.xpose.msra.mxu0 0
      %1948 = vmatprep.subr.bf16.mxu0 0
      %1949 = vmatpush1.bf16.xpose.msra.mxu0 0
      %1950 = vmatprep.subr.bf16.mxu0 0
      %1951 = vmatpush1.bf16.xpose.msra.mxu0 %v1934
      %1952 = vmatprep.subr.bf16.mxu0 0
      %1953 = vmatpush2.bf16.xpose.msra.mxu0 0
      %1954 = vmatprep.subr.bf16.mxu0 0
      %1955 = vmatpush2.bf16.xpose.msra.mxu0 0
      %1956 = vmatprep.subr.bf16.mxu0 0
      %1957 = vmatpush2.bf16.xpose.msra.mxu0 0
      %1958 = vmatprep.subr.bf16.mxu0 0
      %1959 = vmatpush2.bf16.xpose.msra.mxu0 0
      %1960 = vmatprep.subr.bf16.mxu0 0
      %1961 = vmatpush2.bf16.xpose.msra.mxu0 0
      %1962 = vmatprep.subr.bf16.mxu0 0
      %1963 = vmatpush2.bf16.xpose.msra.mxu0 0
      %1964 = vmatprep.subr.bf16.mxu0 0
      %1965 = vmatpush2.bf16.xpose.msra.mxu0 0
      %1966 = vmatprep.subr.bf16.mxu0 0
      %1967 = vmatpush2.bf16.xpose.msra.mxu0 0
      %1968 = vmatprep.mubr.bf16.mxu0 0
      %1969 = vmatmul.mubr.bf16.gmra.mxu0 %v1931
      %v1970 = vpop.f32.mrf.mxu0
      %v1971 = vadd.f32 %v858, %v1970
      %v1972 = vpop.f32.mrf.mxu0
      %v1973 = vpop.f32.mrf.mxu0
      %v1974 = vadd.f32 %v859, %v1973
      %v1975 = vpop.f32.mrf.mxu0
      %1976 = vdwg.mxu0
      %1977 = vrot.lane.b32.xlu0 %v669, 112
      %v1978 = vpop.permute.xlu0 %1977
      %1979 = vrot.lane.b32.xlu0 %v761, 112
      %v1980 = vpop.permute.xlu0 %1979
      %v1982 = vsel %vm862, %v1978, 0
      %v1985 = vsel %vm862, %v1980, 0
      %1987 = vmatprep.subr.bf16.mxu0 0
      %1988 = vmatpush1.bf16.xpose.msra.mxu0 0
      %1989 = vmatprep.subr.bf16.mxu0 0
      %1990 = vmatpush1.bf16.xpose.msra.mxu0 0
      %1991 = vmatprep.subr.bf16.mxu0 0
      %1992 = vmatpush1.bf16.xpose.msra.mxu0 0
      %1993 = vmatprep.subr.bf16.mxu0 0
      %1994 = vmatpush1.bf16.xpose.msra.mxu0 0
      %1995 = vmatprep.subr.bf16.mxu0 0
      %1996 = vmatpush1.bf16.xpose.msra.mxu0 0
      %1997 = vmatprep.subr.bf16.mxu0 0
      %1998 = vmatpush1.bf16.xpose.msra.mxu0 0
      %1999 = vmatprep.subr.bf16.mxu0 0
      %2000 = vmatpush1.bf16.xpose.msra.mxu0 0
      %2001 = vmatprep.subr.bf16.mxu0 0
      %2002 = vmatpush1.bf16.xpose.msra.mxu0 %v1985
      %2003 = vmatprep.subr.bf16.mxu0 0
      %2004 = vmatpush2.bf16.xpose.msra.mxu0 0
      %2005 = vmatprep.subr.bf16.mxu0 0
      %2006 = vmatpush2.bf16.xpose.msra.mxu0 0
      %2007 = vmatprep.subr.bf16.mxu0 0
      %2008 = vmatpush2.bf16.xpose.msra.mxu0 0
      %2009 = vmatprep.subr.bf16.mxu0 0
      %2010 = vmatpush2.bf16.xpose.msra.mxu0 0
      %2011 = vmatprep.subr.bf16.mxu0 0
      %2012 = vmatpush2.bf16.xpose.msra.mxu0 0
      %2013 = vmatprep.subr.bf16.mxu0 0
      %2014 = vmatpush2.bf16.xpose.msra.mxu0 0
      %2015 = vmatprep.subr.bf16.mxu0 0
      %2016 = vmatpush2.bf16.xpose.msra.mxu0 0
      %2017 = vmatprep.subr.bf16.mxu0 0
      %2018 = vmatpush2.bf16.xpose.msra.mxu0 0
      %2019 = vmatprep.mubr.bf16.mxu0 0
      %2020 = vmatmul.mubr.bf16.gmra.mxu0 %v1982
      %v2021 = vpop.f32.mrf.mxu0
      %v2022 = vadd.f32 %v858, %v2021
      %v2023 = vpop.f32.mrf.mxu0
      %v2024 = vpop.f32.mrf.mxu0
      %v2025 = vadd.f32 %v859, %v2024
      %v2026 = vpop.f32.mrf.mxu0
      %2027 = vdwg.mxu0
      %v2028 = vsel %vm1051, %v1869, -inf
      %2029 = vmax.xlane.f32.xlu0 %v2028
      %v2030 = vpop.xlane.xlu0 %2029
      %v2031 = vsel %vm1051, %v1872, -inf
      %2032 = vmax.xlane.f32.xlu0 %v2031
      %v2033 = vpop.xlane.xlu0 %2032
      %v2034 = vsel %vm1051, %v1920, -inf
      %2035 = vmax.xlane.f32.xlu0 %v2034
      %v2036 = vpop.xlane.xlu0 %2035
      %v2037 = vsel %vm1051, %v1923, -inf
      %2038 = vmax.xlane.f32.xlu0 %v2037
      %v2039 = vpop.xlane.xlu0 %2038
      %v2040 = vsel %vm1051, %v1971, -inf
      %2041 = vmax.xlane.f32.xlu0 %v2040
      %v2042 = vpop.xlane.xlu0 %2041
      %v2043 = vsel %vm1051, %v1974, -inf
      %2044 = vmax.xlane.f32.xlu0 %v2043
      %v2045 = vpop.xlane.xlu0 %2044
      %v2046 = vsel %vm1051, %v2022, -inf
      %2047 = vmax.xlane.f32.xlu0 %v2046
      %v2048 = vpop.xlane.xlu0 %2047
      %v2049 = vsel %vm1051, %v2025, -inf
      %2050 = vmax.xlane.f32.xlu0 %v2049
      %v2051 = vpop.xlane.xlu0 %2050
      %v2052 = vsub.f32 %v1869, %v2030
      %v2053 = vsub.f32 %v1872, %v2033
      %v2054 = vsub.f32 %v1920, %v2036
      %v2055 = vsub.f32 %v1923, %v2039
      %v2056 = vsub.f32 %v1971, %v2042
      %v2057 = vsub.f32 %v1974, %v2045
      %v2058 = vsub.f32 %v2022, %v2048
      %v2059 = vsub.f32 %v2025, %v2051
      %v2060 = vmul.f32 %v2052, 1.442695
      %v2061 = vpow.pop %v2060
      %v2062 = vmul.f32 %v2053, 1.442695
      %v2063 = vpow.pop %v2062
      %v2064 = vmul.f32 %v2054, 1.442695
      %v2065 = vpow.pop %v2064
      %v2066 = vmul.f32 %v2055, 1.442695
      %v2067 = vpow.pop %v2066
      %v2068 = vmul.f32 %v2056, 1.442695
      %v2069 = vpow.pop %v2068
      %v2070 = vmul.f32 %v2057, 1.442695
      %v2071 = vpow.pop %v2070
      %v2072 = vmul.f32 %v2058, 1.442695
      %v2073 = vpow.pop %v2072
      %v2074 = vmul.f32 %v2059, 1.442695
      %v2075 = vpow.pop %v2074
      %v2076 = vsel %vm1051, %v2061, 0.0
      %2077 = vadd.xlane.f32.xlu0 %v2076
      %v2078 = vpop.xlane.xlu0 %2077
      %v2079 = vsel %vm1051, %v2063, 0.0
      %2080 = vadd.xlane.f32.xlu0 %v2079
      %v2081 = vpop.xlane.xlu0 %2080
      %v2082 = vsel %vm1051, %v2065, 0.0
      %2083 = vadd.xlane.f32.xlu0 %v2082
      %v2084 = vpop.xlane.xlu0 %2083
      %v2085 = vsel %vm1051, %v2067, 0.0
      %2086 = vadd.xlane.f32.xlu0 %v2085
      %v2087 = vpop.xlane.xlu0 %2086
      %v2088 = vsel %vm1051, %v2069, 0.0
      %2089 = vadd.xlane.f32.xlu0 %v2088
      %v2090 = vpop.xlane.xlu0 %2089
      %v2091 = vsel %vm1051, %v2071, 0.0
      %2092 = vadd.xlane.f32.xlu0 %v2091
      %v2093 = vpop.xlane.xlu0 %2092
      %v2094 = vsel %vm1051, %v2073, 0.0
      %2095 = vadd.xlane.f32.xlu0 %v2094
      %v2096 = vpop.xlane.xlu0 %2095
      %v2097 = vsel %vm1051, %v2075, 0.0
      %2098 = vadd.xlane.f32.xlu0 %v2097
      %v2099 = vpop.xlane.xlu0 %2098
      %v2100 = vrcp.pop %v2078
      %v2101 = vrcp.pop %v2081
      %v2102 = vrcp.pop %v2084
      %v2103 = vrcp.pop %v2087
      %v2104 = vrcp.pop %v2090
      %v2105 = vrcp.pop %v2093
      %v2106 = vrcp.pop %v2096
      %v2107 = vrcp.pop %v2099
      %v2108 = vmul.f32 %v2061, %v2100
      %v2109 = vmul.f32 %v2063, %v2101
      %v2110 = vmul.f32 %v2065, %v2102
      %v2111 = vmul.f32 %v2067, %v2103
      %v2112 = vmul.f32 %v2069, %v2104
      %v2113 = vmul.f32 %v2071, %v2105
      %v2114 = vmul.f32 %v2073, %v2106
      %v2115 = vmul.f32 %v2075, %v2107
      %v2116 = vpack.c.bf16 %v2109, %v2108
      %v2117 = vpack.c.bf16 %v2111, %v2110
      %v2118 = vpack.c.bf16 %v2113, %v2112
      %v2119 = vpack.c.bf16 %v2115, %v2114
      %2120 = vrot.lane.b32.xlu0 %v850, 112
      %v2121 = vpop.permute.xlu0 %2120
      %v2124 = vsel %vm1051, %v2116, 0
      %2126 = vmatprep.subr.bf16.mxu0 0
      %2127 = vmatpush1.bf16.msra.mxu0 0
      %2128 = vmatprep.subr.bf16.mxu0 0
      %2129 = vmatpush1.bf16.msra.mxu0 0
      %2130 = vmatprep.subr.bf16.mxu0 0
      %2131 = vmatpush1.bf16.msra.mxu0 0
      %2132 = vmatprep.subr.bf16.mxu0 0
      %2133 = vmatpush1.bf16.msra.mxu0 0
      %2134 = vmatprep.subr.bf16.mxu0 0
      %2135 = vmatpush1.bf16.msra.mxu0 0
      %2136 = vmatprep.subr.bf16.mxu0 0
      %2137 = vmatpush1.bf16.msra.mxu0 0
      %2138 = vmatprep.subr.bf16.mxu0 0
      %2139 = vmatpush1.bf16.msra.mxu0 0
      %2140 = vmatprep.subr.bf16.mxu0 0
      %2141 = vmatpush1.bf16.msra.mxu0 %v2121
      %2142 = vmatprep.subr.bf16.mxu0 0
      %2143 = vmatpush2.bf16.msra.mxu0 0
      %2144 = vmatprep.subr.bf16.mxu0 0
      %2145 = vmatpush2.bf16.msra.mxu0 0
      %2146 = vmatprep.subr.bf16.mxu0 0
      %2147 = vmatpush2.bf16.msra.mxu0 0
      %2148 = vmatprep.subr.bf16.mxu0 0
      %2149 = vmatpush2.bf16.msra.mxu0 0
      %2150 = vmatprep.subr.bf16.mxu0 0
      %2151 = vmatpush2.bf16.msra.mxu0 0
      %2152 = vmatprep.subr.bf16.mxu0 0
      %2153 = vmatpush2.bf16.msra.mxu0 0
      %2154 = vmatprep.subr.bf16.mxu0 0
      %2155 = vmatpush2.bf16.msra.mxu0 0
      %2156 = vmatprep.subr.bf16.mxu0 0
      %2157 = vmatpush2.bf16.msra.mxu0 0
      %2158 = vmatprep.mubr.bf16.mxu0 0
      %2159 = vmatmul.mubr.bf16.gmra.mxu0 %v2124
      %v2160 = vpop.f32.mrf.mxu0
      %v2161 = vadd.f32 0.0, %v2160
      %v2162 = vpop.f32.mrf.mxu0
      %v2163 = vpop.f32.mrf.mxu0
      %v2164 = vadd.f32 0.0, %v2163
      %v2165 = vpop.f32.mrf.mxu0
      %2166 = vdwg.mxu0
      %2167 = vrot.lane.b32.xlu0 %v851, 112
      %v2168 = vpop.permute.xlu0 %2167
      %v2171 = vsel %vm1051, %v2117, 0
      %2173 = vmatprep.subr.bf16.mxu0 0
      %2174 = vmatpush1.bf16.msra.mxu0 0
      %2175 = vmatprep.subr.bf16.mxu0 0
      %2176 = vmatpush1.bf16.msra.mxu0 0
      %2177 = vmatprep.subr.bf16.mxu0 0
      %2178 = vmatpush1.bf16.msra.mxu0 0
      %2179 = vmatprep.subr.bf16.mxu0 0
      %2180 = vmatpush1.bf16.msra.mxu0 0
      %2181 = vmatprep.subr.bf16.mxu0 0
      %2182 = vmatpush1.bf16.msra.mxu0 0
      %2183 = vmatprep.subr.bf16.mxu0 0
      %2184 = vmatpush1.bf16.msra.mxu0 0
      %2185 = vmatprep.subr.bf16.mxu0 0
      %2186 = vmatpush1.bf16.msra.mxu0 0
      %2187 = vmatprep.subr.bf16.mxu0 0
      %2188 = vmatpush1.bf16.msra.mxu0 %v2168
      %2189 = vmatprep.subr.bf16.mxu0 0
      %2190 = vmatpush2.bf16.msra.mxu0 0
      %2191 = vmatprep.subr.bf16.mxu0 0
      %2192 = vmatpush2.bf16.msra.mxu0 0
      %2193 = vmatprep.subr.bf16.mxu0 0
      %2194 = vmatpush2.bf16.msra.mxu0 0
      %2195 = vmatprep.subr.bf16.mxu0 0
      %2196 = vmatpush2.bf16.msra.mxu0 0
      %2197 = vmatprep.subr.bf16.mxu0 0
      %2198 = vmatpush2.bf16.msra.mxu0 0
      %2199 = vmatprep.subr.bf16.mxu0 0
      %2200 = vmatpush2.bf16.msra.mxu0 0
      %2201 = vmatprep.subr.bf16.mxu0 0
      %2202 = vmatpush2.bf16.msra.mxu0 0
      %2203 = vmatprep.subr.bf16.mxu0 0
      %2204 = vmatpush2.bf16.msra.mxu0 0
      %2205 = vmatprep.mubr.bf16.mxu0 0
      %2206 = vmatmul.mubr.bf16.gmra.mxu0 %v2171
      %v2207 = vpop.f32.mrf.mxu0
      %v2208 = vadd.f32 0.0, %v2207
      %v2209 = vpop.f32.mrf.mxu0
      %v2210 = vpop.f32.mrf.mxu0
      %v2211 = vadd.f32 0.0, %v2210
      %v2212 = vpop.f32.mrf.mxu0
      %2213 = vdwg.mxu0
      %2214 = vrot.lane.b32.xlu0 %v852, 112
      %v2215 = vpop.permute.xlu0 %2214
      %v2218 = vsel %vm1051, %v2118, 0
      %2220 = vmatprep.subr.bf16.mxu0 0
      %2221 = vmatpush1.bf16.msra.mxu0 0
      %2222 = vmatprep.subr.bf16.mxu0 0
      %2223 = vmatpush1.bf16.msra.mxu0 0
      %2224 = vmatprep.subr.bf16.mxu0 0
      %2225 = vmatpush1.bf16.msra.mxu0 0
      %2226 = vmatprep.subr.bf16.mxu0 0
      %2227 = vmatpush1.bf16.msra.mxu0 0
      %2228 = vmatprep.subr.bf16.mxu0 0
      %2229 = vmatpush1.bf16.msra.mxu0 0
      %2230 = vmatprep.subr.bf16.mxu0 0
      %2231 = vmatpush1.bf16.msra.mxu0 0
      %2232 = vmatprep.subr.bf16.mxu0 0
      %2233 = vmatpush1.bf16.msra.mxu0 0
      %2234 = vmatprep.subr.bf16.mxu0 0
      %2235 = vmatpush1.bf16.msra.mxu0 %v2215
      %2236 = vmatprep.subr.bf16.mxu0 0
      %2237 = vmatpush2.bf16.msra.mxu0 0
      %2238 = vmatprep.subr.bf16.mxu0 0
      %2239 = vmatpush2.bf16.msra.mxu0 0
      %2240 = vmatprep.subr.bf16.mxu0 0
      %2241 = vmatpush2.bf16.msra.mxu0 0
      %2242 = vmatprep.subr.bf16.mxu0 0
      %2243 = vmatpush2.bf16.msra.mxu0 0
      %2244 = vmatprep.subr.bf16.mxu0 0
      %2245 = vmatpush2.bf16.msra.mxu0 0
      %2246 = vmatprep.subr.bf16.mxu0 0
      %2247 = vmatpush2.bf16.msra.mxu0 0
      %2248 = vmatprep.subr.bf16.mxu0 0
      %2249 = vmatpush2.bf16.msra.mxu0 0
      %2250 = vmatprep.subr.bf16.mxu0 0
      %2251 = vmatpush2.bf16.msra.mxu0 0
      %2252 = vmatprep.mubr.bf16.mxu0 0
      %2253 = vmatmul.mubr.bf16.gmra.mxu0 %v2218
      %v2254 = vpop.f32.mrf.mxu0
      %v2255 = vadd.f32 0.0, %v2254
      %v2256 = vpop.f32.mrf.mxu0
      %v2257 = vpop.f32.mrf.mxu0
      %v2258 = vadd.f32 0.0, %v2257
      %v2259 = vpop.f32.mrf.mxu0
      %2260 = vdwg.mxu0
      %2261 = vrot.lane.b32.xlu0 %v853, 112
      %v2262 = vpop.permute.xlu0 %2261
      %v2265 = vsel %vm1051, %v2119, 0
      %2267 = vmatprep.subr.bf16.mxu0 0
      %2268 = vmatpush1.bf16.msra.mxu0 0
      %2269 = vmatprep.subr.bf16.mxu0 0
      %2270 = vmatpush1.bf16.msra.mxu0 0
      %2271 = vmatprep.subr.bf16.mxu0 0
      %2272 = vmatpush1.bf16.msra.mxu0 0
      %2273 = vmatprep.subr.bf16.mxu0 0
      %2274 = vmatpush1.bf16.msra.mxu0 0
      %2275 = vmatprep.subr.bf16.mxu0 0
      %2276 = vmatpush1.bf16.msra.mxu0 0
      %2277 = vmatprep.subr.bf16.mxu0 0
      %2278 = vmatpush1.bf16.msra.mxu0 0
      %2279 = vmatprep.subr.bf16.mxu0 0
      %2280 = vmatpush1.bf16.msra.mxu0 0
      %2281 = vmatprep.subr.bf16.mxu0 0
      %2282 = vmatpush1.bf16.msra.mxu0 %v2262
      %2283 = vmatprep.subr.bf16.mxu0 0
      %2284 = vmatpush2.bf16.msra.mxu0 0
      %2285 = vmatprep.subr.bf16.mxu0 0
      %2286 = vmatpush2.bf16.msra.mxu0 0
      %2287 = vmatprep.subr.bf16.mxu0 0
      %2288 = vmatpush2.bf16.msra.mxu0 0
      %2289 = vmatprep.subr.bf16.mxu0 0
      %2290 = vmatpush2.bf16.msra.mxu0 0
      %2291 = vmatprep.subr.bf16.mxu0 0
      %2292 = vmatpush2.bf16.msra.mxu0 0
      %2293 = vmatprep.subr.bf16.mxu0 0
      %2294 = vmatpush2.bf16.msra.mxu0 0
      %2295 = vmatprep.subr.bf16.mxu0 0
      %2296 = vmatpush2.bf16.msra.mxu0 0
      %2297 = vmatprep.subr.bf16.mxu0 0
      %2298 = vmatpush2.bf16.msra.mxu0 0
      %2299 = vmatprep.mubr.bf16.mxu0 0
      %2300 = vmatmul.mubr.bf16.gmra.mxu0 %v2265
      %v2301 = vpop.f32.mrf.mxu0
      %v2302 = vadd.f32 0.0, %v2301
      %v2303 = vpop.f32.mrf.mxu0
      %v2304 = vpop.f32.mrf.mxu0
      %v2305 = vadd.f32 0.0, %v2304
      %v2306 = vpop.f32.mrf.mxu0
      %2307 = vdwg.mxu0
      %v2308 = vpack.c.bf16 %v2164, %v2161
      %v2309 = vpack.c.bf16 %v2211, %v2208
      %v2310 = vpack.c.bf16 %v2258, %v2255
      %v2311 = vpack.c.bf16 %v2305, %v2302
      %2312 = vrot.lane.b32.xlu0 %v666, 104
      %v2313 = vpop.permute.xlu0 %2312
      %2314 = vrot.lane.b32.xlu0 %v758, 104
      %v2315 = vpop.permute.xlu0 %2314
      %v2317 = vsel %vm862, %v2313, 0
      %v2320 = vsel %vm862, %v2315, 0
      %2322 = vmatprep.subr.bf16.mxu0 0
      %2323 = vmatpush1.bf16.xpose.msra.mxu0 0
      %2324 = vmatprep.subr.bf16.mxu0 0
      %2325 = vmatpush1.bf16.xpose.msra.mxu0 0
      %2326 = vmatprep.subr.bf16.mxu0 0
      %2327 = vmatpush1.bf16.xpose.msra.mxu0 0
      %2328 = vmatprep.subr.bf16.mxu0 0
      %2329 = vmatpush1.bf16.xpose.msra.mxu0 0
      %2330 = vmatprep.subr.bf16.mxu0 0
      %2331 = vmatpush1.bf16.xpose.msra.mxu0 0
      %2332 = vmatprep.subr.bf16.mxu0 0
      %2333 = vmatpush1.bf16.xpose.msra.mxu0 0
      %2334 = vmatprep.subr.bf16.mxu0 0
      %2335 = vmatpush1.bf16.xpose.msra.mxu0 0
      %2336 = vmatprep.subr.bf16.mxu0 0
      %2337 = vmatpush1.bf16.xpose.msra.mxu0 %v2320
      %2338 = vmatprep.subr.bf16.mxu0 0
      %2339 = vmatpush2.bf16.xpose.msra.mxu0 0
      %2340 = vmatprep.subr.bf16.mxu0 0
      %2341 = vmatpush2.bf16.xpose.msra.mxu0 0
      %2342 = vmatprep.subr.bf16.mxu0 0
      %2343 = vmatpush2.bf16.xpose.msra.mxu0 0
      %2344 = vmatprep.subr.bf16.mxu0 0
      %2345 = vmatpush2.bf16.xpose.msra.mxu0 0
      %2346 = vmatprep.subr.bf16.mxu0 0
      %2347 = vmatpush2.bf16.xpose.msra.mxu0 0
      %2348 = vmatprep.subr.bf16.mxu0 0
      %2349 = vmatpush2.bf16.xpose.msra.mxu0 0
      %2350 = vmatprep.subr.bf16.mxu0 0
      %2351 = vmatpush2.bf16.xpose.msra.mxu0 0
      %2352 = vmatprep.subr.bf16.mxu0 0
      %2353 = vmatpush2.bf16.xpose.msra.mxu0 0
      %2354 = vmatprep.mubr.bf16.mxu0 0
      %2355 = vmatmul.mubr.bf16.gmra.mxu0 %v2317
      %v2356 = vpop.f32.mrf.mxu0
      %v2357 = vadd.f32 %v860, %v2356
      %v2358 = vpop.f32.mrf.mxu0
      %v2359 = vpop.f32.mrf.mxu0
      %v2360 = vadd.f32 %v861, %v2359
      %v2361 = vpop.f32.mrf.mxu0
      %2362 = vdwg.mxu0
      %2363 = vrot.lane.b32.xlu0 %v667, 104
      %v2364 = vpop.permute.xlu0 %2363
      %2365 = vrot.lane.b32.xlu0 %v759, 104
      %v2366 = vpop.permute.xlu0 %2365
      %v2368 = vsel %vm862, %v2364, 0
      %v2371 = vsel %vm862, %v2366, 0
      %2373 = vmatprep.subr.bf16.mxu0 0
      %2374 = vmatpush1.bf16.xpose.msra.mxu0 0
      %2375 = vmatprep.subr.bf16.mxu0 0
      %2376 = vmatpush1.bf16.xpose.msra.mxu0 0
      %2377 = vmatprep.subr.bf16.mxu0 0
      %2378 = vmatpush1.bf16.xpose.msra.mxu0 0
      %2379 = vmatprep.subr.bf16.mxu0 0
      %2380 = vmatpush1.bf16.xpose.msra.mxu0 0
      %2381 = vmatprep.subr.bf16.mxu0 0
      %2382 = vmatpush1.bf16.xpose.msra.mxu0 0
      %2383 = vmatprep.subr.bf16.mxu0 0
      %2384 = vmatpush1.bf16.xpose.msra.mxu0 0
      %2385 = vmatprep.subr.bf16.mxu0 0
      %2386 = vmatpush1.bf16.xpose.msra.mxu0 0
      %2387 = vmatprep.subr.bf16.mxu0 0
      %2388 = vmatpush1.bf16.xpose.msra.mxu0 %v2371
      %2389 = vmatprep.subr.bf16.mxu0 0
      %2390 = vmatpush2.bf16.xpose.msra.mxu0 0
      %2391 = vmatprep.subr.bf16.mxu0 0
      %2392 = vmatpush2.bf16.xpose.msra.mxu0 0
      %2393 = vmatprep.subr.bf16.mxu0 0
      %2394 = vmatpush2.bf16.xpose.msra.mxu0 0
      %2395 = vmatprep.subr.bf16.mxu0 0
      %2396 = vmatpush2.bf16.xpose.msra.mxu0 0
      %2397 = vmatprep.subr.bf16.mxu0 0
      %2398 = vmatpush2.bf16.xpose.msra.mxu0 0
      %2399 = vmatprep.subr.bf16.mxu0 0
      %2400 = vmatpush2.bf16.xpose.msra.mxu0 0
      %2401 = vmatprep.subr.bf16.mxu0 0
      %2402 = vmatpush2.bf16.xpose.msra.mxu0 0
      %2403 = vmatprep.subr.bf16.mxu0 0
      %2404 = vmatpush2.bf16.xpose.msra.mxu0 0
      %2405 = vmatprep.mubr.bf16.mxu0 0
      %2406 = vmatmul.mubr.bf16.gmra.mxu0 %v2368
      %v2407 = vpop.f32.mrf.mxu0
      %v2408 = vadd.f32 %v860, %v2407
      %v2409 = vpop.f32.mrf.mxu0
      %v2410 = vpop.f32.mrf.mxu0
      %v2411 = vadd.f32 %v861, %v2410
      %v2412 = vpop.f32.mrf.mxu0
      %2413 = vdwg.mxu0
      %2414 = vrot.lane.b32.xlu0 %v668, 104
      %v2415 = vpop.permute.xlu0 %2414
      %2416 = vrot.lane.b32.xlu0 %v760, 104
      %v2417 = vpop.permute.xlu0 %2416
      %v2419 = vsel %vm862, %v2415, 0
      %v2422 = vsel %vm862, %v2417, 0
      %2424 = vmatprep.subr.bf16.mxu0 0
      %2425 = vmatpush1.bf16.xpose.msra.mxu0 0
      %2426 = vmatprep.subr.bf16.mxu0 0
      %2427 = vmatpush1.bf16.xpose.msra.mxu0 0
      %2428 = vmatprep.subr.bf16.mxu0 0
      %2429 = vmatpush1.bf16.xpose.msra.mxu0 0
      %2430 = vmatprep.subr.bf16.mxu0 0
      %2431 = vmatpush1.bf16.xpose.msra.mxu0 0
      %2432 = vmatprep.subr.bf16.mxu0 0
      %2433 = vmatpush1.bf16.xpose.msra.mxu0 0
      %2434 = vmatprep.subr.bf16.mxu0 0
      %2435 = vmatpush1.bf16.xpose.msra.mxu0 0
      %2436 = vmatprep.subr.bf16.mxu0 0
      %2437 = vmatpush1.bf16.xpose.msra.mxu0 0
      %2438 = vmatprep.subr.bf16.mxu0 0
      %2439 = vmatpush1.bf16.xpose.msra.mxu0 %v2422
      %2440 = vmatprep.subr.bf16.mxu0 0
      %2441 = vmatpush2.bf16.xpose.msra.mxu0 0
      %2442 = vmatprep.subr.bf16.mxu0 0
      %2443 = vmatpush2.bf16.xpose.msra.mxu0 0
      %2444 = vmatprep.subr.bf16.mxu0 0
      %2445 = vmatpush2.bf16.xpose.msra.mxu0 0
      %2446 = vmatprep.subr.bf16.mxu0 0
      %2447 = vmatpush2.bf16.xpose.msra.mxu0 0
      %2448 = vmatprep.subr.bf16.mxu0 0
      %2449 = vmatpush2.bf16.xpose.msra.mxu0 0
      %2450 = vmatprep.subr.bf16.mxu0 0
      %2451 = vmatpush2.bf16.xpose.msra.mxu0 0
      %2452 = vmatprep.subr.bf16.mxu0 0
      %2453 = vmatpush2.bf16.xpose.msra.mxu0 0
      %2454 = vmatprep.subr.bf16.mxu0 0
      %2455 = vmatpush2.bf16.xpose.msra.mxu0 0
      %2456 = vmatprep.mubr.bf16.mxu0 0
      %2457 = vmatmul.mubr.bf16.gmra.mxu0 %v2419
      %v2458 = vpop.f32.mrf.mxu0
      %v2459 = vadd.f32 %v860, %v2458
      %v2460 = vpop.f32.mrf.mxu0
      %v2461 = vpop.f32.mrf.mxu0
      %v2462 = vadd.f32 %v861, %v2461
      %v2463 = vpop.f32.mrf.mxu0
      %2464 = vdwg.mxu0
      %2465 = vrot.lane.b32.xlu0 %v669, 104
      %v2466 = vpop.permute.xlu0 %2465
      %2467 = vrot.lane.b32.xlu0 %v761, 104
      %v2468 = vpop.permute.xlu0 %2467
      %v2470 = vsel %vm862, %v2466, 0
      %v2473 = vsel %vm862, %v2468, 0
      %2475 = vmatprep.subr.bf16.mxu0 0
      %2476 = vmatpush1.bf16.xpose.msra.mxu0 0
      %2477 = vmatprep.subr.bf16.mxu0 0
      %2478 = vmatpush1.bf16.xpose.msra.mxu0 0
      %2479 = vmatprep.subr.bf16.mxu0 0
      %2480 = vmatpush1.bf16.xpose.msra.mxu0 0
      %2481 = vmatprep.subr.bf16.mxu0 0
      %2482 = vmatpush1.bf16.xpose.msra.mxu0 0
      %2483 = vmatprep.subr.bf16.mxu0 0
      %2484 = vmatpush1.bf16.xpose.msra.mxu0 0
      %2485 = vmatprep.subr.bf16.mxu0 0
      %2486 = vmatpush1.bf16.xpose.msra.mxu0 0
      %2487 = vmatprep.subr.bf16.mxu0 0
      %2488 = vmatpush1.bf16.xpose.msra.mxu0 0
      %2489 = vmatprep.subr.bf16.mxu0 0
      %2490 = vmatpush1.bf16.xpose.msra.mxu0 %v2473
      %2491 = vmatprep.subr.bf16.mxu0 0
      %2492 = vmatpush2.bf16.xpose.msra.mxu0 0
      %2493 = vmatprep.subr.bf16.mxu0 0
      %2494 = vmatpush2.bf16.xpose.msra.mxu0 0
      %2495 = vmatprep.subr.bf16.mxu0 0
      %2496 = vmatpush2.bf16.xpose.msra.mxu0 0
      %2497 = vmatprep.subr.bf16.mxu0 0
      %2498 = vmatpush2.bf16.xpose.msra.mxu0 0
      %2499 = vmatprep.subr.bf16.mxu0 0
      %2500 = vmatpush2.bf16.xpose.msra.mxu0 0
      %2501 = vmatprep.subr.bf16.mxu0 0
      %2502 = vmatpush2.bf16.xpose.msra.mxu0 0
      %2503 = vmatprep.subr.bf16.mxu0 0
      %2504 = vmatpush2.bf16.xpose.msra.mxu0 0
      %2505 = vmatprep.subr.bf16.mxu0 0
      %2506 = vmatpush2.bf16.xpose.msra.mxu0 0
      %2507 = vmatprep.mubr.bf16.mxu0 0
      %2508 = vmatmul.mubr.bf16.gmra.mxu0 %v2470
      %v2509 = vpop.f32.mrf.mxu0
      %v2510 = vadd.f32 %v860, %v2509
      %v2511 = vpop.f32.mrf.mxu0
      %v2512 = vpop.f32.mrf.mxu0
      %v2513 = vadd.f32 %v861, %v2512
      %v2514 = vpop.f32.mrf.mxu0
      %2515 = vdwg.mxu0
      %v2516 = vsel %vm1051, %v2357, -inf
      %2517 = vmax.xlane.f32.xlu0 %v2516
      %v2518 = vpop.xlane.xlu0 %2517
      %v2519 = vsel %vm1051, %v2360, -inf
      %2520 = vmax.xlane.f32.xlu0 %v2519
      %v2521 = vpop.xlane.xlu0 %2520
      %v2522 = vsel %vm1051, %v2408, -inf
      %2523 = vmax.xlane.f32.xlu0 %v2522
      %v2524 = vpop.xlane.xlu0 %2523
      %v2525 = vsel %vm1051, %v2411, -inf
      %2526 = vmax.xlane.f32.xlu0 %v2525
      %v2527 = vpop.xlane.xlu0 %2526
      %v2528 = vsel %vm1051, %v2459, -inf
      %2529 = vmax.xlane.f32.xlu0 %v2528
      %v2530 = vpop.xlane.xlu0 %2529
      %v2531 = vsel %vm1051, %v2462, -inf
      %2532 = vmax.xlane.f32.xlu0 %v2531
      %v2533 = vpop.xlane.xlu0 %2532
      %v2534 = vsel %vm1051, %v2510, -inf
      %2535 = vmax.xlane.f32.xlu0 %v2534
      %v2536 = vpop.xlane.xlu0 %2535
      %v2537 = vsel %vm1051, %v2513, -inf
      %2538 = vmax.xlane.f32.xlu0 %v2537
      %v2539 = vpop.xlane.xlu0 %2538
      %v2540 = vsub.f32 %v2357, %v2518
      %v2541 = vsub.f32 %v2360, %v2521
      %v2542 = vsub.f32 %v2408, %v2524
      %v2543 = vsub.f32 %v2411, %v2527
      %v2544 = vsub.f32 %v2459, %v2530
      %v2545 = vsub.f32 %v2462, %v2533
      %v2546 = vsub.f32 %v2510, %v2536
      %v2547 = vsub.f32 %v2513, %v2539
      %v2548 = vmul.f32 %v2540, 1.442695
      %v2549 = vpow.pop %v2548
      %v2550 = vmul.f32 %v2541, 1.442695
      %v2551 = vpow.pop %v2550
      %v2552 = vmul.f32 %v2542, 1.442695
      %v2553 = vpow.pop %v2552
      %v2554 = vmul.f32 %v2543, 1.442695
      %v2555 = vpow.pop %v2554
      %v2556 = vmul.f32 %v2544, 1.442695
      %v2557 = vpow.pop %v2556
      %v2558 = vmul.f32 %v2545, 1.442695
      %v2559 = vpow.pop %v2558
      %v2560 = vmul.f32 %v2546, 1.442695
      %v2561 = vpow.pop %v2560
      %v2562 = vmul.f32 %v2547, 1.442695
      %v2563 = vpow.pop %v2562
      %v2564 = vsel %vm1051, %v2549, 0.0
      %2565 = vadd.xlane.f32.xlu0 %v2564
      %v2566 = vpop.xlane.xlu0 %2565
      %v2567 = vsel %vm1051, %v2551, 0.0
      %2568 = vadd.xlane.f32.xlu0 %v2567
      %v2569 = vpop.xlane.xlu0 %2568
      %v2570 = vsel %vm1051, %v2553, 0.0
      %2571 = vadd.xlane.f32.xlu0 %v2570
      %v2572 = vpop.xlane.xlu0 %2571
      %v2573 = vsel %vm1051, %v2555, 0.0
      %2574 = vadd.xlane.f32.xlu0 %v2573
      %v2575 = vpop.xlane.xlu0 %2574
      %v2576 = vsel %vm1051, %v2557, 0.0
      %2577 = vadd.xlane.f32.xlu0 %v2576
      %v2578 = vpop.xlane.xlu0 %2577
      %v2579 = vsel %vm1051, %v2559, 0.0
      %2580 = vadd.xlane.f32.xlu0 %v2579
      %v2581 = vpop.xlane.xlu0 %2580
      %v2582 = vsel %vm1051, %v2561, 0.0
      %2583 = vadd.xlane.f32.xlu0 %v2582
      %v2584 = vpop.xlane.xlu0 %2583
      %v2585 = vsel %vm1051, %v2563, 0.0
      %2586 = vadd.xlane.f32.xlu0 %v2585
      %v2587 = vpop.xlane.xlu0 %2586
      %v2588 = vrcp.pop %v2566
      %v2589 = vrcp.pop %v2569
      %v2590 = vrcp.pop %v2572
      %v2591 = vrcp.pop %v2575
      %v2592 = vrcp.pop %v2578
      %v2593 = vrcp.pop %v2581
      %v2594 = vrcp.pop %v2584
      %v2595 = vrcp.pop %v2587
      %v2596 = vmul.f32 %v2549, %v2588
      %v2597 = vmul.f32 %v2551, %v2589
      %v2598 = vmul.f32 %v2553, %v2590
      %v2599 = vmul.f32 %v2555, %v2591
      %v2600 = vmul.f32 %v2557, %v2592
      %v2601 = vmul.f32 %v2559, %v2593
      %v2602 = vmul.f32 %v2561, %v2594
      %v2603 = vmul.f32 %v2563, %v2595
      %v2604 = vpack.c.bf16 %v2597, %v2596
      %v2605 = vpack.c.bf16 %v2599, %v2598
      %v2606 = vpack.c.bf16 %v2601, %v2600
      %v2607 = vpack.c.bf16 %v2603, %v2602
      %2608 = vrot.lane.b32.xlu0 %v850, 104
      %v2609 = vpop.permute.xlu0 %2608
      %v2612 = vsel %vm1051, %v2604, 0
      %2614 = vmatprep.subr.bf16.mxu0 0
      %2615 = vmatpush1.bf16.msra.mxu0 0
      %2616 = vmatprep.subr.bf16.mxu0 0
      %2617 = vmatpush1.bf16.msra.mxu0 0
      %2618 = vmatprep.subr.bf16.mxu0 0
      %2619 = vmatpush1.bf16.msra.mxu0 0
      %2620 = vmatprep.subr.bf16.mxu0 0
      %2621 = vmatpush1.bf16.msra.mxu0 0
      %2622 = vmatprep.subr.bf16.mxu0 0
      %2623 = vmatpush1.bf16.msra.mxu0 0
      %2624 = vmatprep.subr.bf16.mxu0 0
      %2625 = vmatpush1.bf16.msra.mxu0 0
      %2626 = vmatprep.subr.bf16.mxu0 0
      %2627 = vmatpush1.bf16.msra.mxu0 0
      %2628 = vmatprep.subr.bf16.mxu0 0
      %2629 = vmatpush1.bf16.msra.mxu0 %v2609
      %2630 = vmatprep.subr.bf16.mxu0 0
      %2631 = vmatpush2.bf16.msra.mxu0 0
      %2632 = vmatprep.subr.bf16.mxu0 0
      %2633 = vmatpush2.bf16.msra.mxu0 0
      %2634 = vmatprep.subr.bf16.mxu0 0
      %2635 = vmatpush2.bf16.msra.mxu0 0
      %2636 = vmatprep.subr.bf16.mxu0 0
      %2637 = vmatpush2.bf16.msra.mxu0 0
      %2638 = vmatprep.subr.bf16.mxu0 0
      %2639 = vmatpush2.bf16.msra.mxu0 0
      %2640 = vmatprep.subr.bf16.mxu0 0
      %2641 = vmatpush2.bf16.msra.mxu0 0
      %2642 = vmatprep.subr.bf16.mxu0 0
      %2643 = vmatpush2.bf16.msra.mxu0 0
      %2644 = vmatprep.subr.bf16.mxu0 0
      %2645 = vmatpush2.bf16.msra.mxu0 0
      %2646 = vmatprep.mubr.bf16.mxu0 0
      %2647 = vmatmul.mubr.bf16.gmra.mxu0 %v2612
      %v2648 = vpop.f32.mrf.mxu0
      %v2649 = vadd.f32 0.0, %v2648
      %v2650 = vpop.f32.mrf.mxu0
      %v2651 = vpop.f32.mrf.mxu0
      %v2652 = vadd.f32 0.0, %v2651
      %v2653 = vpop.f32.mrf.mxu0
      %2654 = vdwg.mxu0
      %2655 = vrot.lane.b32.xlu0 %v851, 104
      %v2656 = vpop.permute.xlu0 %2655
      %v2659 = vsel %vm1051, %v2605, 0
      %2661 = vmatprep.subr.bf16.mxu0 0
      %2662 = vmatpush1.bf16.msra.mxu0 0
      %2663 = vmatprep.subr.bf16.mxu0 0
      %2664 = vmatpush1.bf16.msra.mxu0 0
      %2665 = vmatprep.subr.bf16.mxu0 0
      %2666 = vmatpush1.bf16.msra.mxu0 0
      %2667 = vmatprep.subr.bf16.mxu0 0
      %2668 = vmatpush1.bf16.msra.mxu0 0
      %2669 = vmatprep.subr.bf16.mxu0 0
      %2670 = vmatpush1.bf16.msra.mxu0 0
      %2671 = vmatprep.subr.bf16.mxu0 0
      %2672 = vmatpush1.bf16.msra.mxu0 0
      %2673 = vmatprep.subr.bf16.mxu0 0
      %2674 = vmatpush1.bf16.msra.mxu0 0
      %2675 = vmatprep.subr.bf16.mxu0 0
      %2676 = vmatpush1.bf16.msra.mxu0 %v2656
      %2677 = vmatprep.subr.bf16.mxu0 0
      %2678 = vmatpush2.bf16.msra.mxu0 0
      %2679 = vmatprep.subr.bf16.mxu0 0
      %2680 = vmatpush2.bf16.msra.mxu0 0
      %2681 = vmatprep.subr.bf16.mxu0 0
      %2682 = vmatpush2.bf16.msra.mxu0 0
      %2683 = vmatprep.subr.bf16.mxu0 0
      %2684 = vmatpush2.bf16.msra.mxu0 0
      %2685 = vmatprep.subr.bf16.mxu0 0
      %2686 = vmatpush2.bf16.msra.mxu0 0
      %2687 = vmatprep.subr.bf16.mxu0 0
      %2688 = vmatpush2.bf16.msra.mxu0 0
      %2689 = vmatprep.subr.bf16.mxu0 0
      %2690 = vmatpush2.bf16.msra.mxu0 0
      %2691 = vmatprep.subr.bf16.mxu0 0
      %2692 = vmatpush2.bf16.msra.mxu0 0
      %2693 = vmatprep.mubr.bf16.mxu0 0
      %2694 = vmatmul.mubr.bf16.gmra.mxu0 %v2659
      %v2695 = vpop.f32.mrf.mxu0
      %v2696 = vadd.f32 0.0, %v2695
      %v2697 = vpop.f32.mrf.mxu0
      %v2698 = vpop.f32.mrf.mxu0
      %v2699 = vadd.f32 0.0, %v2698
      %v2700 = vpop.f32.mrf.mxu0
      %2701 = vdwg.mxu0
      %2702 = vrot.lane.b32.xlu0 %v852, 104
      %v2703 = vpop.permute.xlu0 %2702
      %v2706 = vsel %vm1051, %v2606, 0
      %2708 = vmatprep.subr.bf16.mxu0 0
      %2709 = vmatpush1.bf16.msra.mxu0 0
      %2710 = vmatprep.subr.bf16.mxu0 0
      %2711 = vmatpush1.bf16.msra.mxu0 0
      %2712 = vmatprep.subr.bf16.mxu0 0
      %2713 = vmatpush1.bf16.msra.mxu0 0
      %2714 = vmatprep.subr.bf16.mxu0 0
      %2715 = vmatpush1.bf16.msra.mxu0 0
      %2716 = vmatprep.subr.bf16.mxu0 0
      %2717 = vmatpush1.bf16.msra.mxu0 0
      %2718 = vmatprep.subr.bf16.mxu0 0
      %2719 = vmatpush1.bf16.msra.mxu0 0
      %2720 = vmatprep.subr.bf16.mxu0 0
      %2721 = vmatpush1.bf16.msra.mxu0 0
      %2722 = vmatprep.subr.bf16.mxu0 0
      %2723 = vmatpush1.bf16.msra.mxu0 %v2703
      %2724 = vmatprep.subr.bf16.mxu0 0
      %2725 = vmatpush2.bf16.msra.mxu0 0
      %2726 = vmatprep.subr.bf16.mxu0 0
      %2727 = vmatpush2.bf16.msra.mxu0 0
      %2728 = vmatprep.subr.bf16.mxu0 0
      %2729 = vmatpush2.bf16.msra.mxu0 0
      %2730 = vmatprep.subr.bf16.mxu0 0
      %2731 = vmatpush2.bf16.msra.mxu0 0
      %2732 = vmatprep.subr.bf16.mxu0 0
      %2733 = vmatpush2.bf16.msra.mxu0 0
      %2734 = vmatprep.subr.bf16.mxu0 0
      %2735 = vmatpush2.bf16.msra.mxu0 0
      %2736 = vmatprep.subr.bf16.mxu0 0
      %2737 = vmatpush2.bf16.msra.mxu0 0
      %2738 = vmatprep.subr.bf16.mxu0 0
      %2739 = vmatpush2.bf16.msra.mxu0 0
      %2740 = vmatprep.mubr.bf16.mxu0 0
      %2741 = vmatmul.mubr.bf16.gmra.mxu0 %v2706
      %v2742 = vpop.f32.mrf.mxu0
      %v2743 = vadd.f32 0.0, %v2742
      %v2744 = vpop.f32.mrf.mxu0
      %v2745 = vpop.f32.mrf.mxu0
      %v2746 = vadd.f32 0.0, %v2745
      %v2747 = vpop.f32.mrf.mxu0
      %2748 = vdwg.mxu0
      %2749 = vrot.lane.b32.xlu0 %v853, 104
      %v2750 = vpop.permute.xlu0 %2749
      %v2753 = vsel %vm1051, %v2607, 0
      %2755 = vmatprep.subr.bf16.mxu0 0
      %2756 = vmatpush1.bf16.msra.mxu0 0
      %2757 = vmatprep.subr.bf16.mxu0 0
      %2758 = vmatpush1.bf16.msra.mxu0 0
      %2759 = vmatprep.subr.bf16.mxu0 0
      %2760 = vmatpush1.bf16.msra.mxu0 0
      %2761 = vmatprep.subr.bf16.mxu0 0
      %2762 = vmatpush1.bf16.msra.mxu0 0
      %2763 = vmatprep.subr.bf16.mxu0 0
      %2764 = vmatpush1.bf16.msra.mxu0 0
      %2765 = vmatprep.subr.bf16.mxu0 0
      %2766 = vmatpush1.bf16.msra.mxu0 0
      %2767 = vmatprep.subr.bf16.mxu0 0
      %2768 = vmatpush1.bf16.msra.mxu0 0
      %2769 = vmatprep.subr.bf16.mxu0 0
      %2770 = vmatpush1.bf16.msra.mxu0 %v2750
      %2771 = vmatprep.subr.bf16.mxu0 0
      %2772 = vmatpush2.bf16.msra.mxu0 0
      %2773 = vmatprep.subr.bf16.mxu0 0
      %2774 = vmatpush2.bf16.msra.mxu0 0
      %2775 = vmatprep.subr.bf16.mxu0 0
      %2776 = vmatpush2.bf16.msra.mxu0 0
      %2777 = vmatprep.subr.bf16.mxu0 0
      %2778 = vmatpush2.bf16.msra.mxu0 0
      %2779 = vmatprep.subr.bf16.mxu0 0
      %2780 = vmatpush2.bf16.msra.mxu0 0
      %2781 = vmatprep.subr.bf16.mxu0 0
      %2782 = vmatpush2.bf16.msra.mxu0 0
      %2783 = vmatprep.subr.bf16.mxu0 0
      %2784 = vmatpush2.bf16.msra.mxu0 0
      %2785 = vmatprep.subr.bf16.mxu0 0
      %2786 = vmatpush2.bf16.msra.mxu0 0
      %2787 = vmatprep.mubr.bf16.mxu0 0
      %2788 = vmatmul.mubr.bf16.gmra.mxu0 %v2753
      %v2789 = vpop.f32.mrf.mxu0
      %v2790 = vadd.f32 0.0, %v2789
      %v2791 = vpop.f32.mrf.mxu0
      %v2792 = vpop.f32.mrf.mxu0
      %v2793 = vadd.f32 0.0, %v2792
      %v2794 = vpop.f32.mrf.mxu0
      %2795 = vdwg.mxu0
      %v2796 = vpack.c.bf16 %v2652, %v2649
      %v2797 = vpack.c.bf16 %v2699, %v2696
      %v2798 = vpack.c.bf16 %v2746, %v2743
      %v2799 = vpack.c.bf16 %v2793, %v2790
      %2804 = vrot.lane.b32.xlu0 %v1820, 8
      %v2805 = vpop.permute.xlu0 %2804
      %2806 = vrot.lane.b32.xlu0 %v1821, 8
      %v2807 = vpop.permute.xlu0 %2806
      %2808 = vrot.lane.b32.xlu0 %v1822, 8
      %v2809 = vpop.permute.xlu0 %2808
      %2810 = vrot.lane.b32.xlu0 %v1823, 8
      %v2811 = vpop.permute.xlu0 %2810
      %2816 = vrot.lane.b32.xlu0 %v2308, 16
      %v2817 = vpop.permute.xlu0 %2816
      %2818 = vrot.lane.b32.xlu0 %v2309, 16
      %v2819 = vpop.permute.xlu0 %2818
      %2820 = vrot.lane.b32.xlu0 %v2310, 16
      %v2821 = vpop.permute.xlu0 %2820
      %2822 = vrot.lane.b32.xlu0 %v2311, 16
      %v2823 = vpop.permute.xlu0 %2822
      %2828 = vrot.lane.b32.xlu0 %v2796, 24
      %v2829 = vpop.permute.xlu0 %2828
      %2830 = vrot.lane.b32.xlu0 %v2797, 24
      %v2831 = vpop.permute.xlu0 %2830
      %2832 = vrot.lane.b32.xlu0 %v2798, 24
      %v2833 = vpop.permute.xlu0 %2832
      %2834 = vrot.lane.b32.xlu0 %v2799, 24
      %v2835 = vpop.permute.xlu0 %2834
      %v2838 = vsel %vm862, %v1320, %v2805
      %v2841 = vsel %vm862, %v1321, %v2807
      %v2844 = vsel %vm862, %v1322, %v2809
      %v2847 = vsel %vm862, %v1323, %v2811
      %v2849 = vsel %vm1051, %v2838, %v2817
      %v2851 = vsel %vm1051, %v2841, %v2819
      %v2853 = vsel %vm1051, %v2844, %v2821
      %v2855 = vsel %vm1051, %v2847, %v2823
      %vm2856 = vcmask 195584
      %v2858 = vsel %vm2856, %v2849, %v2829
      %v2860 = vsel %vm2856, %v2851, %v2831
      %v2862 = vsel %vm2856, %v2853, %v2833
      %v2864 = vsel %vm2856, %v2855, %v2835
      %v2865 = vld [vmem:[%s9] sm:$0xf]
      %v2866 = vld [vmem:[%s9 + $0x4] sm:$0xf]
      %v2867 = vld [vmem:[%s9 + $0x8] sm:$0xf]
      %v2868 = vld [vmem:[%s9 + $0xc] sm:$0xf]
      %v2869 = vld [vmem:[%s10] sm:$0x1]
      %v2871 = vlaneseq
      %v2872 = vshrl.u32 %v2871, 7
      %v2873 = vsub.s32 0, %v2872
      %v2874 = vrot.slane %v2869, %v2873
      %v2880 = vunpack.c.l.b16 %v2865
      %v2881 = vunpack.c.l.b16 %v2866
      %v2882 = vunpack.c.l.b16 %v2867
      %v2883 = vunpack.c.l.b16 %v2868
      %v2884 = vpack.c.b16 %v2881, %v2880
      %v2885 = vpack.c.b16 %v2883, %v2882
      %v2888 = vsel %vm426, %v2858, 0
      %v2890 = vsel %vm426, %v2860, 0
      %v2892 = vsel %vm426, %v2862, 0
      %v2894 = vsel %vm426, %v2864, 0
      %2896 = vmatprep.subr.bf16.mxu0 0
      %2897 = vmatpush1.bf16.msra.mxu0 0
      %2898 = vmatprep.subr.bf16.mxu0 0
      %2899 = vmatpush1.bf16.msra.mxu0 0
      %2900 = vmatprep.subr.bf16.mxu0 0
      %2901 = vmatpush1.bf16.msra.mxu0 0
      %2902 = vmatprep.subr.bf16.mxu0 0
      %2903 = vmatpush1.bf16.msra.mxu0 0
      %2904 = vmatprep.subr.bf16.mxu0 0
      %2905 = vmatpush1.bf16.msra.mxu0 0
      %2906 = vmatprep.subr.bf16.mxu0 0
      %2907 = vmatpush1.bf16.msra.mxu0 0
      %2908 = vmatprep.subr.bf16.mxu0 0
      %2909 = vmatpush1.bf16.msra.mxu0 %v2885
      %2910 = vmatprep.subr.bf16.mxu0 0
      %2911 = vmatpush1.bf16.msra.mxu0 %v2884
      %2912 = vmatprep.subr.bf16.mxu0 0
      %2913 = vmatpush2.bf16.msra.mxu0 0
      %2914 = vmatprep.subr.bf16.mxu0 0
      %2915 = vmatpush2.bf16.msra.mxu0 0
      %2916 = vmatprep.subr.bf16.mxu0 0
      %2917 = vmatpush2.bf16.msra.mxu0 0
      %2918 = vmatprep.subr.bf16.mxu0 0
      %2919 = vmatpush2.bf16.msra.mxu0 0
      %2920 = vmatprep.subr.bf16.mxu0 0
      %2921 = vmatpush2.bf16.msra.mxu0 0
      %2922 = vmatprep.subr.bf16.mxu0 0
      %2923 = vmatpush2.bf16.msra.mxu0 0
      %2924 = vmatprep.subr.bf16.mxu0 0
      %2925 = vmatpush2.bf16.msra.mxu0 0
      %2926 = vmatprep.subr.bf16.mxu0 0
      %2927 = vmatpush2.bf16.msra.mxu0 0
      %2928 = vmatprep.mubr.bf16.mxu0 0
      %2929 = vmatmul.mubr.bf16.gmra.mxu0 %v2888
      %v2930 = vpop.f32.mrf.mxu0
      %v2931 = vadd.f32 %v2874, %v2930
      %v2932 = vpop.f32.mrf.mxu0
      %v2933 = vpop.f32.mrf.mxu0
      %v2934 = vadd.f32 %v2874, %v2933
      %v2935 = vpop.f32.mrf.mxu0
      %2936 = vmatprep.mubr.bf16.mxu0 0
      %2937 = vmatmul.mubr.bf16.gmra.mxu0 %v2890
      %v2938 = vpop.f32.mrf.mxu0
      %v2939 = vadd.f32 %v2874, %v2938
      %v2940 = vpop.f32.mrf.mxu0
      %v2941 = vpop.f32.mrf.mxu0
      %v2942 = vadd.f32 %v2874, %v2941
      %v2943 = vpop.f32.mrf.mxu0
      %2944 = vmatprep.mubr.bf16.mxu0 0
      %2945 = vmatmul.mubr.bf16.gmra.mxu0 %v2892
      %v2946 = vpop.f32.mrf.mxu0
      %v2947 = vadd.f32 %v2874, %v2946
      %v2948 = vpop.f32.mrf.mxu0
      %v2949 = vpop.f32.mrf.mxu0
      %v2950 = vadd.f32 %v2874, %v2949
      %v2951 = vpop.f32.mrf.mxu0
      %2952 = vmatprep.mubr.bf16.mxu0 0
      %2953 = vmatmul.mubr.bf16.gmra.mxu0 %v2894
      %v2954 = vpop.f32.mrf.mxu0
      %v2955 = vadd.f32 %v2874, %v2954
      %v2956 = vpop.f32.mrf.mxu0
      %v2957 = vpop.f32.mrf.mxu0
      %v2958 = vadd.f32 %v2874, %v2957
      %v2959 = vpop.f32.mrf.mxu0
      %2960 = vdwg.mxu0
      %2961 = vst.msk [vmem:[%s415] sm:$0xff] %vm426, %v2931
      %2962 = vst.msk [vmem:[%s415 + $0x8] sm:$0xff] %vm426, %v2934
      %2963 = vst.msk [vmem:[%s415 + $0x10] sm:$0xff] %vm426, %v2939
      %2964 = vst.msk [vmem:[%s415 + $0x18] sm:$0xff] %vm426, %v2942
      %2965 = vst.msk [vmem:[%s415 + $0x20] sm:$0xff] %vm426, %v2947
      %2966 = vst.msk [vmem:[%s415 + $0x28] sm:$0xff] %vm426, %v2950
      %2967 = vst.msk [vmem:[%s415 + $0x30] sm:$0xff] %vm426, %v2955
      %2968 = vst.msk [vmem:[%s415 + $0x38] sm:$0xff] %vm426, %v2958
      %s2969 = smul.u32 8, %s23
      %p2970 = scmp.lt.s32.totalorder %s2969, 15
      %s2971 = scalar_select %p2970, %s2969, 15
      %s2972 = smul.addr %s2971, 8
      %s2973 = scalar_lea.vmem %s12, %s2972
      // Predicated region
      $region69: #{tpu_custom_call.1} parent=67 // pred_check
        %p2974 = pneg %p298
      $region70: #{tpu_custom_call.1} parent=67 // pred_check_branch
        %2976 = sbr.rel (%p2974) target = $region72
      $region71: #{tpu_custom_call.1} parent=67 // pred_region
        %s2977 = smul.u32 8, %s23
      $region72: #{tpu_custom_call.1} parent=67 // pred_fallthru
        _
    $region68: #{tpu_custom_call.1} parent=5 // pred_fallthru
      _
    %p2978 = scmp.le.s32.totalorder 2, %s18
    // Predicated region
    $region73: #{tpu_custom_call.1} parent=5 // pred_check
      %p2979 = pneg %p2978
    $region74: #{tpu_custom_call.1} parent=5 // pred_check_branch
      %2981 = sbr.rel (%p2979) target = $region76
    $region75: #{tpu_custom_call.1} parent=5 // pred_region
      %s2982 = ssub.s32 %s18, 2
      // Predicated region
      $region77: #{tpu_custom_call.1} parent=75 // pred_check
        %p2983 = pneg %p304
      $region78: #{tpu_custom_call.1} parent=75 // pred_check_branch
        %2985 = sbr.rel (%p2983) target = $region80
      $region79: #{tpu_custom_call.1} parent=75 // pred_region
        %s2986 = smul.u32 8, %s24
        %p2987 = scmp.lt.s32.totalorder %s2986, 15
        %s2988 = scalar_select %p2987, %s2986, 15
        %s2989 = smul.addr %s2988, 8
        %s2990 = scalar_lea.vmem %s12, %s2989
      $region80: #{tpu_custom_call.1} parent=75 // pred_fallthru
        _
    $region76: #{tpu_custom_call.1} parent=5 // pred_fallthru
      _
  $region6: #{tpu_custom_call.1} parent=0 // loop_footer
    %s22 = sadd.s32 1, %s18
  $region7: #{tpu_custom_call.1} parent=0 // loop_footer_branch
    %17 = sbr.rel target = $region3
  $region8: #{tpu_custom_call.1} parent=0 // loop_exit
    _

</llo_original>
